<compile_context>
chip_gen: v7x
topology: tpu7x:2x2x1
jax: 0.10.0
libtpu: 0.0.40
codegen_flags: <defaults>
</compile_context>

<pallas_src>
import functools

import jax
import jax.numpy as jnp
import numpy as np
from jax import lax
from jax.experimental import pallas as pl
from jax.experimental.pallas import tpu as pltpu


def _round_up(x, m):
    return (x + m - 1) // m * m


def _pick_block_rows(H, Wp, cin, cout, budget_bytes=6 << 20):
    """Largest divisor of H whose per-step working set stays under budget."""
    best = None
    for r in range(1, H + 1):
        if H % r:
            continue
        # padded input rows, f32 + bf16 im2col temps, f32 acc, output block.
        per_step = Wp * r * (4 * cin + 6 * 9 * cin + 6 * cout) + 4 * Wp * cin
        if best is None or per_step <= budget_bytes:
            best = r
    return best


# ---------------------------------------------------------------------------
# Pass 1 kernel: [optional folded-BN + ReLU of the input] -> 3x3 conv (bf16
# MXU, im2col with K = 9*Cin) -> raw conv output + per-block BN statistics.
# ---------------------------------------------------------------------------
def _conv_stats_kernel(xm_ref, xh1_ref, xh2_ref, w_ref, scale_ref, shift_ref,
                       raw_ref, stats_ref, *, rows, W, Wp, apply_input_norm):
    cin = xm_ref.shape[-1]
    cout = w_ref.shape[-1]

    xm = xm_ref[0]    # (rows, Wp, cin): padded rows [i*rows, i*rows + rows)
    xh1 = xh1_ref[0]  # (1,   Wp, cin): padded row   i*rows + rows
    xh2 = xh2_ref[0]  # (1,   Wp, cin): padded row   i*rows + rows + 1

    if apply_input_norm:
        # Input is the previous stage's *raw* conv output: apply the folded
        # BN (y*scale + shift) + ReLU here, then re-zero the halo border so it
        # acts as the zero padding of the normalized tensor.
        s = scale_ref[0]
        t = shift_ref[0]
        i = pl.program_id(1)
        n_blk = pl.num_programs(1)

        col = lax.broadcasted_iota(jnp.int32, (1, Wp, 1), 1)
        col_ok = jnp.logical_and(col >= 1, col <= W)

        def _norm(v):
            return jnp.maximum(v.astype(jnp.float32) * s + t, 0.0)

        row_m = lax.broadcasted_iota(jnp.int32, (rows, 1, 1), 0)
        keep_m = jnp.logical_and(col_ok, jnp.logical_or(i > 0, row_m > 0))
        xm = jnp.where(keep_m, _norm(xm), 0.0)
        xh1 = jnp.where(col_ok, _norm(xh1), 0.0)
        keep_h2 = jnp.logical_and(col_ok, i < n_blk - 1)
        xh2 = jnp.where(keep_h2, _norm(xh2), 0.0)

    xm = xm.astype(jnp.float32)
    xh1 = xh1.astype(jnp.float32)
    xh2 = xh2.astype(jnp.float32)

    # Flatten (row, col) into a single sublane-major axis (Wp % 8 == 0 keeps
    # the layout intact) and build the im2col patch once per block.
    M = rows * Wp
    zpad = jnp.zeros((8, cin), jnp.float32)
    xflat = jnp.concatenate(
        [zpad, xm.reshape(M, cin), xh1.reshape(Wp, cin),
         xh2.reshape(Wp, cin), zpad],
        axis=0)

    taps = []
    for ky in range(3):
        for kx in range(3):
            start = 8 + ky * Wp + (kx - 1)
            taps.append(xflat[start:start + M, :].astype(jnp.bfloat16))
    patch = jnp.concatenate(taps, axis=-1)                  # (M, 9*cin) bf16

    acc = jnp.dot(patch, w_ref[...],
                  preferred_element_type=jnp.float32)       # (M, cout) f32

    acc3 = acc.reshape(rows, Wp, cout)
    raw_ref[...] = acc3.astype(raw_ref.dtype)[None]

    # Per-block partial BN statistics over the valid output columns only.
    col = lax.broadcasted_iota(jnp.int32, (rows, Wp, 1), 1)
    valid = jnp.logical_and(col >= 1, col <= W)
    a = jnp.where(valid, acc3, 0.0)
    ssum = jnp.sum(a, axis=(0, 1), keepdims=True)           # (1, 1, cout)
    ssq = jnp.sum(a * a, axis=(0, 1), keepdims=True)
    stats_ref[...] = jnp.concatenate([ssum, ssq], axis=1)[None]


def _conv_stats_pass(xp, w_packed, scale_in, shift_in, *, W, rows,
                     apply_input_norm, out_dtype=jnp.bfloat16):
    N, Hp2, Wp, cin = xp.shape
    H = Hp2 - 2
    cout = w_packed.shape[-1]
    n_blk = H // rows

    kernel = functools.partial(_conv_stats_kernel, rows=rows, W=W, Wp=Wp,
                               apply_input_norm=apply_input_norm)
    raw, stats = pl.pallas_call(
        kernel,
        out_shape=(
            jax.ShapeDtypeStruct((N, H, Wp, cout), out_dtype),
            jax.ShapeDtypeStruct((N, n_blk, 2, cout), jnp.float32),
        ),
        grid=(N, n_blk),
        in_specs=[
            pl.BlockSpec((1, rows, Wp, cin), lambda n, i: (n, i, 0, 0)),
            pl.BlockSpec((1, 1, Wp, cin),
                         lambda n, i: (n, (i + 1) * rows, 0, 0)),
            pl.BlockSpec((1, 1, Wp, cin),
                         lambda n, i: (n, (i + 1) * rows + 1, 0, 0)),
            pl.BlockSpec((9 * cin, cout), lambda n, i: (0, 0)),
            pl.BlockSpec((1, cin), lambda n, i: (0, 0)),
            pl.BlockSpec((1, cin), lambda n, i: (0, 0)),
        ],
        out_specs=(
            pl.BlockSpec((1, rows, Wp, cout), lambda n, i: (n, i, 0, 0)),
            pl.BlockSpec((1, 1, 2, cout), lambda n, i: (n, i, 0, 0)),
        ),
        compiler_params=pltpu.CompilerParams(
            dimension_semantics=("parallel", "parallel"),
            vmem_limit_bytes=32 * 1024 * 1024,
        ),
    )(xp, xp, xp, w_packed, scale_in, shift_in)
    return raw, stats


def _fold_bn(stats, gamma, beta, count, eps):
    """Partial (sum, sumsq) -> per-channel folded scale/shift (BN batch stats)."""
    ssum = jnp.sum(stats[:, :, 0, :], axis=(0, 1))
    ssq = jnp.sum(stats[:, :, 1, :], axis=(0, 1))
    mu = ssum / count
    var = jnp.maximum(ssq / count - mu * mu, 0.0)
    scale = gamma * lax.rsqrt(var + eps)
    shift = beta - mu * scale
    return (scale.astype(jnp.float32).reshape(1, -1),
            shift.astype(jnp.float32).reshape(1, -1))


# ---------------------------------------------------------------------------
# Pass 2 kernel: folded BN (one multiply-add) + ReLU, drop the width padding.
# ---------------------------------------------------------------------------
def _bn_relu_kernel(raw_ref, scale_ref, shift_ref, out_ref, *, W):
    x = raw_ref[0].astype(jnp.float32)        # (rows, Wp, C)
    y = jnp.maximum(x * scale_ref[0] + shift_ref[0], 0.0)
    out_ref[...] = y[:, 1:W + 1, :][None]


def _bn_relu_pass(raw, scale, shift, *, W, rows):
    N, H, Wp, C = raw.shape
    n_blk = H // rows
    return pl.pallas_call(
        functools.partial(_bn_relu_kernel, W=W),
        out_shape=jax.ShapeDtypeStruct((N, H, W, C), jnp.float32),
        grid=(N, n_blk),
        in_specs=[
            pl.BlockSpec((1, rows, Wp, C), lambda n, i: (n, i, 0, 0)),
            pl.BlockSpec((1, C), lambda n, i: (0, 0)),
            pl.BlockSpec((1, C), lambda n, i: (0, 0)),
        ],
        out_specs=pl.BlockSpec((1, rows, W, C), lambda n, i: (n, i, 0, 0)),
        compiler_params=pltpu.CompilerParams(
            dimension_semantics=("parallel", "parallel"),
            vmem_limit_bytes=32 * 1024 * 1024,
        ),
    )(raw, scale, shift)


# ---------------------------------------------------------------------------
# VGGBlock forward: NCHW in -> NCHW out (training-mode BatchNorm).
# ---------------------------------------------------------------------------
def vgg_block_forward(x_nchw, params, *, block_rows=None, eps=1e-5):
    N, Cin, H, W = x_nchw.shape
    Cmid = params["w1"].shape[-1]
    Cout = params["w2"].shape[-1]
    Wp = _round_up(W + 2, 8)
    count = N * H * W

    if block_rows is not None:
        assert H % block_rows == 0, (H, block_rows)
    rows1 = block_rows or _pick_block_rows(H, Wp, Cin, Cmid)
    rows2 = block_rows or _pick_block_rows(H, Wp, Cmid, Cout)
    rows3 = block_rows or _pick_block_rows(H, Wp, Cout, Cout)

    # NCHW -> NHWC; zero pad 1px top/bottom/left, right padded up to Wp.
    x = jnp.transpose(x_nchw, (0, 2, 3, 1)).astype(jnp.float32)
    xp = jnp.pad(x, ((0, 0), (1, 1), (1, Wp - W - 1), (0, 0)))
    # TODO(synk): the jnp.pad's / transposes still cost one extra HBM pass
    # each; they could be folded into the kernels with clamped index_maps.

    # HWIO weights packed for the K = 9*Cin im2col matmul, bf16 for the MXU.
    w1p = params["w1"].reshape(9 * Cin, Cmid).astype(jnp.bfloat16)
    w2p = params["w2"].reshape(9 * Cmid, Cout).astype(jnp.bfloat16)
    # NOTE: conv biases are intentionally dropped -- they are exactly
    # cancelled by the training-mode BatchNorm mean subtraction.

    # Stage 1: conv1 + BN1 batch statistics.
    raw1, stats1 = _conv_stats_pass(
        xp, w1p,
        jnp.ones((1, Cin), jnp.float32), jnp.zeros((1, Cin), jnp.float32),
        W=W, rows=rows1, apply_input_norm=False)
    scale1, shift1 = _fold_bn(stats1, params["g1"], params["beta1"], count, eps)

    # Stage 2: BN1 + ReLU fused into conv2's input path, + BN2 statistics.
    raw1p = jnp.pad(raw1, ((0, 0), (1, 1), (0, 0), (0, 0)))   # H halo only
    raw2, stats2 = _conv_stats_pass(
        raw1p, w2p, scale1, shift1,
        W=W, rows=rows2, apply_input_norm=True)
    scale2, shift2 = _fold_bn(stats2, params["g2"], params["beta2"], count, eps)

    # Final BN2 + ReLU.
    out_nhwc = _bn_relu_pass(raw2, scale2, shift2, W=W, rows=rows3)
    return jnp.transpose(out_nhwc, (0, 3, 1, 2))


# ----------------------------- reference (pure JAX) ------------------------
def _ref_stage(x, w, b, g, beta, eps=1e-5):
    y = lax.conv_general_dilated(
        x, w, window_strides=(1, 1), padding="SAME",
        dimension_numbers=("NHWC", "HWIO", "NHWC"),
        precision=lax.Precision.HIGHEST)
    y = y + b.reshape(1, 1, 1, -1)
    mu = jnp.mean(y, axis=(0, 1, 2), keepdims=True)
    var = jnp.mean((y - mu) ** 2, axis=(0, 1, 2), keepdims=True)
    y = (y - mu) * lax.rsqrt(var + eps) * g.reshape(1, 1, 1, -1) \
        + beta.reshape(1, 1, 1, -1)
    return jnp.maximum(y, 0.0)


def vgg_block_reference(x_nchw, params):
    x = jnp.transpose(x_nchw, (0, 2, 3, 1))
    h = _ref_stage(x, params["w1"], params["b1"], params["g1"], params["beta1"])
    o = _ref_stage(h, params["w2"], params["b2"], params["g2"], params["beta2"])
    return jnp.transpose(o, (0, 3, 1, 2))


def init_params(key, in_channels, middle_channels, out_channels):
    k1, k2, k3, k4 = jax.random.split(key, 4)
    # Conv weights stored HWIO (3, 3, Cin, Cout); PyTorch BN defaults.
    return {
        "w1": 0.1 * jax.random.normal(k1, (3, 3, in_channels, middle_channels), jnp.float32),
        "b1": 0.1 * jax.random.normal(k2, (middle_channels,), jnp.float32),
        "g1": jnp.ones((middle_channels,), jnp.float32),
        "beta1": jnp.zeros((middle_channels,), jnp.float32),
        "w2": 0.1 * jax.random.normal(k3, (3, 3, middle_channels, out_channels), jnp.float32),
        "b2": 0.1 * jax.random.normal(k4, (out_channels,), jnp.float32),
        "g2": jnp.ones((out_channels,), jnp.float32),
        "beta2": jnp.zeros((out_channels,), jnp.float32),
    }


if __name__ == "__main__":
    key = jax.random.PRNGKey(0)
    k_x, k_p = jax.random.split(key)

    N, Cin, Cmid, Cout, H, W = 2, 4, 8, 4, 16, 16
    x = jax.random.normal(k_x, (N, Cin, H, W), jnp.float32)   # NCHW like PyTorch
    params = init_params(k_p, Cin, Cmid, Cout)

    # block_rows=4 forces a 4-block grid along H to exercise the halo logic.
    fwd = jax.jit(functools.partial(vgg_block_forward, block_rows=4))
    out = jax.block_until_ready(fwd(x, params))
    ref = jax.block_until_ready(vgg_block_reference(x, params))

    assert out.shape == (N, Cout, H, W), out.shape
    err = float(jnp.max(jnp.abs(out - ref)))
    if not np.allclose(np.asarray(out), np.asarray(ref), rtol=5e-2, atol=5e-2):
        raise AssertionError(f"Pallas output mismatch, max abs err = {err}")

    print("KERNEL_OK")
</pallas_src>

<mosaic_0001>
module attributes {stable_mosaic.version = 11 : i64} {
  func.func @_conv_stats_kernel(%arg0: i32, %arg1: i32, %arg2: memref<1x4x24x4xf32, #tpu.memory_space<vmem>>, %arg3: memref<1x1x24x4xf32, #tpu.memory_space<vmem>>, %arg4: memref<1x1x24x4xf32, #tpu.memory_space<vmem>>, %arg5: memref<36x8xbf16, #tpu.memory_space<vmem>>, %arg6: memref<1x4xf32, #tpu.memory_space<vmem>>, %arg7: memref<1x4xf32, #tpu.memory_space<vmem>>, %arg8: memref<1x4x24x8xbf16, #tpu.memory_space<vmem>>, %arg9: memref<1x1x2x8xf32, #tpu.memory_space<vmem>>) attributes {dimension_semantics = [#tpu.dimension_semantics<parallel>, #tpu.dimension_semantics<parallel>], iteration_bounds = array<i64: 2, 4>, scalar_prefetch = 0 : i64, scratch_operands = 0 : i64, tpu.core_type = #tpu.core_type<tc>, window_params = [{transform_indices = @transform_0, window_bounds = array<i64: 1, 4, 24, 4>}, {transform_indices = @transform_1, window_bounds = array<i64: 1, 1, 24, 4>}, {transform_indices = @transform_2, window_bounds = array<i64: 1, 1, 24, 4>}, {pipeline_mode = #tpu.pipeline_mode<synchronous>, transform_indices = @transform_3, window_bounds = array<i64: 36, 8>}, {pipeline_mode = #tpu.pipeline_mode<synchronous>, transform_indices = @transform_4, window_bounds = array<i64: 1, 4>}, {pipeline_mode = #tpu.pipeline_mode<synchronous>, transform_indices = @transform_5, window_bounds = array<i64: 1, 4>}, {transform_indices = @transform_6, window_bounds = array<i64: 1, 4, 24, 8>}, {transform_indices = @transform_7, window_bounds = array<i64: 1, 1, 2, 8>}]} {
    %c0 = arith.constant 0 : index
    %c0_0 = arith.constant 0 : index
    %c0_1 = arith.constant 0 : index
    %c0_2 = arith.constant 0 : index
    %0 = vector.load %arg2[%c0, %c0_0, %c0_1, %c0_2] : memref<1x4x24x4xf32, #tpu.memory_space<vmem>>, vector<1x4x24x4xf32>
    %1 = vector.shape_cast %0 : vector<1x4x24x4xf32> to vector<4x24x4xf32>
    %c0_3 = arith.constant 0 : index
    %c0_4 = arith.constant 0 : index
    %c0_5 = arith.constant 0 : index
    %c0_6 = arith.constant 0 : index
    %2 = vector.load %arg3[%c0_3, %c0_4, %c0_5, %c0_6] : memref<1x1x24x4xf32, #tpu.memory_space<vmem>>, vector<1x1x24x4xf32>
    %3 = vector.shape_cast %2 : vector<1x1x24x4xf32> to vector<1x24x4xf32>
    %c0_7 = arith.constant 0 : index
    %c0_8 = arith.constant 0 : index
    %c0_9 = arith.constant 0 : index
    %c0_10 = arith.constant 0 : index
    %4 = vector.load %arg4[%c0_7, %c0_8, %c0_9, %c0_10] : memref<1x1x24x4xf32, #tpu.memory_space<vmem>>, vector<1x1x24x4xf32>
    %5 = vector.shape_cast %4 : vector<1x1x24x4xf32> to vector<1x24x4xf32>
    %cst = arith.constant 0.000000e+00 : f32
    %6 = vector.broadcast %cst : f32 to vector<8x4xf32>
    %7 = vector.shape_cast %1 : vector<4x24x4xf32> to vector<96x4xf32>
    %8 = vector.shape_cast %3 : vector<1x24x4xf32> to vector<24x4xf32>
    %9 = vector.shape_cast %5 : vector<1x24x4xf32> to vector<24x4xf32>
    %10 = tpu.concatenate %6, %7, %8, %9, %6 in 0 : vector<8x4xf32>, vector<96x4xf32>, vector<24x4xf32>, vector<24x4xf32>, vector<8x4xf32> -> vector<160x4xf32>
    %11 = vector.extract_strided_slice %10 {offsets = [7, 0], sizes = [96, 4], strides = [1, 1]} : vector<160x4xf32> to vector<96x4xf32>
    %12 = arith.truncf %11 : vector<96x4xf32> to vector<96x4xbf16>
    %13 = vector.extract_strided_slice %10 {offsets = [8, 0], sizes = [96, 4], strides = [1, 1]} : vector<160x4xf32> to vector<96x4xf32>
    %14 = arith.truncf %13 : vector<96x4xf32> to vector<96x4xbf16>
    %15 = vector.extract_strided_slice %10 {offsets = [9, 0], sizes = [96, 4], strides = [1, 1]} : vector<160x4xf32> to vector<96x4xf32>
    %16 = arith.truncf %15 : vector<96x4xf32> to vector<96x4xbf16>
    %17 = vector.extract_strided_slice %10 {offsets = [31, 0], sizes = [96, 4], strides = [1, 1]} : vector<160x4xf32> to vector<96x4xf32>
    %18 = arith.truncf %17 : vector<96x4xf32> to vector<96x4xbf16>
    %19 = vector.extract_strided_slice %10 {offsets = [32, 0], sizes = [96, 4], strides = [1, 1]} : vector<160x4xf32> to vector<96x4xf32>
    %20 = arith.truncf %19 : vector<96x4xf32> to vector<96x4xbf16>
    %21 = vector.extract_strided_slice %10 {offsets = [33, 0], sizes = [96, 4], strides = [1, 1]} : vector<160x4xf32> to vector<96x4xf32>
    %22 = arith.truncf %21 : vector<96x4xf32> to vector<96x4xbf16>
    %23 = vector.extract_strided_slice %10 {offsets = [55, 0], sizes = [96, 4], strides = [1, 1]} : vector<160x4xf32> to vector<96x4xf32>
    %24 = arith.truncf %23 : vector<96x4xf32> to vector<96x4xbf16>
    %25 = vector.extract_strided_slice %10 {offsets = [56, 0], sizes = [96, 4], strides = [1, 1]} : vector<160x4xf32> to vector<96x4xf32>
    %26 = arith.truncf %25 : vector<96x4xf32> to vector<96x4xbf16>
    %27 = vector.extract_strided_slice %10 {offsets = [57, 0], sizes = [96, 4], strides = [1, 1]} : vector<160x4xf32> to vector<96x4xf32>
    %28 = arith.truncf %27 : vector<96x4xf32> to vector<96x4xbf16>
    %29 = tpu.concatenate %12, %14, %16, %18, %20, %22, %24, %26, %28 in 1 : vector<96x4xbf16>, vector<96x4xbf16>, vector<96x4xbf16>, vector<96x4xbf16>, vector<96x4xbf16>, vector<96x4xbf16>, vector<96x4xbf16>, vector<96x4xbf16>, vector<96x4xbf16> -> vector<96x36xbf16>
    %c0_11 = arith.constant 0 : index
    %c0_12 = arith.constant 0 : index
    %30 = vector.load %arg5[%c0_11, %c0_12] : memref<36x8xbf16, #tpu.memory_space<vmem>>, vector<36x8xbf16>
    %cst_13 = arith.constant dense<0.000000e+00> : vector<96x8xf32>
    %31 = tpu.matmul %29, %30, %cst_13 {dimension_numbers = #tpu.dot_dimension_numbers<[1], [0], [0], [1], [0, 0, 1, 1], [], []>} : vector<96x36xbf16>, vector<36x8xbf16>, vector<96x8xf32> -> vector<96x8xf32>
    %32 = vector.shape_cast %31 : vector<96x8xf32> to vector<4x24x8xf32>
    %33 = arith.truncf %32 : vector<4x24x8xf32> to vector<4x24x8xbf16>
    %34 = vector.shape_cast %33 : vector<4x24x8xbf16> to vector<1x4x24x8xbf16>
    %c0_14 = arith.constant 0 : index
    %c0_15 = arith.constant 0 : index
    %c0_16 = arith.constant 0 : index
    %c0_17 = arith.constant 0 : index
    %35 = vector.load %arg8[%c0_14, %c0_15, %c0_16, %c0_17] : memref<1x4x24x8xbf16, #tpu.memory_space<vmem>>, vector<1x4x24x8xbf16>
    tpu.vector_store %arg8[%c0_14, %c0_15, %c0_16, %c0_17], %34 {strides = array<i32>} : memref<1x4x24x8xbf16, #tpu.memory_space<vmem>>, vector<1x4x24x8xbf16>,
    %36 = tpu.iota {dimensions = array<i32: 1>} : vector<4x24x1xi32>
    %c1_i32 = arith.constant 1 : i32
    %37 = vector.broadcast %c1_i32 : i32 to vector<4x24x1xi32>
    %38 = arith.cmpi sge, %36, %37 : vector<4x24x1xi32>
    %c16_i32 = arith.constant 16 : i32
    %39 = vector.broadcast %c16_i32 : i32 to vector<4x24x1xi32>
    %40 = arith.cmpi sle, %36, %39 : vector<4x24x1xi32>
    %41 = arith.andi %38, %40 : vector<4x24x1xi1>
    %cst_18 = arith.constant 0.000000e+00 : f32
    %42 = vector.shape_cast %41 : vector<4x24x1xi1> to vector<4x24x1xi1>
    %43 = vector.broadcast %42 : vector<4x24x1xi1> to vector<4x24x8xi1>
    %44 = vector.broadcast %cst_18 : f32 to vector<4x24x8xf32>
    %45 = arith.select %43, %32, %44 : vector<4x24x8xi1>, vector<4x24x8xf32>
    %cst_19 = arith.constant dense<0.000000e+00> : vector<8xf32>
    %46 = vector.multi_reduction <add>, %45, %cst_19 [0, 1] : vector<4x24x8xf32> to vector<8xf32>
    %47 = vector.shape_cast %46 : vector<8xf32> to vector<1x1x8xf32>
    %48 = arith.mulf %45, %45 : vector<4x24x8xf32>
    %cst_20 = arith.constant dense<0.000000e+00> : vector<8xf32>
    %49 = vector.multi_reduction <add>, %48, %cst_20 [0, 1] : vector<4x24x8xf32> to vector<8xf32>
    %50 = vector.shape_cast %49 : vector<8xf32> to vector<1x1x8xf32>
    %51 = tpu.concatenate %47, %50 in 1 : vector<1x1x8xf32>, vector<1x1x8xf32> -> vector<1x2x8xf32>
    %52 = vector.shape_cast %51 : vector<1x2x8xf32> to vector<1x1x2x8xf32>
    %c0_21 = arith.constant 0 : index
    %c0_22 = arith.constant 0 : index
    %c0_23 = arith.constant 0 : index
    %c0_24 = arith.constant 0 : index
    %53 = vector.load %arg9[%c0_21, %c0_22, %c0_23, %c0_24] : memref<1x1x2x8xf32, #tpu.memory_space<vmem>>, vector<1x1x2x8xf32>
    tpu.vector_store %arg9[%c0_21, %c0_22, %c0_23, %c0_24], %52 {strides = array<i32>} : memref<1x1x2x8xf32, #tpu.memory_space<vmem>>, vector<1x1x2x8xf32>,
    return
  }
  func.func @transform_0(%arg0: i32, %arg1: i32) -> (i32, i32, i32, i32) {
    %c0_i32 = arith.constant 0 : i32
    %c0_i32_0 = arith.constant 0 : i32
    %c0_i32_1 = arith.constant 0 : i32
    return %arg0, %arg1, %c0_i32, %c0_i32_0 : i32, i32, i32, i32
  }
  func.func @transform_1(%arg0: i32, %arg1: i32) -> (i32, i32, i32, i32) {
    %c1_i32 = arith.constant 1 : i32
    %0 = arith.addi %arg1, %c1_i32 : i32
    %c4_i32 = arith.constant 4 : i32
    %1 = arith.muli %0, %c4_i32 : i32
    %c0_i32 = arith.constant 0 : i32
    %c0_i32_0 = arith.constant 0 : i32
    %c0_i32_1 = arith.constant 0 : i32
    return %arg0, %1, %c0_i32, %c0_i32_0 : i32, i32, i32, i32
  }
  func.func @transform_2(%arg0: i32, %arg1: i32) -> (i32, i32, i32, i32) {
    %c1_i32 = arith.constant 1 : i32
    %0 = arith.addi %arg1, %c1_i32 : i32
    %c4_i32 = arith.constant 4 : i32
    %1 = arith.muli %0, %c4_i32 : i32
    %c1_i32_0 = arith.constant 1 : i32
    %2 = arith.addi %1, %c1_i32_0 : i32
    %c0_i32 = arith.constant 0 : i32
    %c0_i32_1 = arith.constant 0 : i32
    %c0_i32_2 = arith.constant 0 : i32
    return %arg0, %2, %c0_i32, %c0_i32_1 : i32, i32, i32, i32
  }
  func.func @transform_3(%arg0: i32, %arg1: i32) -> (i32, i32) {
    %c0_i32 = arith.constant 0 : i32
    %c0_i32_0 = arith.constant 0 : i32
    %c0_i32_1 = arith.constant 0 : i32
    return %c0_i32, %c0_i32_0 : i32, i32
  }
  func.func @transform_4(%arg0: i32, %arg1: i32) -> (i32, i32) {
    %c0_i32 = arith.constant 0 : i32
    %c0_i32_0 = arith.constant 0 : i32
    %c0_i32_1 = arith.constant 0 : i32
    return %c0_i32, %c0_i32_0 : i32, i32
  }
  func.func @transform_5(%arg0: i32, %arg1: i32) -> (i32, i32) {
    %c0_i32 = arith.constant 0 : i32
    %c0_i32_0 = arith.constant 0 : i32
    %c0_i32_1 = arith.constant 0 : i32
    return %c0_i32, %c0_i32_0 : i32, i32
  }
  func.func @transform_6(%arg0: i32, %arg1: i32) -> (i32, i32, i32, i32) {
    %c0_i32 = arith.constant 0 : i32
    %c0_i32_0 = arith.constant 0 : i32
    %c0_i32_1 = arith.constant 0 : i32
    return %arg0, %arg1, %c0_i32, %c0_i32_0 : i32, i32, i32, i32
  }
  func.func @transform_7(%arg0: i32, %arg1: i32) -> (i32, i32, i32, i32) {
    %c0_i32 = arith.constant 0 : i32
    %c0_i32_0 = arith.constant 0 : i32
    %c0_i32_1 = arith.constant 0 : i32
    return %arg0, %arg1, %c0_i32, %c0_i32_0 : i32, i32, i32, i32
  }
}

module attributes {stable_mosaic.version = 11 : i64} {
  func.func @_conv_stats_kernel(%arg0: i32, %arg1: i32, %arg2: memref<1x4x24x8xbf16, #tpu.memory_space<vmem>>, %arg3: memref<1x1x24x8xbf16, #tpu.memory_space<vmem>>, %arg4: memref<1x1x24x8xbf16, #tpu.memory_space<vmem>>, %arg5: memref<72x4xbf16, #tpu.memory_space<vmem>>, %arg6: memref<1x8xf32, #tpu.memory_space<vmem>>, %arg7: memref<1x8xf32, #tpu.memory_space<vmem>>, %arg8: memref<1x4x24x4xbf16, #tpu.memory_space<vmem>>, %arg9: memref<1x1x2x4xf32, #tpu.memory_space<vmem>>) attributes {dimension_semantics = [#tpu.dimension_semantics<parallel>, #tpu.dimension_semantics<parallel>], iteration_bounds = array<i64: 2, 4>, scalar_prefetch = 0 : i64, scratch_operands = 0 : i64, tpu.core_type = #tpu.core_type<tc>, window_params = [{transform_indices = @transform_0, window_bounds = array<i64: 1, 4, 24, 8>}, {transform_indices = @transform_1, window_bounds = array<i64: 1, 1, 24, 8>}, {transform_indices = @transform_2, window_bounds = array<i64: 1, 1, 24, 8>}, {pipeline_mode = #tpu.pipeline_mode<synchronous>, transform_indices = @transform_3, window_bounds = array<i64: 72, 4>}, {pipeline_mode = #tpu.pipeline_mode<synchronous>, transform_indices = @transform_4, window_bounds = array<i64: 1, 8>}, {pipeline_mode = #tpu.pipeline_mode<synchronous>, transform_indices = @transform_5, window_bounds = array<i64: 1, 8>}, {transform_indices = @transform_6, window_bounds = array<i64: 1, 4, 24, 4>}, {transform_indices = @transform_7, window_bounds = array<i64: 1, 1, 2, 4>}]} {
    %c0 = arith.constant 0 : index
    %c0_0 = arith.constant 0 : index
    %c0_1 = arith.constant 0 : index
    %c0_2 = arith.constant 0 : index
    %0 = vector.load %arg2[%c0, %c0_0, %c0_1, %c0_2] : memref<1x4x24x8xbf16, #tpu.memory_space<vmem>>, vector<1x4x24x8xbf16>
    %1 = vector.shape_cast %0 : vector<1x4x24x8xbf16> to vector<4x24x8xbf16>
    %c0_3 = arith.constant 0 : index
    %c0_4 = arith.constant 0 : index
    %c0_5 = arith.constant 0 : index
    %c0_6 = arith.constant 0 : index
    %2 = vector.load %arg3[%c0_3, %c0_4, %c0_5, %c0_6] : memref<1x1x24x8xbf16, #tpu.memory_space<vmem>>, vector<1x1x24x8xbf16>
    %3 = vector.shape_cast %2 : vector<1x1x24x8xbf16> to vector<1x24x8xbf16>
    %c0_7 = arith.constant 0 : index
    %c0_8 = arith.constant 0 : index
    %c0_9 = arith.constant 0 : index
    %c0_10 = arith.constant 0 : index
    %4 = vector.load %arg4[%c0_7, %c0_8, %c0_9, %c0_10] : memref<1x1x24x8xbf16, #tpu.memory_space<vmem>>, vector<1x1x24x8xbf16>
    %5 = vector.shape_cast %4 : vector<1x1x24x8xbf16> to vector<1x24x8xbf16>
    %c0_11 = arith.constant 0 : index
    %c0_12 = arith.constant 0 : index
    %6 = vector.load %arg6[%c0_11, %c0_12] : memref<1x8xf32, #tpu.memory_space<vmem>>, vector<1x8xf32>
    %7 = vector.shape_cast %6 : vector<1x8xf32> to vector<8xf32>
    %c0_13 = arith.constant 0 : index
    %c0_14 = arith.constant 0 : index
    %8 = vector.load %arg7[%c0_13, %c0_14] : memref<1x8xf32, #tpu.memory_space<vmem>>, vector<1x8xf32>
    %9 = vector.shape_cast %8 : vector<1x8xf32> to vector<8xf32>
    %10 = tpu.iota {dimensions = array<i32: 1>} : vector<1x24x1xi32>
    %c1_i32 = arith.constant 1 : i32
    %11 = vector.broadcast %c1_i32 : i32 to vector<1x24x1xi32>
    %12 = arith.cmpi sge, %10, %11 : vector<1x24x1xi32>
    %c16_i32 = arith.constant 16 : i32
    %13 = vector.broadcast %c16_i32 : i32 to vector<1x24x1xi32>
    %14 = arith.cmpi sle, %10, %13 : vector<1x24x1xi32>
    %15 = arith.andi %12, %14 : vector<1x24x1xi1>
    %16 = tpu.iota {dimensions = array<i32: 0>} : vector<4x1x1xi32>
    %c0_i32 = arith.constant 0 : i32
    %17 = arith.cmpi sgt, %arg1, %c0_i32 : i32
    %c0_i32_15 = arith.constant 0 : i32
    %18 = vector.broadcast %c0_i32_15 : i32 to vector<4x1x1xi32>
    %19 = arith.cmpi sgt, %16, %18 : vector<4x1x1xi32>
    %20 = vector.broadcast %17 : i1 to vector<4x1x1xi1>
    %21 = arith.ori %20, %19 : vector<4x1x1xi1>
    %22 = vector.broadcast %15 : vector<1x24x1xi1> to vector<4x24x1xi1>
    %23 = vector.broadcast %21 : vector<4x1x1xi1> to vector<4x24x1xi1>
    %24 = arith.andi %22, %23 : vector<4x24x1xi1>
    %25 = arith.extf %1 : vector<4x24x8xbf16> to vector<4x24x8xf32>
    %26 = vector.shape_cast %7 : vector<8xf32> to vector<1x1x8xf32>
    %27 = vector.broadcast %26 : vector<1x1x8xf32> to vector<4x24x8xf32>
    %28 = arith.mulf %25, %27 : vector<4x24x8xf32>
    %29 = vector.shape_cast %9 : vector<8xf32> to vector<1x1x8xf32>
    %30 = vector.broadcast %29 : vector<1x1x8xf32> to vector<4x24x8xf32>
    %31 = arith.addf %28, %30 : vector<4x24x8xf32>
    %cst = arith.constant 0.000000e+00 : f32
    %32 = vector.broadcast %cst : f32 to vector<4x24x8xf32>
    %33 = arith.maximumf %31, %32 : vector<4x24x8xf32>
    %cst_16 = arith.constant 0.000000e+00 : f32
    %34 = vector.shape_cast %24 : vector<4x24x1xi1> to vector<4x24x1xi1>
    %35 = vector.broadcast %34 : vector<4x24x1xi1> to vector<4x24x8xi1>
    %36 = vector.broadcast %cst_16 : f32 to vector<4x24x8xf32>
    %37 = arith.select %35, %33, %36 : vector<4x24x8xi1>, vector<4x24x8xf32>
    %38 = arith.extf %3 : vector<1x24x8xbf16> to vector<1x24x8xf32>
    %39 = vector.shape_cast %7 : vector<8xf32> to vector<1x1x8xf32>
    %40 = vector.broadcast %39 : vector<1x1x8xf32> to vector<1x24x8xf32>
    %41 = arith.mulf %38, %40 : vector<1x24x8xf32>
    %42 = vector.shape_cast %9 : vector<8xf32> to vector<1x1x8xf32>
    %43 = vector.broadcast %42 : vector<1x1x8xf32> to vector<1x24x8xf32>
    %44 = arith.addf %41, %43 : vector<1x24x8xf32>
    %cst_17 = arith.constant 0.000000e+00 : f32
    %45 = vector.broadcast %cst_17 : f32 to vector<1x24x8xf32>
    %46 = arith.maximumf %44, %45 : vector<1x24x8xf32>
    %cst_18 = arith.constant 0.000000e+00 : f32
    %47 = vector.shape_cast %15 : vector<1x24x1xi1> to vector<1x24x1xi1>
    %48 = vector.broadcast %47 : vector<1x24x1xi1> to vector<1x24x8xi1>
    %49 = vector.broadcast %cst_18 : f32 to vector<1x24x8xf32>
    %50 = arith.select %48, %46, %49 : vector<1x24x8xi1>, vector<1x24x8xf32>
    %c3_i32 = arith.constant 3 : i32
    %51 = arith.cmpi slt, %arg1, %c3_i32 : i32
    %52 = vector.broadcast %51 : i1 to vector<1x24x1xi1>
    %53 = arith.andi %15, %52 : vector<1x24x1xi1>
    %54 = arith.extf %5 : vector<1x24x8xbf16> to vector<1x24x8xf32>
    %55 = vector.shape_cast %7 : vector<8xf32> to vector<1x1x8xf32>
    %56 = vector.broadcast %55 : vector<1x1x8xf32> to vector<1x24x8xf32>
    %57 = arith.mulf %54, %56 : vector<1x24x8xf32>
    %58 = vector.shape_cast %9 : vector<8xf32> to vector<1x1x8xf32>
    %59 = vector.broadcast %58 : vector<1x1x8xf32> to vector<1x24x8xf32>
    %60 = arith.addf %57, %59 : vector<1x24x8xf32>
    %cst_19 = arith.constant 0.000000e+00 : f32
    %61 = vector.broadcast %cst_19 : f32 to vector<1x24x8xf32>
    %62 = arith.maximumf %60, %61 : vector<1x24x8xf32>
    %cst_20 = arith.constant 0.000000e+00 : f32
    %63 = vector.shape_cast %53 : vector<1x24x1xi1> to vector<1x24x1xi1>
    %64 = vector.broadcast %63 : vector<1x24x1xi1> to vector<1x24x8xi1>
    %65 = vector.broadcast %cst_20 : f32 to vector<1x24x8xf32>
    %66 = arith.select %64, %62, %65 : vector<1x24x8xi1>, vector<1x24x8xf32>
    %cst_21 = arith.constant 0.000000e+00 : f32
    %67 = vector.broadcast %cst_21 : f32 to vector<8x8xf32>
    %68 = vector.shape_cast %37 : vector<4x24x8xf32> to vector<96x8xf32>
    %69 = vector.shape_cast %50 : vector<1x24x8xf32> to vector<24x8xf32>
    %70 = vector.shape_cast %66 : vector<1x24x8xf32> to vector<24x8xf32>
    %71 = tpu.concatenate %67, %68, %69, %70, %67 in 0 : vector<8x8xf32>, vector<96x8xf32>, vector<24x8xf32>, vector<24x8xf32>, vector<8x8xf32> -> vector<160x8xf32>
    %72 = vector.extract_strided_slice %71 {offsets = [7, 0], sizes = [96, 8], strides = [1, 1]} : vector<160x8xf32> to vector<96x8xf32>
    %73 = arith.truncf %72 : vector<96x8xf32> to vector<96x8xbf16>
    %74 = vector.extract_strided_slice %71 {offsets = [8, 0], sizes = [96, 8], strides = [1, 1]} : vector<160x8xf32> to vector<96x8xf32>
    %75 = arith.truncf %74 : vector<96x8xf32> to vector<96x8xbf16>
    %76 = vector.extract_strided_slice %71 {offsets = [9, 0], sizes = [96, 8], strides = [1, 1]} : vector<160x8xf32> to vector<96x8xf32>
    %77 = arith.truncf %76 : vector<96x8xf32> to vector<96x8xbf16>
    %78 = vector.extract_strided_slice %71 {offsets = [31, 0], sizes = [96, 8], strides = [1, 1]} : vector<160x8xf32> to vector<96x8xf32>
    %79 = arith.truncf %78 : vector<96x8xf32> to vector<96x8xbf16>
    %80 = vector.extract_strided_slice %71 {offsets = [32, 0], sizes = [96, 8], strides = [1, 1]} : vector<160x8xf32> to vector<96x8xf32>
    %81 = arith.truncf %80 : vector<96x8xf32> to vector<96x8xbf16>
    %82 = vector.extract_strided_slice %71 {offsets = [33, 0], sizes = [96, 8], strides = [1, 1]} : vector<160x8xf32> to vector<96x8xf32>
    %83 = arith.truncf %82 : vector<96x8xf32> to vector<96x8xbf16>
    %84 = vector.extract_strided_slice %71 {offsets = [55, 0], sizes = [96, 8], strides = [1, 1]} : vector<160x8xf32> to vector<96x8xf32>
    %85 = arith.truncf %84 : vector<96x8xf32> to vector<96x8xbf16>
    %86 = vector.extract_strided_slice %71 {offsets = [56, 0], sizes = [96, 8], strides = [1, 1]} : vector<160x8xf32> to vector<96x8xf32>
    %87 = arith.truncf %86 : vector<96x8xf32> to vector<96x8xbf16>
    %88 = vector.extract_strided_slice %71 {offsets = [57, 0], sizes = [96, 8], strides = [1, 1]} : vector<160x8xf32> to vector<96x8xf32>
    %89 = arith.truncf %88 : vector<96x8xf32> to vector<96x8xbf16>
    %90 = tpu.concatenate %73, %75, %77, %79, %81, %83, %85, %87, %89 in 1 : vector<96x8xbf16>, vector<96x8xbf16>, vector<96x8xbf16>, vector<96x8xbf16>, vector<96x8xbf16>, vector<96x8xbf16>, vector<96x8xbf16>, vector<96x8xbf16>, vector<96x8xbf16> -> vector<96x72xbf16>
    %c0_22 = arith.constant 0 : index
    %c0_23 = arith.constant 0 : index
    %91 = vector.load %arg5[%c0_22, %c0_23] : memref<72x4xbf16, #tpu.memory_space<vmem>>, vector<72x4xbf16>
    %cst_24 = arith.constant dense<0.000000e+00> : vector<96x4xf32>
    %92 = tpu.matmul %90, %91, %cst_24 {dimension_numbers = #tpu.dot_dimension_numbers<[1], [0], [0], [1], [0, 0, 1, 1], [], []>} : vector<96x72xbf16>, vector<72x4xbf16>, vector<96x4xf32> -> vector<96x4xf32>
    %93 = vector.shape_cast %92 : vector<96x4xf32> to vector<4x24x4xf32>
    %94 = arith.truncf %93 : vector<4x24x4xf32> to vector<4x24x4xbf16>
    %95 = vector.shape_cast %94 : vector<4x24x4xbf16> to vector<1x4x24x4xbf16>
    %c0_25 = arith.constant 0 : index
    %c0_26 = arith.constant 0 : index
    %c0_27 = arith.constant 0 : index
    %c0_28 = arith.constant 0 : index
    %96 = vector.load %arg8[%c0_25, %c0_26, %c0_27, %c0_28] : memref<1x4x24x4xbf16, #tpu.memory_space<vmem>>, vector<1x4x24x4xbf16>
    tpu.vector_store %arg8[%c0_25, %c0_26, %c0_27, %c0_28], %95 {strides = array<i32>} : memref<1x4x24x4xbf16, #tpu.memory_space<vmem>>, vector<1x4x24x4xbf16>,
    %97 = tpu.iota {dimensions = array<i32: 1>} : vector<4x24x1xi32>
    %c1_i32_29 = arith.constant 1 : i32
    %98 = vector.broadcast %c1_i32_29 : i32 to vector<4x24x1xi32>
    %99 = arith.cmpi sge, %97, %98 : vector<4x24x1xi32>
    %c16_i32_30 = arith.constant 16 : i32
    %100 = vector.broadcast %c16_i32_30 : i32 to vector<4x24x1xi32>
    %101 = arith.cmpi sle, %97, %100 : vector<4x24x1xi32>
    %102 = arith.andi %99, %101 : vector<4x24x1xi1>
    %cst_31 = arith.constant 0.000000e+00 : f32
    %103 = vector.shape_cast %102 : vector<4x24x1xi1> to vector<4x24x1xi1>
    %104 = vector.broadcast %103 : vector<4x24x1xi1> to vector<4x24x4xi1>
    %105 = vector.broadcast %cst_31 : f32 to vector<4x24x4xf32>
    %106 = arith.select %104, %93, %105 : vector<4x24x4xi1>, vector<4x24x4xf32>
    %cst_32 = arith.constant dense<0.000000e+00> : vector<4xf32>
    %107 = vector.multi_reduction <add>, %106, %cst_32 [0, 1] : vector<4x24x4xf32> to vector<4xf32>
    %108 = vector.shape_cast %107 : vector<4xf32> to vector<1x1x4xf32>
    %109 = arith.mulf %106, %106 : vector<4x24x4xf32>
    %cst_33 = arith.constant dense<0.000000e+00> : vector<4xf32>
    %110 = vector.multi_reduction <add>, %109, %cst_33 [0, 1] : vector<4x24x4xf32> to vector<4xf32>
    %111 = vector.shape_cast %110 : vector<4xf32> to vector<1x1x4xf32>
    %112 = tpu.concatenate %108, %111 in 1 : vector<1x1x4xf32>, vector<1x1x4xf32> -> vector<1x2x4xf32>
    %113 = vector.shape_cast %112 : vector<1x2x4xf32> to vector<1x1x2x4xf32>
    %c0_34 = arith.constant 0 : index
    %c0_35 = arith.constant 0 : index
    %c0_36 = arith.constant 0 : index
    %c0_37 = arith.constant 0 : index
    %114 = vector.load %arg9[%c0_34, %c0_35, %c0_36, %c0_37] : memref<1x1x2x4xf32, #tpu.memory_space<vmem>>, vector<1x1x2x4xf32>
    tpu.vector_store %arg9[%c0_34, %c0_35, %c0_36, %c0_37], %113 {strides = array<i32>} : memref<1x1x2x4xf32, #tpu.memory_space<vmem>>, vector<1x1x2x4xf32>,
    return
  }
  func.func @transform_0(%arg0: i32, %arg1: i32) -> (i32, i32, i32, i32) {
    %c0_i32 = arith.constant 0 : i32
    %c0_i32_0 = arith.constant 0 : i32
    %c0_i32_1 = arith.constant 0 : i32
    return %arg0, %arg1, %c0_i32, %c0_i32_0 : i32, i32, i32, i32
  }
  func.func @transform_1(%arg0: i32, %arg1: i32) -> (i32, i32, i32, i32) {
    %c1_i32 = arith.constant 1 : i32
    %0 = arith.addi %arg1, %c1_i32 : i32
    %c4_i32 = arith.constant 4 : i32
    %1 = arith.muli %0, %c4_i32 : i32
    %c0_i32 = arith.constant 0 : i32
    %c0_i32_0 = arith.constant 0 : i32
    %c0_i32_1 = arith.constant 0 : i32
    return %arg0, %1, %c0_i32, %c0_i32_0 : i32, i32, i32, i32
  }
  func.func @transform_2(%arg0: i32, %arg1: i32) -> (i32, i32, i32, i32) {
    %c1_i32 = arith.constant 1 : i32
    %0 = arith.addi %arg1, %c1_i32 : i32
    %c4_i32 = arith.constant 4 : i32
    %1 = arith.muli %0, %c4_i32 : i32
    %c1_i32_0 = arith.constant 1 : i32
    %2 = arith.addi %1, %c1_i32_0 : i32
    %c0_i32 = arith.constant 0 : i32
    %c0_i32_1 = arith.constant 0 : i32
    %c0_i32_2 = arith.constant 0 : i32
    return %arg0, %2, %c0_i32, %c0_i32_1 : i32, i32, i32, i32
  }
  func.func @transform_3(%arg0: i32, %arg1: i32) -> (i32, i32) {
    %c0_i32 = arith.constant 0 : i32
    %c0_i32_0 = arith.constant 0 : i32
    %c0_i32_1 = arith.constant 0 : i32
    return %c0_i32, %c0_i32_0 : i32, i32
  }
  func.func @transform_4(%arg0: i32, %arg1: i32) -> (i32, i32) {
    %c0_i32 = arith.constant 0 : i32
    %c0_i32_0 = arith.constant 0 : i32
    %c0_i32_1 = arith.constant 0 : i32
    return %c0_i32, %c0_i32_0 : i32, i32
  }
  func.func @transform_5(%arg0: i32, %arg1: i32) -> (i32, i32) {
    %c0_i32 = arith.constant 0 : i32
    %c0_i32_0 = arith.constant 0 : i32
    %c0_i32_1 = arith.constant 0 : i32
    return %c0_i32, %c0_i32_0 : i32, i32
  }
  func.func @transform_6(%arg0: i32, %arg1: i32) -> (i32, i32, i32, i32) {
    %c0_i32 = arith.constant 0 : i32
    %c0_i32_0 = arith.constant 0 : i32
    %c0_i32_1 = arith.constant 0 : i32
    return %arg0, %arg1, %c0_i32, %c0_i32_0 : i32, i32, i32, i32
  }
  func.func @transform_7(%arg0: i32, %arg1: i32) -> (i32, i32, i32, i32) {
    %c0_i32 = arith.constant 0 : i32
    %c0_i32_0 = arith.constant 0 : i32
    %c0_i32_1 = arith.constant 0 : i32
    return %arg0, %arg1, %c0_i32, %c0_i32_0 : i32, i32, i32, i32
  }
}

module attributes {stable_mosaic.version = 11 : i64} {
  func.func @_bn_relu_kernel(%arg0: i32, %arg1: i32, %arg2: memref<1x4x24x4xbf16, #tpu.memory_space<vmem>>, %arg3: memref<1x4xf32, #tpu.memory_space<vmem>>, %arg4: memref<1x4xf32, #tpu.memory_space<vmem>>, %arg5: memref<1x4x16x4xf32, #tpu.memory_space<vmem>>) attributes {dimension_semantics = [#tpu.dimension_semantics<parallel>, #tpu.dimension_semantics<parallel>], iteration_bounds = array<i64: 2, 4>, scalar_prefetch = 0 : i64, scratch_operands = 0 : i64, tpu.core_type = #tpu.core_type<tc>, window_params = [{transform_indices = @transform_0, window_bounds = array<i64: 1, 4, 24, 4>}, {pipeline_mode = #tpu.pipeline_mode<synchronous>, transform_indices = @transform_1, window_bounds = array<i64: 1, 4>}, {pipeline_mode = #tpu.pipeline_mode<synchronous>, transform_indices = @transform_2, window_bounds = array<i64: 1, 4>}, {transform_indices = @transform_3, window_bounds = array<i64: 1, 4, 16, 4>}]} {
    %c0 = arith.constant 0 : index
    %c0_0 = arith.constant 0 : index
    %c0_1 = arith.constant 0 : index
    %c0_2 = arith.constant 0 : index
    %0 = vector.load %arg2[%c0, %c0_0, %c0_1, %c0_2] : memref<1x4x24x4xbf16, #tpu.memory_space<vmem>>, vector<1x4x24x4xbf16>
    %1 = vector.shape_cast %0 : vector<1x4x24x4xbf16> to vector<4x24x4xbf16>
    %2 = arith.extf %1 : vector<4x24x4xbf16> to vector<4x24x4xf32>
    %c0_3 = arith.constant 0 : index
    %c0_4 = arith.constant 0 : index
    %3 = vector.load %arg3[%c0_3, %c0_4] : memref<1x4xf32, #tpu.memory_space<vmem>>, vector<1x4xf32>
    %4 = vector.shape_cast %3 : vector<1x4xf32> to vector<4xf32>
    %5 = vector.shape_cast %4 : vector<4xf32> to vector<1x1x4xf32>
    %6 = vector.broadcast %5 : vector<1x1x4xf32> to vector<4x24x4xf32>
    %7 = arith.mulf %2, %6 : vector<4x24x4xf32>
    %c0_5 = arith.constant 0 : index
    %c0_6 = arith.constant 0 : index
    %8 = vector.load %arg4[%c0_5, %c0_6] : memref<1x4xf32, #tpu.memory_space<vmem>>, vector<1x4xf32>
    %9 = vector.shape_cast %8 : vector<1x4xf32> to vector<4xf32>
    %10 = vector.shape_cast %9 : vector<4xf32> to vector<1x1x4xf32>
    %11 = vector.broadcast %10 : vector<1x1x4xf32> to vector<4x24x4xf32>
    %12 = arith.addf %7, %11 : vector<4x24x4xf32>
    %cst = arith.constant 0.000000e+00 : f32
    %13 = vector.broadcast %cst : f32 to vector<4x24x4xf32>
    %14 = arith.maximumf %12, %13 : vector<4x24x4xf32>
    %15 = vector.extract_strided_slice %14 {offsets = [0, 1, 0], sizes = [4, 16, 4], strides = [1, 1, 1]} : vector<4x24x4xf32> to vector<4x16x4xf32>
    %16 = vector.shape_cast %15 : vector<4x16x4xf32> to vector<1x4x16x4xf32>
    %c0_7 = arith.constant 0 : index
    %c0_8 = arith.constant 0 : index
    %c0_9 = arith.constant 0 : index
    %c0_10 = arith.constant 0 : index
    %17 = vector.load %arg5[%c0_7, %c0_8, %c0_9, %c0_10] : memref<1x4x16x4xf32, #tpu.memory_space<vmem>>, vector<1x4x16x4xf32>
    tpu.vector_store %arg5[%c0_7, %c0_8, %c0_9, %c0_10], %16 {strides = array<i32>} : memref<1x4x16x4xf32, #tpu.memory_space<vmem>>, vector<1x4x16x4xf32>,
    return
  }
  func.func @transform_0(%arg0: i32, %arg1: i32) -> (i32, i32, i32, i32) {
    %c0_i32 = arith.constant 0 : i32
    %c0_i32_0 = arith.constant 0 : i32
    %c0_i32_1 = arith.constant 0 : i32
    return %arg0, %arg1, %c0_i32, %c0_i32_0 : i32, i32, i32, i32
  }
  func.func @transform_1(%arg0: i32, %arg1: i32) -> (i32, i32) {
    %c0_i32 = arith.constant 0 : i32
    %c0_i32_0 = arith.constant 0 : i32
    %c0_i32_1 = arith.constant 0 : i32
    return %c0_i32, %c0_i32_0 : i32, i32
  }
  func.func @transform_2(%arg0: i32, %arg1: i32) -> (i32, i32) {
    %c0_i32 = arith.constant 0 : i32
    %c0_i32_0 = arith.constant 0 : i32
    %c0_i32_1 = arith.constant 0 : i32
    return %c0_i32, %c0_i32_0 : i32, i32
  }
  func.func @transform_3(%arg0: i32, %arg1: i32) -> (i32, i32, i32, i32) {
    %c0_i32 = arith.constant 0 : i32
    %c0_i32_0 = arith.constant 0 : i32
    %c0_i32_1 = arith.constant 0 : i32
    return %arg0, %arg1, %c0_i32, %c0_i32_0 : i32, i32, i32, i32
  }
}

</mosaic_0001>

<llo_original>
// kernel: vgg_block_forward.5
$region0: #{vgg_block_forward.5}
  #allocation0 [shape = 'u32[]', space=smem, size = 0x4, offset = 0x4, fixed_abs, tag = 'smem constant byte address 0x4 - core index']
  #allocation1 [shape = 'u32[144,128]{1,0:T(1,128)}', space=vmem, size = 0x12000, scoped, tag = 'internal scratch']
  %s0 = inlined_call_operand.vmem [shape: bf16[2,16,24,4], index: 0, kind: input, shape index: {}]
  %s1 = inlined_call_operand.vmem [shape: f32[1,4], index: 1, kind: input, shape index: {}]
  %s2 = inlined_call_operand.vmem [shape: f32[1,4], index: 2, kind: input, shape index: {}]
  %s3 = inlined_call_operand.vmem [shape: f32[2,16,16,4], index: 3, kind: output, shape index: {}]
  %s4 = sld [smem:[#allocation0]]
  $region45: #{vgg_block_forward.5} parent=0
    _
  %s6 = ssub.s32 1, %s4
  %s7 = scalar_select 0, %s6, %s4
  loop: start=0, step=1, limit=10
  $region2: #{vgg_block_forward.5} parent=0 // loop_pre_header
    _
  $region3: #{vgg_block_forward.5} parent=0 // loop_header
    %s9 = sphi 0, %s13
    %p10 = scmp.ge.s32.totalorder %s9, 10
    %s16 = sphi 0, %s28
    %s17 = sphi 0, %s24
    %s18 = sphi 0, %s16
    %s19 = sphi 0, %s17
    %s20 = sphi 0, %s18
    %s21 = sphi 0, %s19
    %s33 = sphi 0, %s35
    %s36 = sphi 0, %s33
    %s37 = sphi 0, %s36
    %s53 = sphi 0, %s37
    %s57 = sphi 0, %s57
    %s59 = sphi 0, %s57
    %s60 = sphi 0, %s59
    %s74 = sphi 0, %s60
    %s78 = sphi 0, %s78
    %s80 = sphi 0, %s78
    %s81 = sphi 0, %s80
    %s95 = sphi 0, %s81
    %s103 = sphi 0, %s105
    %s106 = sphi 0, %s103
    %s107 = sphi 0, %s106
    %s123 = sphi 0, %s107
  $region4: #{vgg_block_forward.5} parent=0 // loop_header_branch
    %12 = sbr.rel (%p10) target = $region8
  $region5: #{vgg_block_forward.5} parent=0 // loop_body
    %s14 = ssub.s32 %s9, 1
    %s15 = ssub.s32 %s9, 2
    %s22 = sadd.s32 1, %s17
    %p23 = scmp.ge.s32.totalorder %s22, 4
    %s24 = scalar_select %p23, 0, %s22
    %s25 = sadd.s32 1, %s16
    %s26 = scalar_select %p23, %s25, %s16
    %p27 = scmp.ge.s32.totalorder %s26, 2
    %s28 = scalar_select %p27, 0, %s26
    %s29 = ssub.s32 %s16, %s28
    %s30 = ssub.s32 %s17, %s24
    %s31 = sor.u32 %s29, %s30
    %p32 = scmp.eq.s32.totalorder %s31, 0
    %s34 = sadd.s32 %s33, 1
    %s35 = scalar_select %p32, %s33, %s34
    %p38 = pneg %p32
    %p39 = scmp.eq.s32.totalorder %s9, 7
    %p40 = por %p38, %p39
    %p41 = scmp.ne.s32.totalorder %s33, %s36
    %p42 = scmp.eq.s32.totalorder %s9, 0
    %p43 = por %p41, %p42
    %p44 = scmp.ne.s32.totalorder %s33, %s36
    %p45 = scmp.eq.s32.totalorder %s14, 7
    %p46 = por %p44, %p45
    %p47 = scmp.ne.s32.totalorder %s36, %s37
    %p48 = scmp.eq.s32.totalorder %s14, 0
    %p49 = por %p47, %p48
    %p50 = scmp.ne.s32.totalorder %s36, %s37
    %p51 = scmp.eq.s32.totalorder %s15, 7
    %p52 = por %p50, %p51
    %p54 = scmp.ne.s32.totalorder %s37, %s53
    %p55 = scmp.eq.s32.totalorder %s15, 0
    %p56 = por %p54, %p55
    %s58 = sadd.s32 %s57, 1
    %p61 = scmp.eq.s32.totalorder %s9, 7
    %p62 = scmp.ne.s32.totalorder %s57, %s59
    %p63 = scmp.eq.s32.totalorder %s9, 0
    %p64 = por %p62, %p63
    %p65 = scmp.ne.s32.totalorder %s57, %s59
    %p66 = scmp.eq.s32.totalorder %s14, 7
    %p67 = por %p65, %p66
    %p68 = scmp.ne.s32.totalorder %s59, %s60
    %p69 = scmp.eq.s32.totalorder %s14, 0
    %p70 = por %p68, %p69
    %p71 = scmp.ne.s32.totalorder %s59, %s60
    %p72 = scmp.eq.s32.totalorder %s15, 7
    %p73 = por %p71, %p72
    %p75 = scmp.ne.s32.totalorder %s60, %s74
    %p76 = scmp.eq.s32.totalorder %s15, 0
    %p77 = por %p75, %p76
    %s79 = sadd.s32 %s78, 1
    %p82 = scmp.eq.s32.totalorder %s9, 7
    %p83 = scmp.ne.s32.totalorder %s78, %s80
    %p84 = scmp.eq.s32.totalorder %s9, 0
    %p85 = por %p83, %p84
    %p86 = scmp.ne.s32.totalorder %s78, %s80
    %p87 = scmp.eq.s32.totalorder %s14, 7
    %p88 = por %p86, %p87
    %p89 = scmp.ne.s32.totalorder %s80, %s81
    %p90 = scmp.eq.s32.totalorder %s14, 0
    %p91 = por %p89, %p90
    %p92 = scmp.ne.s32.totalorder %s80, %s81
    %p93 = scmp.eq.s32.totalorder %s15, 7
    %p94 = por %p92, %p93
    %p96 = scmp.ne.s32.totalorder %s81, %s95
    %p97 = scmp.eq.s32.totalorder %s15, 0
    %p98 = por %p96, %p97
    %s99 = ssub.s32 %s16, %s28
    %s100 = ssub.s32 %s17, %s24
    %s101 = sor.u32 %s99, %s100
    %p102 = scmp.eq.s32.totalorder %s101, 0
    %s104 = sadd.s32 %s103, 1
    %s105 = scalar_select %p102, %s103, %s104
    %p108 = pneg %p102
    %p109 = scmp.eq.s32.totalorder %s9, 7
    %p110 = por %p108, %p109
    %p111 = scmp.ne.s32.totalorder %s103, %s106
    %p112 = scmp.eq.s32.totalorder %s9, 0
    %p113 = por %p111, %p112
    %p114 = scmp.ne.s32.totalorder %s103, %s106
    %p115 = scmp.eq.s32.totalorder %s14, 7
    %p116 = por %p114, %p115
    %p117 = scmp.ne.s32.totalorder %s106, %s107
    %p118 = scmp.eq.s32.totalorder %s14, 0
    %p119 = por %p117, %p118
    %p120 = scmp.ne.s32.totalorder %s106, %s107
    %p121 = scmp.eq.s32.totalorder %s15, 7
    %p122 = por %p120, %p121
    %p124 = scmp.ne.s32.totalorder %s107, %s123
    %p125 = scmp.eq.s32.totalorder %s15, 0
    %p126 = por %p124, %p125
    %p127 = scmp.le.s32.totalorder 1, %s9
    %p128 = scmp.lt.s32.totalorder %s9, 9
    %p129 = pnand %p127, %p128
    %p130 = pneg %p129
    // Predicated region
    $region9: #{vgg_block_forward.5} parent=5 // pred_check
      _
    $region10: #{vgg_block_forward.5} parent=5 // pred_check_branch
      %132 = sbr.rel (%p129) target = $region12
    $region11: #{vgg_block_forward.5} parent=5 // pred_region
      %s133 = ssub.s32 %s9, 1
      // Predicated region
      $region13: #{vgg_block_forward.5} parent=11 // pred_check
        %p134 = pneg %p70
      $region14: #{vgg_block_forward.5} parent=11 // pred_check_branch
        %136 = sbr.rel (%p134) target = $region16
      $region15: #{vgg_block_forward.5} parent=11 // pred_region
        _
      $region16: #{vgg_block_forward.5} parent=11 // pred_fallthru
        _
      // Predicated region
      $region17: #{vgg_block_forward.5} parent=11 // pred_check
        %p137 = pneg %p91
      $region18: #{vgg_block_forward.5} parent=11 // pred_check_branch
        %139 = sbr.rel (%p137) target = $region20
      $region19: #{vgg_block_forward.5} parent=11 // pred_region
        _
      $region20: #{vgg_block_forward.5} parent=11 // pred_fallthru
        _
    $region12: #{vgg_block_forward.5} parent=5 // pred_fallthru
      _
    %p140 = scmp.lt.s32.totalorder %s9, 8
    // Predicated region
    $region21: #{vgg_block_forward.5} parent=5 // pred_check
      %p141 = pneg %p140
    $region22: #{vgg_block_forward.5} parent=5 // pred_check_branch
      %143 = sbr.rel (%p141) target = $region24
    $region23: #{vgg_block_forward.5} parent=5 // pred_region
      // Predicated region
      $region25: #{vgg_block_forward.5} parent=23 // pred_check
        %p144 = pneg %p43
      $region26: #{vgg_block_forward.5} parent=23 // pred_check_branch
        %146 = sbr.rel (%p144) target = $region28
      $region27: #{vgg_block_forward.5} parent=23 // pred_region
        %s147 = smul.u32 4, %s17
        %p148 = scmp.lt.s32.totalorder %s16, 1
        %s149 = scalar_select %p148, %s16, 1
        %p150 = scmp.lt.s32.totalorder %s147, 15
        %s151 = scalar_select %p150, %s147, 15
        %s152 = smul.addr %s151, 3
        %s153 = smul.addr %s149, 48
        %s154 = sadd.s32 %s152, %s153
        %s155 = smul.addr %s154, 4
        %s156 = scalar_lea.vmem %s0, %s155
        %s157 = smul.u32 4, %s17
      $region28: #{vgg_block_forward.5} parent=23 // pred_fallthru
        _
    $region24: #{vgg_block_forward.5} parent=5 // pred_fallthru
      _
    %p158 = scmp.le.s32.totalorder 1, %s9
    %p159 = scmp.lt.s32.totalorder %s9, 9
    %p160 = pnand %p158, %p159
    %p161 = pneg %p160
    // Predicated region
    $region29: #{vgg_block_forward.5} parent=5 // pred_check
      _
    $region30: #{vgg_block_forward.5} parent=5 // pred_check_branch
      %163 = sbr.rel (%p160) target = $region32
    $region31: #{vgg_block_forward.5} parent=5 // pred_region
      %s164 = ssub.s32 %s9, 1
      %s165 = smul.u32 4, %s19
      %p166 = scmp.lt.s32.totalorder %s18, 1
      %s167 = scalar_select %p166, %s18, 1
      %p168 = scmp.lt.s32.totalorder %s165, 15
      %s169 = scalar_select %p168, %s165, 15
      %s170 = smul.addr %s169, 3
      %s171 = smul.addr %s167, 48
      %s172 = sadd.s32 %s170, %s171
      %s173 = smul.addr %s172, 4
      %s174 = scalar_lea.vmem %s0, %s173
      %p175 = pneg %p49
      %p176 = pneg %p46
      %p177 = pneg %p70
      %p178 = pneg %p67
      %p179 = pneg %p91
      %p180 = pneg %p88
      %p181 = pneg %p119
      %p182 = pneg %p116
      %s183 = smul.u32 4, %s19
      %p184 = scmp.lt.s32.totalorder %s18, 1
      %s185 = scalar_select %p184, %s18, 1
      %p186 = scmp.lt.s32.totalorder %s183, 15
      %s187 = scalar_select %p186, %s183, 15
      %s188 = smul.addr %s187, 2
      %s189 = smul.addr %s185, 32
      %s190 = sadd.s32 %s188, %s189
      %s191 = smul.addr %s190, 8
      %s192 = scalar_lea.vmem %s3, %s191
      %s193 = smul.u32 4, %s19
      %p194 = scmp.lt.s32.totalorder %s18, 1
      %s195 = scalar_select %p194, %s18, 1
      %p196 = scmp.lt.s32.totalorder %s193, 15
      %s197 = scalar_select %p196, %s193, 15
      %s198 = smul.addr %s197, 3
      %s199 = smul.addr %s195, 48
      %s200 = sadd.s32 %s198, %s199
      %s201 = smul.addr %s200, 4
      %s202 = scalar_lea.vmem %s0, %s201
      %s203 = smul.u32 4, %s19
      %s204 = smul.u32 4, %s19
      %p205 = scmp.lt.s32.totalorder %s18, 1
      %s206 = scalar_select %p205, %s18, 1
      %p207 = scmp.lt.s32.totalorder %s204, 15
      %s208 = scalar_select %p207, %s204, 15
      %s209 = smul.addr %s208, 2
      %s210 = smul.addr %s206, 32
      %s211 = sadd.s32 %s209, %s210
      %s212 = smul.addr %s211, 8
      %s213 = scalar_lea.vmem %s3, %s212
      %s214 = smul.u32 4, %s19
      %v215 = vld [vmem:[%s202] sm:$0xf]
      %v216 = vld [vmem:[%s202 + $0x4] sm:$0xf]
      %v217 = vld [vmem:[%s202 + $0x8] sm:$0xf]
      %v218 = vld [vmem:[%s202 + $0xc] sm:$0xf]
      %v219 = vld [vmem:[%s202 + $0x10] sm:$0xf]
      %v220 = vld [vmem:[%s202 + $0x14] sm:$0xf]
      %v221 = vld [vmem:[%s202 + $0x18] sm:$0xf]
      %v222 = vld [vmem:[%s202 + $0x1c] sm:$0xf]
      %v223 = vld [vmem:[%s202 + $0x20] sm:$0xf]
      %v224 = vld [vmem:[%s202 + $0x24] sm:$0xf]
      %v225 = vld [vmem:[%s202 + $0x28] sm:$0xf]
      %v226 = vld [vmem:[%s202 + $0x2c] sm:$0xf]
      %v227 = vunpack.c.l.bf16 %v215
      %v228 = vunpack.c.l.bf16 %v216
      %v229 = vunpack.c.l.bf16 %v217
      %v230 = vunpack.c.l.bf16 %v218
      %v231 = vunpack.c.l.bf16 %v219
      %v232 = vunpack.c.l.bf16 %v220
      %v233 = vunpack.c.l.bf16 %v221
      %v234 = vunpack.c.l.bf16 %v222
      %v235 = vunpack.c.l.bf16 %v223
      %v236 = vunpack.c.l.bf16 %v224
      %v237 = vunpack.c.l.bf16 %v225
      %v238 = vunpack.c.l.bf16 %v226
      %v239 = vld [vmem:[%s1] sm:$0x1]
      %v241 = vlaneseq
      %v242 = vshrl.u32 %v241, 7
      %v243 = vsub.s32 0, %v242
      %v244 = vrot.slane %v239, %v243
      %v246 = vmul.f32 %v227, %v244
      %v247 = vmul.f32 %v228, %v244
      %v248 = vmul.f32 %v229, %v244
      %v249 = vmul.f32 %v230, %v244
      %v250 = vmul.f32 %v231, %v244
      %v251 = vmul.f32 %v232, %v244
      %v252 = vmul.f32 %v233, %v244
      %v253 = vmul.f32 %v234, %v244
      %v254 = vmul.f32 %v235, %v244
      %v255 = vmul.f32 %v236, %v244
      %v256 = vmul.f32 %v237, %v244
      %v257 = vmul.f32 %v238, %v244
      %v258 = vld [vmem:[%s2] sm:$0x1]
      %v260 = vlaneseq
      %v261 = vshrl.u32 %v260, 7
      %v262 = vsub.s32 0, %v261
      %v263 = vrot.slane %v258, %v262
      %v265 = vadd.f32 %v246, %v263
      %v266 = vadd.f32 %v247, %v263
      %v267 = vadd.f32 %v248, %v263
      %v268 = vadd.f32 %v249, %v263
      %v269 = vadd.f32 %v250, %v263
      %v270 = vadd.f32 %v251, %v263
      %v271 = vadd.f32 %v252, %v263
      %v272 = vadd.f32 %v253, %v263
      %v273 = vadd.f32 %v254, %v263
      %v274 = vadd.f32 %v255, %v263
      %v275 = vadd.f32 %v256, %v263
      %v276 = vadd.f32 %v257, %v263
      %v277 = vmax.f32 %v265, 0.0
      %v278 = vmax.f32 %v266, 0.0
      %v279 = vmax.f32 %v267, 0.0
      %v280 = vmax.f32 %v268, 0.0
      %v281 = vmax.f32 %v269, 0.0
      %v282 = vmax.f32 %v270, 0.0
      %v283 = vmax.f32 %v271, 0.0
      %v284 = vmax.f32 %v272, 0.0
      %v285 = vmax.f32 %v273, 0.0
      %v286 = vmax.f32 %v274, 0.0
      %v287 = vmax.f32 %v275, 0.0
      %v288 = vmax.f32 %v276, 0.0
      %vm289 = vcmask 31745
      %290 = vst.msk [vmem:[%s213 - $0x1] sm:$0xfe] %vm289, %v277
      %vm291 = vcmask 31744
      %292 = vst.msk [vmem:[%s213 + $0x7] sm:$0xff] %vm291, %v278
      %vm293 = vcmask 24576
      %294 = vst.msk [vmem:[%s213 + $0xf] sm:$0x1] %vm293, %v279
      %295 = vst.msk [vmem:[%s213 + $0xf] sm:$0xfe] %vm289, %v280
      %296 = vst.msk [vmem:[%s213 + $0x17] sm:$0xff] %vm291, %v281
      %297 = vst.msk [vmem:[%s213 + $0x1f] sm:$0x1] %vm293, %v282
      %298 = vst.msk [vmem:[%s213 + $0x1f] sm:$0xfe] %vm289, %v283
      %299 = vst.msk [vmem:[%s213 + $0x27] sm:$0xff] %vm291, %v284
      %300 = vst.msk [vmem:[%s213 + $0x2f] sm:$0x1] %vm293, %v285
      %301 = vst.msk [vmem:[%s213 + $0x2f] sm:$0xfe] %vm289, %v286
      %302 = vst.msk [vmem:[%s213 + $0x37] sm:$0xff] %vm291, %v287
      %303 = vst.msk [vmem:[%s213 + $0x3f] sm:$0x1] %vm293, %v288
      %s304 = smul.u32 4, %s19
      %p305 = scmp.lt.s32.totalorder %s18, 1
      %s306 = scalar_select %p305, %s18, 1
      %p307 = scmp.lt.s32.totalorder %s304, 15
      %s308 = scalar_select %p307, %s304, 15
      %s309 = smul.addr %s308, 2
      %s310 = smul.addr %s306, 32
      %s311 = sadd.s32 %s309, %s310
      %s312 = smul.addr %s311, 8
      %s313 = scalar_lea.vmem %s3, %s312
      // Predicated region
      $region33: #{vgg_block_forward.5} parent=31 // pred_check
        %p314 = pneg %p116
      $region34: #{vgg_block_forward.5} parent=31 // pred_check_branch
        %316 = sbr.rel (%p314) target = $region36
      $region35: #{vgg_block_forward.5} parent=31 // pred_region
        %s317 = smul.u32 4, %s19
      $region36: #{vgg_block_forward.5} parent=31 // pred_fallthru
        _
    $region32: #{vgg_block_forward.5} parent=5 // pred_fallthru
      _
    %p318 = scmp.le.s32.totalorder 2, %s9
    // Predicated region
    $region37: #{vgg_block_forward.5} parent=5 // pred_check
      %p319 = pneg %p318
    $region38: #{vgg_block_forward.5} parent=5 // pred_check_branch
      %321 = sbr.rel (%p319) target = $region40
    $region39: #{vgg_block_forward.5} parent=5 // pred_region
      %s322 = ssub.s32 %s9, 2
      // Predicated region
      $region41: #{vgg_block_forward.5} parent=39 // pred_check
        %p323 = pneg %p122
      $region42: #{vgg_block_forward.5} parent=39 // pred_check_branch
        %325 = sbr.rel (%p323) target = $region44
      $region43: #{vgg_block_forward.5} parent=39 // pred_region
        %s326 = smul.u32 4, %s21
        %p327 = scmp.lt.s32.totalorder %s20, 1
        %s328 = scalar_select %p327, %s20, 1
        %p329 = scmp.lt.s32.totalorder %s326, 15
        %s330 = scalar_select %p329, %s326, 15
        %s331 = smul.addr %s330, 2
        %s332 = smul.addr %s328, 32
        %s333 = sadd.s32 %s331, %s332
        %s334 = smul.addr %s333, 8
        %s335 = scalar_lea.vmem %s3, %s334
      $region44: #{vgg_block_forward.5} parent=39 // pred_fallthru
        _
    $region40: #{vgg_block_forward.5} parent=5 // pred_fallthru
      _
  $region6: #{vgg_block_forward.5} parent=0 // loop_footer
    %s13 = sadd.s32 1, %s9
  $region7: #{vgg_block_forward.5} parent=0 // loop_footer_branch
    %8 = sbr.rel target = $region3
  $region8: #{vgg_block_forward.5} parent=0 // loop_exit
    _

// kernel: vgg_block_forward.3
$region0: #{vgg_block_forward.3}
  #allocation0 [shape = 'u32[]', space=smem, size = 0x4, offset = 0x4, fixed_abs, tag = 'smem constant byte address 0x4 - core index']
  #allocation1 [shape = 'u32[144,128]{1,0:T(1,128)}', space=vmem, size = 0x12000, scoped, tag = 'internal scratch']
  %s0 = inlined_call_operand.vmem [shape: f32[2,18,24,4], index: 0, kind: input, shape index: {}, may-alias: {0,1,2}]
  %s1 = inlined_call_operand.vmem [shape: f32[2,18,24,4], index: 1, kind: input, shape index: {}, may-alias: {0,1,2}]
  %s2 = inlined_call_operand.vmem [shape: f32[2,18,24,4], index: 2, kind: input, shape index: {}, may-alias: {0,1,2}]
  %s3 = inlined_call_operand.vmem [shape: bf16[36,8], index: 3, kind: input, shape index: {}]
  %s4 = inlined_call_operand.vmem [shape: f32[1,4], index: 4, kind: input, shape index: {}]
  %s5 = inlined_call_operand.vmem [shape: f32[1,4], index: 5, kind: input, shape index: {}]
  %s6 = inlined_call_operand.vmem [shape: bf16[2,16,24,8], index: 6, kind: output, shape index: {0}]
  %s7 = inlined_call_operand.vmem [shape: f32[2,4,2,8], index: 7, kind: output, shape index: {1}]
  %8 = xla_tuple %s6, %s7
  %s9 = sld [smem:[#allocation0]]
  $region65: #{vgg_block_forward.3} parent=0
    _
  %s11 = ssub.s32 1, %s9
  %s12 = scalar_select 0, %s11, %s9
  loop: start=0, step=1, limit=10
  $region2: #{vgg_block_forward.3} parent=0 // loop_pre_header
    _
  $region3: #{vgg_block_forward.3} parent=0 // loop_header
    %s14 = sphi 0, %s18
    %p15 = scmp.ge.s32.totalorder %s14, 10
    %s21 = sphi 0, %s33
    %s22 = sphi 0, %s29
    %s23 = sphi 0, %s21
    %s24 = sphi 0, %s22
    %s25 = sphi 0, %s23
    %s26 = sphi 0, %s24
    %s38 = sphi 0, %s40
    %s41 = sphi 0, %s38
    %s42 = sphi 0, %s41
    %s58 = sphi 0, %s42
    %s70 = sphi 0, %s72
    %s73 = sphi 0, %s70
    %s74 = sphi 0, %s73
    %s90 = sphi 0, %s74
    %s104 = sphi 0, %s106
    %s107 = sphi 0, %s104
    %s108 = sphi 0, %s107
    %s124 = sphi 0, %s108
    %s128 = sphi 0, %s128
    %s130 = sphi 0, %s128
    %s131 = sphi 0, %s130
    %s145 = sphi 0, %s131
    %s149 = sphi 0, %s149
    %s151 = sphi 0, %s149
    %s152 = sphi 0, %s151
    %s166 = sphi 0, %s152
    %s170 = sphi 0, %s170
    %s172 = sphi 0, %s170
    %s173 = sphi 0, %s172
    %s187 = sphi 0, %s173
    %s195 = sphi 0, %s197
    %s198 = sphi 0, %s195
    %s199 = sphi 0, %s198
    %s215 = sphi 0, %s199
    %s223 = sphi 0, %s225
    %s226 = sphi 0, %s223
    %s227 = sphi 0, %s226
    %s243 = sphi 0, %s227
  $region4: #{vgg_block_forward.3} parent=0 // loop_header_branch
    %17 = sbr.rel (%p15) target = $region8
  $region5: #{vgg_block_forward.3} parent=0 // loop_body
    %s19 = ssub.s32 %s14, 1
    %s20 = ssub.s32 %s14, 2
    %s27 = sadd.s32 1, %s22
    %p28 = scmp.ge.s32.totalorder %s27, 4
    %s29 = scalar_select %p28, 0, %s27
    %s30 = sadd.s32 1, %s21
    %s31 = scalar_select %p28, %s30, %s21
    %p32 = scmp.ge.s32.totalorder %s31, 2
    %s33 = scalar_select %p32, 0, %s31
    %s34 = ssub.s32 %s21, %s33
    %s35 = ssub.s32 %s22, %s29
    %s36 = sor.u32 %s34, %s35
    %p37 = scmp.eq.s32.totalorder %s36, 0
    %s39 = sadd.s32 %s38, 1
    %s40 = scalar_select %p37, %s38, %s39
    %p43 = pneg %p37
    %p44 = scmp.eq.s32.totalorder %s14, 7
    %p45 = por %p43, %p44
    %p46 = scmp.ne.s32.totalorder %s38, %s41
    %p47 = scmp.eq.s32.totalorder %s14, 0
    %p48 = por %p46, %p47
    %p49 = scmp.ne.s32.totalorder %s38, %s41
    %p50 = scmp.eq.s32.totalorder %s19, 7
    %p51 = por %p49, %p50
    %p52 = scmp.ne.s32.totalorder %s41, %s42
    %p53 = scmp.eq.s32.totalorder %s19, 0
    %p54 = por %p52, %p53
    %p55 = scmp.ne.s32.totalorder %s41, %s42
    %p56 = scmp.eq.s32.totalorder %s20, 7
    %p57 = por %p55, %p56
    %p59 = scmp.ne.s32.totalorder %s42, %s58
    %p60 = scmp.eq.s32.totalorder %s20, 0
    %p61 = por %p59, %p60
    %s62 = sadd.s32 %s22, 1
    %s63 = smul.u32 %s62, 4
    %s64 = sadd.s32 %s29, 1
    %s65 = smul.u32 %s64, 4
    %s66 = ssub.s32 %s21, %s33
    %s67 = ssub.s32 %s63, %s65
    %s68 = sor.u32 %s66, %s67
    %p69 = scmp.eq.s32.totalorder %s68, 0
    %s71 = sadd.s32 %s70, 1
    %s72 = scalar_select %p69, %s70, %s71
    %p75 = pneg %p69
    %p76 = scmp.eq.s32.totalorder %s14, 7
    %p77 = por %p75, %p76
    %p78 = scmp.ne.s32.totalorder %s70, %s73
    %p79 = scmp.eq.s32.totalorder %s14, 0
    %p80 = por %p78, %p79
    %p81 = scmp.ne.s32.totalorder %s70, %s73
    %p82 = scmp.eq.s32.totalorder %s19, 7
    %p83 = por %p81, %p82
    %p84 = scmp.ne.s32.totalorder %s73, %s74
    %p85 = scmp.eq.s32.totalorder %s19, 0
    %p86 = por %p84, %p85
    %p87 = scmp.ne.s32.totalorder %s73, %s74
    %p88 = scmp.eq.s32.totalorder %s20, 7
    %p89 = por %p87, %p88
    %p91 = scmp.ne.s32.totalorder %s74, %s90
    %p92 = scmp.eq.s32.totalorder %s20, 0
    %p93 = por %p91, %p92
    %s94 = sadd.s32 %s22, 1
    %s95 = smul.u32 %s94, 4
    %s96 = sadd.s32 %s95, 1
    %s97 = sadd.s32 %s29, 1
    %s98 = smul.u32 %s97, 4
    %s99 = sadd.s32 %s98, 1
    %s100 = ssub.s32 %s21, %s33
    %s101 = ssub.s32 %s96, %s99
    %s102 = sor.u32 %s100, %s101
    %p103 = scmp.eq.s32.totalorder %s102, 0
    %s105 = sadd.s32 %s104, 1
    %s106 = scalar_select %p103, %s104, %s105
    %p109 = pneg %p103
    %p110 = scmp.eq.s32.totalorder %s14, 7
    %p111 = por %p109, %p110
    %p112 = scmp.ne.s32.totalorder %s104, %s107
    %p113 = scmp.eq.s32.totalorder %s14, 0
    %p114 = por %p112, %p113
    %p115 = scmp.ne.s32.totalorder %s104, %s107
    %p116 = scmp.eq.s32.totalorder %s19, 7
    %p117 = por %p115, %p116
    %p118 = scmp.ne.s32.totalorder %s107, %s108
    %p119 = scmp.eq.s32.totalorder %s19, 0
    %p120 = por %p118, %p119
    %p121 = scmp.ne.s32.totalorder %s107, %s108
    %p122 = scmp.eq.s32.totalorder %s20, 7
    %p123 = por %p121, %p122
    %p125 = scmp.ne.s32.totalorder %s108, %s124
    %p126 = scmp.eq.s32.totalorder %s20, 0
    %p127 = por %p125, %p126
    %s129 = sadd.s32 %s128, 1
    %p132 = scmp.eq.s32.totalorder %s14, 7
    %p133 = scmp.ne.s32.totalorder %s128, %s130
    %p134 = scmp.eq.s32.totalorder %s14, 0
    %p135 = por %p133, %p134
    %p136 = scmp.ne.s32.totalorder %s128, %s130
    %p137 = scmp.eq.s32.totalorder %s19, 7
    %p138 = por %p136, %p137
    %p139 = scmp.ne.s32.totalorder %s130, %s131
    %p140 = scmp.eq.s32.totalorder %s19, 0
    %p141 = por %p139, %p140
    %p142 = scmp.ne.s32.totalorder %s130, %s131
    %p143 = scmp.eq.s32.totalorder %s20, 7
    %p144 = por %p142, %p143
    %p146 = scmp.ne.s32.totalorder %s131, %s145
    %p147 = scmp.eq.s32.totalorder %s20, 0
    %p148 = por %p146, %p147
    %s150 = sadd.s32 %s149, 1
    %p153 = scmp.eq.s32.totalorder %s14, 7
    %p154 = scmp.ne.s32.totalorder %s149, %s151
    %p155 = scmp.eq.s32.totalorder %s14, 0
    %p156 = por %p154, %p155
    %p157 = scmp.ne.s32.totalorder %s149, %s151
    %p158 = scmp.eq.s32.totalorder %s19, 7
    %p159 = por %p157, %p158
    %p160 = scmp.ne.s32.totalorder %s151, %s152
    %p161 = scmp.eq.s32.totalorder %s19, 0
    %p162 = por %p160, %p161
    %p163 = scmp.ne.s32.totalorder %s151, %s152
    %p164 = scmp.eq.s32.totalorder %s20, 7
    %p165 = por %p163, %p164
    %p167 = scmp.ne.s32.totalorder %s152, %s166
    %p168 = scmp.eq.s32.totalorder %s20, 0
    %p169 = por %p167, %p168
    %s171 = sadd.s32 %s170, 1
    %p174 = scmp.eq.s32.totalorder %s14, 7
    %p175 = scmp.ne.s32.totalorder %s170, %s172
    %p176 = scmp.eq.s32.totalorder %s14, 0
    %p177 = por %p175, %p176
    %p178 = scmp.ne.s32.totalorder %s170, %s172
    %p179 = scmp.eq.s32.totalorder %s19, 7
    %p180 = por %p178, %p179
    %p181 = scmp.ne.s32.totalorder %s172, %s173
    %p182 = scmp.eq.s32.totalorder %s19, 0
    %p183 = por %p181, %p182
    %p184 = scmp.ne.s32.totalorder %s172, %s173
    %p185 = scmp.eq.s32.totalorder %s20, 7
    %p186 = por %p184, %p185
    %p188 = scmp.ne.s32.totalorder %s173, %s187
    %p189 = scmp.eq.s32.totalorder %s20, 0
    %p190 = por %p188, %p189
    %s191 = ssub.s32 %s21, %s33
    %s192 = ssub.s32 %s22, %s29
    %s193 = sor.u32 %s191, %s192
    %p194 = scmp.eq.s32.totalorder %s193, 0
    %s196 = sadd.s32 %s195, 1
    %s197 = scalar_select %p194, %s195, %s196
    %p200 = pneg %p194
    %p201 = scmp.eq.s32.totalorder %s14, 7
    %p202 = por %p200, %p201
    %p203 = scmp.ne.s32.totalorder %s195, %s198
    %p204 = scmp.eq.s32.totalorder %s14, 0
    %p205 = por %p203, %p204
    %p206 = scmp.ne.s32.totalorder %s195, %s198
    %p207 = scmp.eq.s32.totalorder %s19, 7
    %p208 = por %p206, %p207
    %p209 = scmp.ne.s32.totalorder %s198, %s199
    %p210 = scmp.eq.s32.totalorder %s19, 0
    %p211 = por %p209, %p210
    %p212 = scmp.ne.s32.totalorder %s198, %s199
    %p213 = scmp.eq.s32.totalorder %s20, 7
    %p214 = por %p212, %p213
    %p216 = scmp.ne.s32.totalorder %s199, %s215
    %p217 = scmp.eq.s32.totalorder %s20, 0
    %p218 = por %p216, %p217
    %s219 = ssub.s32 %s21, %s33
    %s220 = ssub.s32 %s22, %s29
    %s221 = sor.u32 %s219, %s220
    %p222 = scmp.eq.s32.totalorder %s221, 0
    %s224 = sadd.s32 %s223, 1
    %s225 = scalar_select %p222, %s223, %s224
    %p228 = pneg %p222
    %p229 = scmp.eq.s32.totalorder %s14, 7
    %p230 = por %p228, %p229
    %p231 = scmp.ne.s32.totalorder %s223, %s226
    %p232 = scmp.eq.s32.totalorder %s14, 0
    %p233 = por %p231, %p232
    %p234 = scmp.ne.s32.totalorder %s223, %s226
    %p235 = scmp.eq.s32.totalorder %s19, 7
    %p236 = por %p234, %p235
    %p237 = scmp.ne.s32.totalorder %s226, %s227
    %p238 = scmp.eq.s32.totalorder %s19, 0
    %p239 = por %p237, %p238
    %p240 = scmp.ne.s32.totalorder %s226, %s227
    %p241 = scmp.eq.s32.totalorder %s20, 7
    %p242 = por %p240, %p241
    %p244 = scmp.ne.s32.totalorder %s227, %s243
    %p245 = scmp.eq.s32.totalorder %s20, 0
    %p246 = por %p244, %p245
    %p247 = scmp.le.s32.totalorder 1, %s14
    %p248 = scmp.lt.s32.totalorder %s14, 9
    %p249 = pnand %p247, %p248
    %p250 = pneg %p249
    // Predicated region
    $region9: #{vgg_block_forward.3} parent=5 // pred_check
      _
    $region10: #{vgg_block_forward.3} parent=5 // pred_check_branch
      %252 = sbr.rel (%p249) target = $region12
    $region11: #{vgg_block_forward.3} parent=5 // pred_region
      %s253 = ssub.s32 %s14, 1
      // Predicated region
      $region13: #{vgg_block_forward.3} parent=11 // pred_check
        %p254 = pneg %p141
      $region14: #{vgg_block_forward.3} parent=11 // pred_check_branch
        %256 = sbr.rel (%p254) target = $region16
      $region15: #{vgg_block_forward.3} parent=11 // pred_region
        _
      $region16: #{vgg_block_forward.3} parent=11 // pred_fallthru
        _
      // Predicated region
      $region17: #{vgg_block_forward.3} parent=11 // pred_check
        %p257 = pneg %p162
      $region18: #{vgg_block_forward.3} parent=11 // pred_check_branch
        %259 = sbr.rel (%p257) target = $region20
      $region19: #{vgg_block_forward.3} parent=11 // pred_region
        _
      $region20: #{vgg_block_forward.3} parent=11 // pred_fallthru
        _
      // Predicated region
      $region21: #{vgg_block_forward.3} parent=11 // pred_check
        %p260 = pneg %p183
      $region22: #{vgg_block_forward.3} parent=11 // pred_check_branch
        %262 = sbr.rel (%p260) target = $region24
      $region23: #{vgg_block_forward.3} parent=11 // pred_region
        _
      $region24: #{vgg_block_forward.3} parent=11 // pred_fallthru
        _
    $region12: #{vgg_block_forward.3} parent=5 // pred_fallthru
      _
    %p263 = scmp.lt.s32.totalorder %s14, 8
    // Predicated region
    $region25: #{vgg_block_forward.3} parent=5 // pred_check
      %p264 = pneg %p263
    $region26: #{vgg_block_forward.3} parent=5 // pred_check_branch
      %266 = sbr.rel (%p264) target = $region28
    $region27: #{vgg_block_forward.3} parent=5 // pred_region
      // Predicated region
      $region29: #{vgg_block_forward.3} parent=27 // pred_check
        %p267 = pneg %p48
      $region30: #{vgg_block_forward.3} parent=27 // pred_check_branch
        %269 = sbr.rel (%p267) target = $region32
      $region31: #{vgg_block_forward.3} parent=27 // pred_region
        %s270 = smul.u32 4, %s22
        %s271 = ssub.s32 18, %s270
        %p272 = scmp.lt.s32.totalorder %s271, 4
        %s273 = scalar_select %p272, %s271, 4
        %s274 = smul.u32 128, %s273
        %s275 = smul.u32 %s274, 3
        %p276 = scmp.lt.s32.totalorder %s21, 1
        %s277 = scalar_select %p276, %s21, 1
        %p278 = scmp.lt.s32.totalorder %s270, 17
        %s279 = scalar_select %p278, %s270, 17
        %s280 = smul.addr %s279, 3
        %s281 = smul.addr %s277, 54
        %s282 = sadd.s32 %s280, %s281
        %s283 = smul.addr %s282, 8
        %s284 = scalar_lea.vmem %s0, %s283
        %s285 = smul.u32 4, %s22
        %s286 = ssub.s32 18, %s285
        %p287 = scmp.lt.s32.totalorder %s286, 4
        %s288 = scalar_select %p287, %s286, 4
        %s289 = smul.u32 128, %s288
        %s290 = smul.u32 %s289, 3
      $region32: #{vgg_block_forward.3} parent=27 // pred_fallthru
        _
      // Predicated region
      $region33: #{vgg_block_forward.3} parent=27 // pred_check
        %p291 = pneg %p80
      $region34: #{vgg_block_forward.3} parent=27 // pred_check_branch
        %293 = sbr.rel (%p291) target = $region36
      $region35: #{vgg_block_forward.3} parent=27 // pred_region
        %s294 = sadd.s32 %s22, 1
        %s295 = smul.u32 %s294, 4
        %p296 = scmp.lt.s32.totalorder %s21, 1
        %s297 = scalar_select %p296, %s21, 1
        %p298 = scmp.lt.s32.totalorder %s295, 17
        %s299 = scalar_select %p298, %s295, 17
        %s300 = smul.addr %s299, 3
        %s301 = smul.addr %s297, 54
        %s302 = sadd.s32 %s300, %s301
        %s303 = smul.addr %s302, 8
        %s304 = scalar_lea.vmem %s1, %s303
        %s305 = sadd.s32 %s22, 1
        %s306 = smul.u32 %s305, 4
      $region36: #{vgg_block_forward.3} parent=27 // pred_fallthru
        _
      // Predicated region
      $region37: #{vgg_block_forward.3} parent=27 // pred_check
        %p307 = pneg %p114
      $region38: #{vgg_block_forward.3} parent=27 // pred_check_branch
        %309 = sbr.rel (%p307) target = $region40
      $region39: #{vgg_block_forward.3} parent=27 // pred_region
        %s310 = sadd.s32 %s22, 1
        %s311 = smul.u32 %s310, 4
        %s312 = sadd.s32 %s311, 1
        %p313 = scmp.lt.s32.totalorder %s21, 1
        %s314 = scalar_select %p313, %s21, 1
        %p315 = scmp.lt.s32.totalorder %s312, 17
        %s316 = scalar_select %p315, %s312, 17
        %s317 = smul.addr %s316, 3
        %s318 = smul.addr %s314, 54
        %s319 = sadd.s32 %s317, %s318
        %s320 = smul.addr %s319, 8
        %s321 = scalar_lea.vmem %s2, %s320
        %s322 = sadd.s32 %s22, 1
        %s323 = smul.u32 %s322, 4
        %s324 = sadd.s32 %s323, 1
      $region40: #{vgg_block_forward.3} parent=27 // pred_fallthru
        _
    $region28: #{vgg_block_forward.3} parent=5 // pred_fallthru
      _
    %p325 = scmp.le.s32.totalorder 1, %s14
    %p326 = scmp.lt.s32.totalorder %s14, 9
    %p327 = pnand %p325, %p326
    %p328 = pneg %p327
    // Predicated region
    $region41: #{vgg_block_forward.3} parent=5 // pred_check
      _
    $region42: #{vgg_block_forward.3} parent=5 // pred_check_branch
      %330 = sbr.rel (%p327) target = $region44
    $region43: #{vgg_block_forward.3} parent=5 // pred_region
      %s331 = ssub.s32 %s14, 1
      %s332 = smul.u32 4, %s24
      %s333 = ssub.s32 18, %s332
      %p334 = scmp.lt.s32.totalorder %s333, 4
      %s335 = scalar_select %p334, %s333, 4
      %s336 = smul.u32 128, %s335
      %s337 = smul.u32 %s336, 3
      %p338 = scmp.lt.s32.totalorder %s23, 1
      %s339 = scalar_select %p338, %s23, 1
      %p340 = scmp.lt.s32.totalorder %s332, 17
      %s341 = scalar_select %p340, %s332, 17
      %s342 = smul.addr %s341, 3
      %s343 = smul.addr %s339, 54
      %s344 = sadd.s32 %s342, %s343
      %s345 = smul.addr %s344, 8
      %s346 = scalar_lea.vmem %s0, %s345
      %p347 = pneg %p54
      %p348 = pneg %p51
      %s349 = sadd.s32 %s24, 1
      %s350 = smul.u32 %s349, 4
      %p351 = scmp.lt.s32.totalorder %s23, 1
      %s352 = scalar_select %p351, %s23, 1
      %p353 = scmp.lt.s32.totalorder %s350, 17
      %s354 = scalar_select %p353, %s350, 17
      %s355 = smul.addr %s354, 3
      %s356 = smul.addr %s352, 54
      %s357 = sadd.s32 %s355, %s356
      %s358 = smul.addr %s357, 8
      %s359 = scalar_lea.vmem %s1, %s358
      %p360 = pneg %p86
      %p361 = pneg %p83
      %s362 = sadd.s32 %s24, 1
      %s363 = smul.u32 %s362, 4
      %s364 = sadd.s32 %s363, 1
      %p365 = scmp.lt.s32.totalorder %s23, 1
      %s366 = scalar_select %p365, %s23, 1
      %p367 = scmp.lt.s32.totalorder %s364, 17
      %s368 = scalar_select %p367, %s364, 17
      %s369 = smul.addr %s368, 3
      %s370 = smul.addr %s366, 54
      %s371 = sadd.s32 %s369, %s370
      %s372 = smul.addr %s371, 8
      %s373 = scalar_lea.vmem %s2, %s372
      %p374 = pneg %p120
      %p375 = pneg %p117
      %p376 = pneg %p141
      %p377 = pneg %p138
      %p378 = pneg %p162
      %p379 = pneg %p159
      %p380 = pneg %p183
      %p381 = pneg %p180
      %p382 = pneg %p211
      %p383 = pneg %p208
      %s384 = smul.u32 4, %s24
      %p385 = scmp.lt.s32.totalorder %s23, 1
      %s386 = scalar_select %p385, %s23, 1
      %p387 = scmp.lt.s32.totalorder %s384, 15
      %s388 = scalar_select %p387, %s384, 15
      %s389 = smul.addr %s388, 3
      %s390 = smul.addr %s386, 48
      %s391 = sadd.s32 %s389, %s390
      %s392 = smul.addr %s391, 4
      %s393 = scalar_lea.vmem %s6, %s392
      %p394 = pneg %p239
      %p395 = pneg %p236
      %p396 = scmp.lt.s32.totalorder %s23, 1
      %s397 = scalar_select %p396, %s23, 1
      %p398 = scmp.lt.s32.totalorder %s24, 3
      %s399 = scalar_select %p398, %s24, 3
      %s400 = smul.addr %s397, 4
      %s401 = sadd.s32 %s399, %s400
      %s402 = smul.addr %s401, 2
      %s403 = scalar_lea.vmem %s7, %s402
      %s404 = smul.u32 4, %s24
      %s405 = ssub.s32 18, %s404
      %p406 = scmp.lt.s32.totalorder %s405, 4
      %s407 = scalar_select %p406, %s405, 4
      %s408 = smul.u32 128, %s407
      %s409 = smul.u32 %s408, 3
      %p410 = scmp.lt.s32.totalorder %s23, 1
      %s411 = scalar_select %p410, %s23, 1
      %p412 = scmp.lt.s32.totalorder %s404, 17
      %s413 = scalar_select %p412, %s404, 17
      %s414 = smul.addr %s413, 3
      %s415 = smul.addr %s411, 54
      %s416 = sadd.s32 %s414, %s415
      %s417 = smul.addr %s416, 8
      %s418 = scalar_lea.vmem %s0, %s417
      %s419 = smul.u32 4, %s24
      %s420 = ssub.s32 18, %s419
      %p421 = scmp.lt.s32.totalorder %s420, 4
      %s422 = scalar_select %p421, %s420, 4
      %s423 = smul.u32 128, %s422
      %s424 = smul.u32 %s423, 3
      %s425 = sadd.s32 %s24, 1
      %s426 = smul.u32 %s425, 4
      %p427 = scmp.lt.s32.totalorder %s23, 1
      %s428 = scalar_select %p427, %s23, 1
      %p429 = scmp.lt.s32.totalorder %s426, 17
      %s430 = scalar_select %p429, %s426, 17
      %s431 = smul.addr %s430, 3
      %s432 = smul.addr %s428, 54
      %s433 = sadd.s32 %s431, %s432
      %s434 = smul.addr %s433, 8
      %s435 = scalar_lea.vmem %s1, %s434
      %s436 = sadd.s32 %s24, 1
      %s437 = smul.u32 %s436, 4
      %s438 = sadd.s32 %s24, 1
      %s439 = smul.u32 %s438, 4
      %s440 = sadd.s32 %s439, 1
      %p441 = scmp.lt.s32.totalorder %s23, 1
      %s442 = scalar_select %p441, %s23, 1
      %p443 = scmp.lt.s32.totalorder %s440, 17
      %s444 = scalar_select %p443, %s440, 17
      %s445 = smul.addr %s444, 3
      %s446 = smul.addr %s442, 54
      %s447 = sadd.s32 %s445, %s446
      %s448 = smul.addr %s447, 8
      %s449 = scalar_lea.vmem %s2, %s448
      %s450 = sadd.s32 %s24, 1
      %s451 = smul.u32 %s450, 4
      %s452 = sadd.s32 %s451, 1
      %s453 = smul.u32 4, %s24
      %p454 = scmp.lt.s32.totalorder %s23, 1
      %s455 = scalar_select %p454, %s23, 1
      %p456 = scmp.lt.s32.totalorder %s453, 15
      %s457 = scalar_select %p456, %s453, 15
      %s458 = smul.addr %s457, 3
      %s459 = smul.addr %s455, 48
      %s460 = sadd.s32 %s458, %s459
      %s461 = smul.addr %s460, 4
      %s462 = scalar_lea.vmem %s6, %s461
      %s463 = smul.u32 4, %s24
      %p464 = scmp.lt.s32.totalorder %s23, 1
      %s465 = scalar_select %p464, %s23, 1
      %p466 = scmp.lt.s32.totalorder %s24, 3
      %s467 = scalar_select %p466, %s24, 3
      %s468 = smul.addr %s465, 4
      %s469 = sadd.s32 %s467, %s468
      %s470 = smul.addr %s469, 2
      %s471 = scalar_lea.vmem %s7, %s470
      %v473 = vld [vmem:[%s418] sm:$0xff]
      %v474 = vld [vmem:[%s418 + $0x8] sm:$0xff]
      %v475 = vld [vmem:[%s418 + $0x10] sm:$0xff]
      %v476 = vld [vmem:[%s418 + $0x18] sm:$0xff]
      %v477 = vld [vmem:[%s418 + $0x20] sm:$0xff]
      %v478 = vld [vmem:[%s418 + $0x28] sm:$0xff]
      %v479 = vld [vmem:[%s418 + $0x30] sm:$0xff]
      %v480 = vld [vmem:[%s418 + $0x38] sm:$0xff]
      %v481 = vld [vmem:[%s418 + $0x40] sm:$0xff]
      %v482 = vld [vmem:[%s418 + $0x48] sm:$0xff]
      %v483 = vld [vmem:[%s418 + $0x50] sm:$0xff]
      %v484 = vld [vmem:[%s418 + $0x58] sm:$0xff]
      %v485 = vld [vmem:[%s435] sm:$0xff]
      %v486 = vld [vmem:[%s435 + $0x8] sm:$0xff]
      %v487 = vld [vmem:[%s435 + $0x10] sm:$0xff]
      %v488 = vld [vmem:[%s449] sm:$0xff]
      %v489 = vld [vmem:[%s449 + $0x8] sm:$0xff]
      %v490 = vld [vmem:[%s449 + $0x10] sm:$0xff]
      %v491 = vpack.c.bf16 %v473, 0.0
      %v492 = vpack.c.bf16 %v475, %v474
      %v493 = vpack.c.bf16 %v477, %v476
      %v494 = vpack.c.bf16 %v479, %v478
      %v495 = vpack.c.bf16 %v481, %v480
      %v496 = vpack.c.bf16 %v483, %v482
      %v497 = vpack.c.bf16 %v484, %v484
      %v498 = vpack.c.bf16 %v474, %v473
      %v499 = vpack.c.bf16 %v476, %v475
      %v500 = vpack.c.bf16 %v478, %v477
      %v501 = vpack.c.bf16 %v480, %v479
      %v502 = vpack.c.bf16 %v482, %v481
      %v503 = vpack.c.bf16 %v484, %v483
      %v504 = vpack.c.bf16 %v485, %v485
      %v505 = vpack.c.bf16 %v486, %v485
      %v506 = vpack.c.bf16 %v487, %v487
      %v507 = vpack.c.bf16 %v485, %v484
      %v508 = vpack.c.bf16 %v487, %v486
      %v509 = vpack.c.bf16 %v488, %v488
      %v510 = vpack.c.bf16 %v489, %v488
      %v511 = vpack.c.bf16 %v490, %v490
      %v512 = vpack.c.bf16 %v488, %v487
      %v513 = vpack.c.bf16 %v490, %v489
      %v514 = vpack.c.bf16 0.0, 0.0
      %vm515 = vsmask.f32 3328
      %v517 = vshrl.u32 %v498, 16
      %v519 = vrot.slane %v517, 4
      %v520 = vshll.u32 %v498, 16
      %v522 = vrot.slane %v520, 5
      %v523 = vor.u32 %v519, %v522
      %v525 = vshrl.u32 %v499, 16
      %v527 = vrot.slane %v525, 4
      %v528 = vshll.u32 %v499, 16
      %v530 = vrot.slane %v528, 5
      %v531 = vor.u32 %v527, %v530
      %v532 = vsel %vm515, %v523, %v531
      %v534 = vshrl.u32 %v500, 16
      %v536 = vrot.slane %v534, 4
      %v537 = vshll.u32 %v500, 16
      %v539 = vrot.slane %v537, 5
      %v540 = vor.u32 %v536, %v539
      %v541 = vsel %vm515, %v531, %v540
      %v543 = vshrl.u32 %v501, 16
      %v545 = vrot.slane %v543, 4
      %v546 = vshll.u32 %v501, 16
      %v548 = vrot.slane %v546, 5
      %v549 = vor.u32 %v545, %v548
      %v550 = vsel %vm515, %v540, %v549
      %v552 = vshrl.u32 %v502, 16
      %v554 = vrot.slane %v552, 4
      %v555 = vshll.u32 %v502, 16
      %v557 = vrot.slane %v555, 5
      %v558 = vor.u32 %v554, %v557
      %v559 = vsel %vm515, %v549, %v558
      %v561 = vshrl.u32 %v503, 16
      %v563 = vrot.slane %v561, 4
      %v564 = vshll.u32 %v503, 16
      %v566 = vrot.slane %v564, 5
      %v567 = vor.u32 %v563, %v566
      %v568 = vsel %vm515, %v558, %v567
      %569 = vrot.lane.b32.xlu0 %v523, 4
      %v570 = vpop.permute.xlu0 %569
      %571 = vrot.lane.b32.xlu0 %v532, 4
      %v572 = vpop.permute.xlu0 %571
      %573 = vrot.lane.b32.xlu0 %v541, 4
      %v574 = vpop.permute.xlu0 %573
      %575 = vrot.lane.b32.xlu0 %v550, 4
      %v576 = vpop.permute.xlu0 %575
      %577 = vrot.lane.b32.xlu0 %v559, 4
      %v578 = vpop.permute.xlu0 %577
      %579 = vrot.lane.b32.xlu0 %v568, 4
      %v580 = vpop.permute.xlu0 %579
      %581 = vrot.lane.b32.xlu0 %v567, 4
      %v582 = vpop.permute.xlu0 %581
      %vm590 = vcmask 1042432
      %v591 = vrot.slane %v498, 5
      %v592 = vrot.slane %v499, 5
      %v593 = vsel %vm590, %v591, %v592
      %v594 = vrot.slane %v500, 5
      %v595 = vsel %vm590, %v592, %v594
      %v596 = vrot.slane %v501, 5
      %v597 = vsel %vm590, %v594, %v596
      %v598 = vrot.slane %v502, 5
      %v599 = vsel %vm590, %v596, %v598
      %v600 = vrot.slane %v503, 5
      %v601 = vsel %vm590, %v598, %v600
      %v602 = vrot.slane %v504, 5
      %v603 = vsel %vm590, %v600, %v602
      %604 = vrot.lane.b32.xlu0 %v591, 8
      %v605 = vpop.permute.xlu0 %604
      %606 = vrot.lane.b32.xlu0 %v593, 8
      %v607 = vpop.permute.xlu0 %606
      %608 = vrot.lane.b32.xlu0 %v595, 8
      %v609 = vpop.permute.xlu0 %608
      %610 = vrot.lane.b32.xlu0 %v597, 8
      %v611 = vpop.permute.xlu0 %610
      %612 = vrot.lane.b32.xlu0 %v599, 8
      %v613 = vpop.permute.xlu0 %612
      %614 = vrot.lane.b32.xlu0 %v601, 8
      %v615 = vpop.permute.xlu0 %614
      %616 = vrot.lane.b32.xlu0 %v603, 8
      %v617 = vpop.permute.xlu0 %616
      %620 = vrot.lane.b32.xlu0 %v499, 12
      %v621 = vpop.permute.xlu0 %620
      %622 = vrot.lane.b32.xlu0 %v500, 12
      %v623 = vpop.permute.xlu0 %622
      %624 = vrot.lane.b32.xlu0 %v501, 12
      %v625 = vpop.permute.xlu0 %624
      %626 = vrot.lane.b32.xlu0 %v502, 12
      %v627 = vpop.permute.xlu0 %626
      %628 = vrot.lane.b32.xlu0 %v503, 12
      %v629 = vpop.permute.xlu0 %628
      %630 = vrot.lane.b32.xlu0 %v505, 12
      %v631 = vpop.permute.xlu0 %630
      %632 = vrot.lane.b32.xlu0 %v506, 12
      %v633 = vpop.permute.xlu0 %632
      %v635 = vshrl.u32 %v493, 16
      %v637 = vrot.slane %v635, 4
      %v638 = vshll.u32 %v493, 16
      %v640 = vrot.slane %v638, 5
      %v641 = vor.u32 %v637, %v640
      %v643 = vshrl.u32 %v494, 16
      %v645 = vrot.slane %v643, 4
      %v646 = vshll.u32 %v494, 16
      %v648 = vrot.slane %v646, 5
      %v649 = vor.u32 %v645, %v648
      %v650 = vsel %vm515, %v641, %v649
      %v652 = vshrl.u32 %v495, 16
      %v654 = vrot.slane %v652, 4
      %v655 = vshll.u32 %v495, 16
      %v657 = vrot.slane %v655, 5
      %v658 = vor.u32 %v654, %v657
      %v659 = vsel %vm515, %v649, %v658
      %v661 = vshrl.u32 %v496, 16
      %v663 = vrot.slane %v661, 4
      %v664 = vshll.u32 %v496, 16
      %v666 = vrot.slane %v664, 5
      %v667 = vor.u32 %v663, %v666
      %v668 = vsel %vm515, %v658, %v667
      %v670 = vshrl.u32 %v507, 16
      %v672 = vrot.slane %v670, 4
      %v673 = vshll.u32 %v507, 16
      %v675 = vrot.slane %v673, 5
      %v676 = vor.u32 %v672, %v675
      %v677 = vsel %vm515, %v667, %v676
      %v679 = vshrl.u32 %v508, 16
      %v681 = vrot.slane %v679, 4
      %v682 = vshll.u32 %v508, 16
      %v684 = vrot.slane %v682, 5
      %v685 = vor.u32 %v681, %v684
      %v686 = vsel %vm515, %v676, %v685
      %687 = vrot.lane.b32.xlu0 %v641, 16
      %v688 = vpop.permute.xlu0 %687
      %689 = vrot.lane.b32.xlu0 %v650, 16
      %v690 = vpop.permute.xlu0 %689
      %691 = vrot.lane.b32.xlu0 %v659, 16
      %v692 = vpop.permute.xlu0 %691
      %693 = vrot.lane.b32.xlu0 %v668, 16
      %v694 = vpop.permute.xlu0 %693
      %695 = vrot.lane.b32.xlu0 %v677, 16
      %v696 = vpop.permute.xlu0 %695
      %697 = vrot.lane.b32.xlu0 %v686, 16
      %v698 = vpop.permute.xlu0 %697
      %699 = vrot.lane.b32.xlu0 %v685, 16
      %v700 = vpop.permute.xlu0 %699
      %v708 = vrot.slane %v493, 5
      %v709 = vrot.slane %v494, 5
      %v710 = vsel %vm590, %v708, %v709
      %v711 = vrot.slane %v495, 5
      %v712 = vsel %vm590, %v709, %v711
      %v713 = vrot.slane %v496, 5
      %v714 = vsel %vm590, %v711, %v713
      %v715 = vrot.slane %v507, 5
      %v716 = vsel %vm590, %v713, %v715
      %v717 = vrot.slane %v508, 5
      %v718 = vsel %vm590, %v715, %v717
      %v719 = vrot.slane %v509, 5
      %v720 = vsel %vm590, %v717, %v719
      %721 = vrot.lane.b32.xlu0 %v708, 20
      %v722 = vpop.permute.xlu0 %721
      %723 = vrot.lane.b32.xlu0 %v710, 20
      %v724 = vpop.permute.xlu0 %723
      %725 = vrot.lane.b32.xlu0 %v712, 20
      %v726 = vpop.permute.xlu0 %725
      %727 = vrot.lane.b32.xlu0 %v714, 20
      %v728 = vpop.permute.xlu0 %727
      %729 = vrot.lane.b32.xlu0 %v716, 20
      %v730 = vpop.permute.xlu0 %729
      %731 = vrot.lane.b32.xlu0 %v718, 20
      %v732 = vpop.permute.xlu0 %731
      %733 = vrot.lane.b32.xlu0 %v720, 20
      %v734 = vpop.permute.xlu0 %733
      %737 = vrot.lane.b32.xlu0 %v494, 24
      %v738 = vpop.permute.xlu0 %737
      %739 = vrot.lane.b32.xlu0 %v495, 24
      %v740 = vpop.permute.xlu0 %739
      %741 = vrot.lane.b32.xlu0 %v496, 24
      %v742 = vpop.permute.xlu0 %741
      %743 = vrot.lane.b32.xlu0 %v507, 24
      %v744 = vpop.permute.xlu0 %743
      %745 = vrot.lane.b32.xlu0 %v508, 24
      %v746 = vpop.permute.xlu0 %745
      %747 = vrot.lane.b32.xlu0 %v510, 24
      %v748 = vpop.permute.xlu0 %747
      %749 = vrot.lane.b32.xlu0 %v511, 24
      %v750 = vpop.permute.xlu0 %749
      %v752 = vshrl.u32 %v505, 16
      %v754 = vrot.slane %v752, 4
      %v755 = vshll.u32 %v505, 16
      %v757 = vrot.slane %v755, 5
      %v758 = vor.u32 %v754, %v757
      %v759 = vsel %vm515, %v567, %v758
      %v761 = vshrl.u32 %v512, 16
      %v763 = vrot.slane %v761, 4
      %v764 = vshll.u32 %v512, 16
      %v766 = vrot.slane %v764, 5
      %v767 = vor.u32 %v763, %v766
      %v768 = vsel %vm515, %v758, %v767
      %v770 = vshrl.u32 %v513, 16
      %v772 = vrot.slane %v770, 4
      %v773 = vshll.u32 %v513, 16
      %v775 = vrot.slane %v773, 5
      %v776 = vor.u32 %v772, %v775
      %v777 = vsel %vm515, %v767, %v776
      %778 = vrot.lane.b32.xlu0 %v549, 28
      %v779 = vpop.permute.xlu0 %778
      %780 = vrot.lane.b32.xlu0 %v559, 28
      %v781 = vpop.permute.xlu0 %780
      %782 = vrot.lane.b32.xlu0 %v568, 28
      %v783 = vpop.permute.xlu0 %782
      %784 = vrot.lane.b32.xlu0 %v759, 28
      %v785 = vpop.permute.xlu0 %784
      %786 = vrot.lane.b32.xlu0 %v768, 28
      %v787 = vpop.permute.xlu0 %786
      %788 = vrot.lane.b32.xlu0 %v777, 28
      %v789 = vpop.permute.xlu0 %788
      %790 = vrot.lane.b32.xlu0 %v776, 28
      %v791 = vpop.permute.xlu0 %790
      %v795 = vrot.slane %v505, 5
      %v796 = vsel %vm590, %v600, %v795
      %v797 = vrot.slane %v512, 5
      %v798 = vsel %vm590, %v795, %v797
      %v799 = vrot.slane %v513, 5
      %v800 = vsel %vm590, %v797, %v799
      %v801 = vrot.slane %v514, 5
      %v802 = vsel %vm590, %v799, %v801
      %803 = vrot.lane.b32.xlu0 %v596, 32
      %v804 = vpop.permute.xlu0 %803
      %805 = vrot.lane.b32.xlu0 %v599, 32
      %v806 = vpop.permute.xlu0 %805
      %807 = vrot.lane.b32.xlu0 %v601, 32
      %v808 = vpop.permute.xlu0 %807
      %809 = vrot.lane.b32.xlu0 %v796, 32
      %v810 = vpop.permute.xlu0 %809
      %811 = vrot.lane.b32.xlu0 %v798, 32
      %v812 = vpop.permute.xlu0 %811
      %813 = vrot.lane.b32.xlu0 %v800, 32
      %v814 = vpop.permute.xlu0 %813
      %815 = vrot.lane.b32.xlu0 %v802, 32
      %v816 = vpop.permute.xlu0 %815
      %vm817 = vcmask 31744
      %v820 = vsel %vm817, %v491, %v570
      %v823 = vsel %vm817, %v492, %v572
      %v825 = vsel %vm817, %v493, %v574
      %v827 = vsel %vm817, %v494, %v576
      %v829 = vsel %vm817, %v495, %v578
      %v831 = vsel %vm817, %v496, %v580
      %v834 = vsel %vm817, %v497, %v582
      %vm835 = vcmask 64512
      %v837 = vsel %vm835, %v820, %v605
      %v839 = vsel %vm835, %v823, %v607
      %v841 = vsel %vm835, %v825, %v609
      %v843 = vsel %vm835, %v827, %v611
      %v845 = vsel %vm835, %v829, %v613
      %v847 = vsel %vm835, %v831, %v615
      %v849 = vsel %vm835, %v834, %v617
      %vm850 = vcmask 97280
      %v852 = vsel %vm850, %v837, %v621
      %v854 = vsel %vm850, %v839, %v623
      %v856 = vsel %vm850, %v841, %v625
      %v858 = vsel %vm850, %v843, %v627
      %v860 = vsel %vm850, %v845, %v629
      %v862 = vsel %vm850, %v847, %v631
      %v864 = vsel %vm850, %v849, %v633
      %vm865 = vcmask 130048
      %v867 = vsel %vm865, %v852, %v688
      %v869 = vsel %vm865, %v854, %v690
      %v871 = vsel %vm865, %v856, %v692
      %v873 = vsel %vm865, %v858, %v694
      %v875 = vsel %vm865, %v860, %v696
      %v877 = vsel %vm865, %v862, %v698
      %v879 = vsel %vm865, %v864, %v700
      %vm880 = vcmask 162816
      %v882 = vsel %vm880, %v867, %v722
      %v884 = vsel %vm880, %v869, %v724
      %v886 = vsel %vm880, %v871, %v726
      %v888 = vsel %vm880, %v873, %v728
      %v890 = vsel %vm880, %v875, %v730
      %v892 = vsel %vm880, %v877, %v732
      %v894 = vsel %vm880, %v879, %v734
      %vm895 = vcmask 195584
      %v897 = vsel %vm895, %v882, %v738
      %v899 = vsel %vm895, %v884, %v740
      %v901 = vsel %vm895, %v886, %v742
      %v903 = vsel %vm895, %v888, %v744
      %v905 = vsel %vm895, %v890, %v746
      %v907 = vsel %vm895, %v892, %v748
      %v909 = vsel %vm895, %v894, %v750
      %vm910 = vcmask 228352
      %v912 = vsel %vm910, %v897, %v779
      %v914 = vsel %vm910, %v899, %v781
      %v916 = vsel %vm910, %v901, %v783
      %v918 = vsel %vm910, %v903, %v785
      %v920 = vsel %vm910, %v905, %v787
      %v922 = vsel %vm910, %v907, %v789
      %v924 = vsel %vm910, %v909, %v791
      %vm925 = vcmask 261120
      %v927 = vsel %vm925, %v912, %v804
      %v929 = vsel %vm925, %v914, %v806
      %v931 = vsel %vm925, %v916, %v808
      %v933 = vsel %vm925, %v918, %v810
      %v935 = vsel %vm925, %v920, %v812
      %v937 = vsel %vm925, %v922, %v814
      %v939 = vsel %vm925, %v924, %v816
      %v940 = vld [vmem:[%s3] sm:$0xf]
      %v941 = vld [vmem:[%s3 + $0x4] sm:$0xf]
      %v942 = vld [vmem:[%s3 + $0x8] sm:$0xf]
      %v943 = vld [vmem:[%s3 + $0xc] sm:$0xf]
      %v944 = vld [vmem:[%s3 + $0x10] sm:$0x3]
      %vm945 = vsmask.f32 4352
      %v946 = vshrl.u32 %v927, 16
      %v948 = vrot.slane %v946, 3
      %v949 = vshll.u32 %v927, 16
      %v951 = vrot.slane %v949, 4
      %v952 = vor.u32 %v948, %v951
      %v953 = vshrl.u32 %v929, 16
      %v955 = vrot.slane %v953, 3
      %v956 = vshll.u32 %v929, 16
      %v958 = vrot.slane %v956, 4
      %v959 = vor.u32 %v955, %v958
      %v960 = vsel %vm945, %v952, %v959
      %v961 = vshrl.u32 %v931, 16
      %v963 = vrot.slane %v961, 3
      %v964 = vshll.u32 %v931, 16
      %v966 = vrot.slane %v964, 4
      %v967 = vor.u32 %v963, %v966
      %v968 = vsel %vm945, %v959, %v967
      %v969 = vshrl.u32 %v933, 16
      %v971 = vrot.slane %v969, 3
      %v972 = vshll.u32 %v933, 16
      %v974 = vrot.slane %v972, 4
      %v975 = vor.u32 %v971, %v974
      %v976 = vsel %vm945, %v967, %v975
      %v977 = vshrl.u32 %v935, 16
      %v979 = vrot.slane %v977, 3
      %v980 = vshll.u32 %v935, 16
      %v982 = vrot.slane %v980, 4
      %v983 = vor.u32 %v979, %v982
      %v984 = vsel %vm945, %v975, %v983
      %v985 = vshrl.u32 %v937, 16
      %v987 = vrot.slane %v985, 3
      %v988 = vshll.u32 %v937, 16
      %v990 = vrot.slane %v988, 4
      %v991 = vor.u32 %v987, %v990
      %v992 = vsel %vm945, %v983, %v991
      %v993 = vshrl.u32 %v939, 16
      %v995 = vrot.slane %v993, 3
      %v996 = vshll.u32 %v939, 16
      %v998 = vrot.slane %v996, 4
      %v999 = vor.u32 %v995, %v998
      %v1000 = vsel %vm945, %v991, %v999
      %v1006 = vunpack.c.l.b16 %v940
      %v1007 = vunpack.c.l.b16 %v941
      %v1008 = vunpack.c.l.b16 %v942
      %v1009 = vunpack.c.l.b16 %v943
      %v1010 = vunpack.c.l.b16 %v944
      %v1011 = vpack.c.b16 %v1007, %v1006
      %v1012 = vpack.c.b16 %v1009, %v1008
      %v1013 = vpack.c.b16 %v1010, %v1010
      %vm1016 = vcmask 293888
      %v1018 = vsel %vm1016, %v960, 0
      %v1021 = vsel %vm1016, %v968, 0
      %v1024 = vsel %vm1016, %v976, 0
      %v1027 = vsel %vm1016, %v984, 0
      %v1030 = vsel %vm1016, %v992, 0
      %v1033 = vsel %vm1016, %v1000, 0
      %vm1035 = vcmask 1041408
      %v1037 = vsel %vm1035, %v1013, 0
      %1039 = vmatprep.subr.bf16.mxu0 0
      %1040 = vmatpush1.bf16.msra.mxu0 %v1011
      %1041 = vmatprep.subr.bf16.mxu0 0
      %1042 = vmatpush1.bf16.msra.mxu0 %v1012
      %1043 = vmatprep.subr.bf16.mxu0 0
      %1044 = vmatpush1.bf16.msra.mxu0 %v1037
      %1045 = vmatprep.subr.bf16.mxu0 0
      %1046 = vmatpush1.bf16.msra.mxu0 0
      %1047 = vmatprep.subr.bf16.mxu0 0
      %1048 = vmatpush1.bf16.msra.mxu0 0
      %1049 = vmatprep.subr.bf16.mxu0 0
      %1050 = vmatpush1.bf16.msra.mxu0 0
      %1051 = vmatprep.subr.bf16.mxu0 0
      %1052 = vmatpush1.bf16.msra.mxu0 0
      %1053 = vmatprep.subr.bf16.mxu0 0
      %1054 = vmatpush1.bf16.msra.mxu0 0
      %1055 = vmatprep.subr.bf16.mxu0 0
      %1056 = vmatpush1.bf16.msra.mxu0 0
      %1057 = vmatprep.subr.bf16.mxu0 0
      %1058 = vmatpush1.bf16.msra.mxu0 0
      %1059 = vmatprep.subr.bf16.mxu0 0
      %1060 = vmatpush1.bf16.msra.mxu0 0
      %1061 = vmatprep.subr.bf16.mxu0 0
      %1062 = vmatpush1.bf16.msra.mxu0 0
      %1063 = vmatprep.subr.bf16.mxu0 0
      %1064 = vmatpush1.bf16.msra.mxu0 0
      %1065 = vmatprep.subr.bf16.mxu0 0
      %1066 = vmatpush1.bf16.msra.mxu0 0
      %1067 = vmatprep.subr.bf16.mxu0 0
      %1068 = vmatpush1.bf16.msra.mxu0 0
      %1069 = vmatprep.subr.bf16.mxu0 0
      %1070 = vmatpush1.bf16.msra.mxu0 0
      %1071 = vmatprep.mubr.bf16.mxu0 0
      %1072 = vmatmul.mubr.bf16.gmra.mrb[0].mxu0 %v1018
      %v1073 = vpop.f32.mrb[0].mxu0
      %v1074 = vadd.f32 0.0, %v1073
      %v1075 = vpop.f32.mrb[0].mxu0
      %v1076 = vpop.f32.mrb[0].mxu0
      %v1077 = vadd.f32 0.0, %v1076
      %v1078 = vpop.f32.mrb[0].mxu0
      %1079 = vmatprep.mubr.bf16.mxu0 0
      %1080 = vmatmul.mubr.bf16.gmra.mrb[0].mxu0 %v1021
      %v1081 = vpop.f32.mrb[0].mxu0
      %v1082 = vadd.f32 0.0, %v1081
      %v1083 = vpop.f32.mrb[0].mxu0
      %v1084 = vpop.f32.mrb[0].mxu0
      %v1085 = vadd.f32 0.0, %v1084
      %v1086 = vpop.f32.mrb[0].mxu0
      %1087 = vmatprep.mubr.bf16.mxu0 0
      %1088 = vmatmul.mubr.bf16.gmra.mrb[0].mxu0 %v1024
      %v1089 = vpop.f32.mrb[0].mxu0
      %v1090 = vadd.f32 0.0, %v1089
      %v1091 = vpop.f32.mrb[0].mxu0
      %v1092 = vpop.f32.mrb[0].mxu0
      %v1093 = vadd.f32 0.0, %v1092
      %v1094 = vpop.f32.mrb[0].mxu0
      %1095 = vmatprep.mubr.bf16.mxu0 0
      %1096 = vmatmul.mubr.bf16.gmra.mrb[0].mxu0 %v1027
      %v1097 = vpop.f32.mrb[0].mxu0
      %v1098 = vadd.f32 0.0, %v1097
      %v1099 = vpop.f32.mrb[0].mxu0
      %v1100 = vpop.f32.mrb[0].mxu0
      %v1101 = vadd.f32 0.0, %v1100
      %v1102 = vpop.f32.mrb[0].mxu0
      %1103 = vmatprep.mubr.bf16.mxu0 0
      %1104 = vmatmul.mubr.bf16.gmra.mrb[0].mxu0 %v1030
      %v1105 = vpop.f32.mrb[0].mxu0
      %v1106 = vadd.f32 0.0, %v1105
      %v1107 = vpop.f32.mrb[0].mxu0
      %v1108 = vpop.f32.mrb[0].mxu0
      %v1109 = vadd.f32 0.0, %v1108
      %v1110 = vpop.f32.mrb[0].mxu0
      %1111 = vmatprep.mubr.bf16.mxu0 0
      %1112 = vmatmul.mubr.bf16.gmra.mrb[0].mxu0 %v1033
      %v1113 = vpop.f32.mrb[0].mxu0
      %v1114 = vadd.f32 0.0, %v1113
      %v1115 = vpop.f32.mrb[0].mxu0
      %v1116 = vpop.f32.mrb[0].mxu0
      %v1117 = vadd.f32 0.0, %v1116
      %v1118 = vpop.f32.mrb[0].mxu0
      %1119 = vdwg.mxu0
      %v1120 = vpack.c.bf16 %v1077, %v1074
      %v1121 = vpack.c.bf16 %v1082, %v1082
      %v1122 = vpack.c.bf16 %v1090, %v1085
      %v1123 = vpack.c.bf16 %v1093, %v1093
      %v1124 = vpack.c.bf16 %v1101, %v1098
      %v1125 = vpack.c.bf16 %v1106, %v1106
      %v1126 = vpack.c.bf16 %v1114, %v1109
      %v1127 = vpack.c.bf16 %v1117, %v1117
      %v1136 = vunpack.c.l.b16 %v1120
      %v1137 = vunpack.c.h.b16 %v1120
      %v1138 = vunpack.c.l.b16 %v1121
      %v1139 = vunpack.c.l.b16 %v1122
      %v1140 = vunpack.c.h.b16 %v1122
      %v1141 = vunpack.c.l.b16 %v1123
      %v1142 = vunpack.c.l.b16 %v1124
      %v1143 = vunpack.c.h.b16 %v1124
      %v1144 = vunpack.c.l.b16 %v1125
      %v1145 = vunpack.c.l.b16 %v1126
      %v1146 = vunpack.c.h.b16 %v1126
      %v1147 = vunpack.c.l.b16 %v1127
      %v1148 = vpack.c.b16 %v1136, %v1136
      %v1149 = vpack.c.b16 %v1137, %v1137
      %v1150 = vpack.c.b16 %v1138, %v1138
      %v1151 = vpack.c.b16 %v1139, %v1139
      %v1152 = vpack.c.b16 %v1140, %v1140
      %v1153 = vpack.c.b16 %v1141, %v1141
      %v1154 = vpack.c.b16 %v1142, %v1142
      %v1155 = vpack.c.b16 %v1143, %v1143
      %v1156 = vpack.c.b16 %v1144, %v1144
      %v1157 = vpack.c.b16 %v1145, %v1145
      %v1158 = vpack.c.b16 %v1146, %v1146
      %v1159 = vpack.c.b16 %v1147, %v1147
      %vm1172 = vcmask 60416
      %1173 = vst.msk [vmem:[%s462] sm:$0xf] %vm1172, %v1148
      %1174 = vst.msk [vmem:[%s462 + $0x4] sm:$0xf] %vm1172, %v1149
      %1175 = vst.msk [vmem:[%s462 + $0x8] sm:$0xf] %vm1172, %v1150
      %1176 = vst.msk [vmem:[%s462 + $0xc] sm:$0xf] %vm1172, %v1151
      %1177 = vst.msk [vmem:[%s462 + $0x10] sm:$0xf] %vm1172, %v1152
      %1178 = vst.msk [vmem:[%s462 + $0x14] sm:$0xf] %vm1172, %v1153
      %1179 = vst.msk [vmem:[%s462 + $0x18] sm:$0xf] %vm1172, %v1154
      %1180 = vst.msk [vmem:[%s462 + $0x1c] sm:$0xf] %vm1172, %v1155
      %1181 = vst.msk [vmem:[%s462 + $0x20] sm:$0xf] %vm1172, %v1156
      %1182 = vst.msk [vmem:[%s462 + $0x24] sm:$0xf] %vm1172, %v1157
      %1183 = vst.msk [vmem:[%s462 + $0x28] sm:$0xf] %vm1172, %v1158
      %1184 = vst.msk [vmem:[%s462 + $0x2c] sm:$0xf] %vm1172, %v1159
      %v1185 = vlaneseq
      %v1186 = vshrl.u32 %v1185, 7
      %v1187 = vadd.s32 %v1186, 8
      %v1188 = vadd.s32 %v1186, 16
      %vm1189 = vcmp.ge.s32.totalorder %v1186, 1
      %vm1190 = vcmp.ge.s32.totalorder %v1187, 1
      %vm1191 = vcmp.ge.s32.totalorder %v1188, 1
      %vm1192 = vcmp.le.s32.totalorder %v1186, 16
      %vm1193 = vcmp.le.s32.totalorder %v1187, 16
      %vm1194 = vcmp.le.s32.totalorder %v1188, 16
      %vm1195 = vmand %vm1189, %vm1192
      %vm1196 = vmand %vm1190, %vm1193
      %vm1197 = vmand %vm1191, %vm1194
      %v1198 = vsel %vm1195, 1, 0
      %v1199 = vsel %vm1196, 1, 0
      %v1200 = vsel %vm1197, 1, 0
      %vm1201 = vcmp.eq.s32.totalorder %v1198, 1
      %vm1202 = vcmp.eq.s32.totalorder %v1199, 1
      %vm1203 = vcmp.eq.s32.totalorder %v1200, 1
      %v1204 = vsel %vm1201, %v1074, 0.0
      %v1205 = vsel %vm1202, %v1077, 0.0
      %v1206 = vsel %vm1203, %v1082, 0.0
      %v1207 = vsel %vm1201, %v1085, 0.0
      %v1208 = vsel %vm1202, %v1090, 0.0
      %v1209 = vsel %vm1203, %v1093, 0.0
      %v1210 = vsel %vm1201, %v1098, 0.0
      %v1211 = vsel %vm1202, %v1101, 0.0
      %v1212 = vsel %vm1203, %v1106, 0.0
      %v1213 = vsel %vm1201, %v1109, 0.0
      %v1214 = vsel %vm1202, %v1114, 0.0
      %v1215 = vsel %vm1203, %v1117, 0.0
      %v1216 = vsel %vm835, %v1204, 0.0
      %v1217 = vsel %vm835, %v1205, 0.0
      %v1218 = vadd.f32 %v1216, %v1217
      %v1219 = vsel %vm835, %v1206, 0.0
      %v1220 = vadd.f32 %v1218, %v1219
      %v1221 = vsel %vm835, %v1207, 0.0
      %v1222 = vadd.f32 %v1220, %v1221
      %v1223 = vsel %vm835, %v1208, 0.0
      %v1224 = vadd.f32 %v1222, %v1223
      %v1225 = vsel %vm835, %v1209, 0.0
      %v1226 = vadd.f32 %v1224, %v1225
      %v1227 = vsel %vm835, %v1210, 0.0
      %v1228 = vadd.f32 %v1226, %v1227
      %v1229 = vsel %vm835, %v1211, 0.0
      %v1230 = vadd.f32 %v1228, %v1229
      %v1231 = vsel %vm835, %v1212, 0.0
      %v1232 = vadd.f32 %v1230, %v1231
      %v1233 = vsel %vm835, %v1213, 0.0
      %v1234 = vadd.f32 %v1232, %v1233
      %v1235 = vsel %vm835, %v1214, 0.0
      %v1236 = vadd.f32 %v1234, %v1235
      %v1237 = vsel %vm835, %v1215, 0.0
      %v1238 = vadd.f32 %v1236, %v1237
      %v1239 = vrot.slane %v1238, 4
      %v1240 = vadd.f32 %v1238, %v1239
      %v1241 = vrot.slane %v1240, 2
      %v1242 = vadd.f32 %v1240, %v1241
      %v1243 = vrot.slane %v1242, 1
      %v1244 = vadd.f32 %v1242, %v1243
      %v1245 = vmul.f32 %v1204, %v1204
      %v1246 = vmul.f32 %v1205, %v1205
      %v1247 = vmul.f32 %v1206, %v1206
      %v1248 = vmul.f32 %v1207, %v1207
      %v1249 = vmul.f32 %v1208, %v1208
      %v1250 = vmul.f32 %v1209, %v1209
      %v1251 = vmul.f32 %v1210, %v1210
      %v1252 = vmul.f32 %v1211, %v1211
      %v1253 = vmul.f32 %v1212, %v1212
      %v1254 = vmul.f32 %v1213, %v1213
      %v1255 = vmul.f32 %v1214, %v1214
      %v1256 = vmul.f32 %v1215, %v1215
      %v1257 = vsel %vm835, %v1245, 0.0
      %v1258 = vsel %vm835, %v1246, 0.0
      %v1259 = vadd.f32 %v1257, %v1258
      %v1260 = vsel %vm835, %v1247, 0.0
      %v1261 = vadd.f32 %v1259, %v1260
      %v1262 = vsel %vm835, %v1248, 0.0
      %v1263 = vadd.f32 %v1261, %v1262
      %v1264 = vsel %vm835, %v1249, 0.0
      %v1265 = vadd.f32 %v1263, %v1264
      %v1266 = vsel %vm835, %v1250, 0.0
      %v1267 = vadd.f32 %v1265, %v1266
      %v1268 = vsel %vm835, %v1251, 0.0
      %v1269 = vadd.f32 %v1267, %v1268
      %v1270 = vsel %vm835, %v1252, 0.0
      %v1271 = vadd.f32 %v1269, %v1270
      %v1272 = vsel %vm835, %v1253, 0.0
      %v1273 = vadd.f32 %v1271, %v1272
      %v1274 = vsel %vm835, %v1254, 0.0
      %v1275 = vadd.f32 %v1273, %v1274
      %v1276 = vsel %vm835, %v1255, 0.0
      %v1277 = vadd.f32 %v1275, %v1276
      %v1278 = vsel %vm835, %v1256, 0.0
      %v1279 = vadd.f32 %v1277, %v1278
      %v1280 = vrot.slane %v1279, 4
      %v1281 = vadd.f32 %v1279, %v1280
      %v1282 = vrot.slane %v1281, 2
      %v1283 = vadd.f32 %v1281, %v1282
      %v1284 = vrot.slane %v1283, 1
      %v1285 = vadd.f32 %v1283, %v1284
      %vm1286 = vcmask 1040384
      %v1287 = vsel %vm1286, %v1244, %v1285
      %vm1288 = vcmask 58368
      %1289 = vst.msk [vmem:[%s471] sm:$0x3] %vm1288, %v1287
      %s1290 = smul.u32 4, %s24
      %p1291 = scmp.lt.s32.totalorder %s23, 1
      %s1292 = scalar_select %p1291, %s23, 1
      %p1293 = scmp.lt.s32.totalorder %s1290, 15
      %s1294 = scalar_select %p1293, %s1290, 15
      %s1295 = smul.addr %s1294, 3
      %s1296 = smul.addr %s1292, 48
      %s1297 = sadd.s32 %s1295, %s1296
      %s1298 = smul.addr %s1297, 4
      %s1299 = scalar_lea.vmem %s6, %s1298
      %p1300 = scmp.lt.s32.totalorder %s23, 1
      %s1301 = scalar_select %p1300, %s23, 1
      %p1302 = scmp.lt.s32.totalorder %s24, 3
      %s1303 = scalar_select %p1302, %s24, 3
      %s1304 = smul.addr %s1301, 4
      %s1305 = sadd.s32 %s1303, %s1304
      %s1306 = smul.addr %s1305, 2
      %s1307 = scalar_lea.vmem %s7, %s1306
      // Predicated region
      $region45: #{vgg_block_forward.3} parent=43 // pred_check
        %p1308 = pneg %p208
      $region46: #{vgg_block_forward.3} parent=43 // pred_check_branch
        %1310 = sbr.rel (%p1308) target = $region48
      $region47: #{vgg_block_forward.3} parent=43 // pred_region
        %s1311 = smul.u32 4, %s24
      $region48: #{vgg_block_forward.3} parent=43 // pred_fallthru
        _
      // Predicated region
      $region49: #{vgg_block_forward.3} parent=43 // pred_check
        %p1312 = pneg %p236
      $region50: #{vgg_block_forward.3} parent=43 // pred_check_branch
        %1314 = sbr.rel (%p1312) target = $region52
      $region51: #{vgg_block_forward.3} parent=43 // pred_region
        _
      $region52: #{vgg_block_forward.3} parent=43 // pred_fallthru
        _
    $region44: #{vgg_block_forward.3} parent=5 // pred_fallthru
      _
    %p1315 = scmp.le.s32.totalorder 2, %s14
    // Predicated region
    $region53: #{vgg_block_forward.3} parent=5 // pred_check
      %p1316 = pneg %p1315
    $region54: #{vgg_block_forward.3} parent=5 // pred_check_branch
      %1318 = sbr.rel (%p1316) target = $region56
    $region55: #{vgg_block_forward.3} parent=5 // pred_region
      %s1319 = ssub.s32 %s14, 2
      // Predicated region
      $region57: #{vgg_block_forward.3} parent=55 // pred_check
        %p1320 = pneg %p214
      $region58: #{vgg_block_forward.3} parent=55 // pred_check_branch
        %1322 = sbr.rel (%p1320) target = $region60
      $region59: #{vgg_block_forward.3} parent=55 // pred_region
        %s1323 = smul.u32 4, %s26
        %p1324 = scmp.lt.s32.totalorder %s25, 1
        %s1325 = scalar_select %p1324, %s25, 1
        %p1326 = scmp.lt.s32.totalorder %s1323, 15
        %s1327 = scalar_select %p1326, %s1323, 15
        %s1328 = smul.addr %s1327, 3
        %s1329 = smul.addr %s1325, 48
        %s1330 = sadd.s32 %s1328, %s1329
        %s1331 = smul.addr %s1330, 4
        %s1332 = scalar_lea.vmem %s6, %s1331
      $region60: #{vgg_block_forward.3} parent=55 // pred_fallthru
        _
      // Predicated region
      $region61: #{vgg_block_forward.3} parent=55 // pred_check
        %p1333 = pneg %p242
      $region62: #{vgg_block_forward.3} parent=55 // pred_check_branch
        %1335 = sbr.rel (%p1333) target = $region64
      $region63: #{vgg_block_forward.3} parent=55 // pred_region
        %p1336 = scmp.lt.s32.totalorder %s25, 1
        %s1337 = scalar_select %p1336, %s25, 1
        %p1338 = scmp.lt.s32.totalorder %s26, 3
        %s1339 = scalar_select %p1338, %s26, 3
        %s1340 = smul.addr %s1337, 4
        %s1341 = sadd.s32 %s1339, %s1340
        %s1342 = smul.addr %s1341, 2
        %s1343 = scalar_lea.vmem %s7, %s1342
      $region64: #{vgg_block_forward.3} parent=55 // pred_fallthru
        _
    $region56: #{vgg_block_forward.3} parent=5 // pred_fallthru
      _
  $region6: #{vgg_block_forward.3} parent=0 // loop_footer
    %s18 = sadd.s32 1, %s14
  $region7: #{vgg_block_forward.3} parent=0 // loop_footer_branch
    %13 = sbr.rel target = $region3
  $region8: #{vgg_block_forward.3} parent=0 // loop_exit
    _

// kernel: vgg_block_forward.4
$region0: #{vgg_block_forward.4}
  #allocation0 [shape = 'u32[]', space=smem, size = 0x4, offset = 0x4, fixed_abs, tag = 'smem constant byte address 0x4 - core index']
  #allocation1 [shape = 'u32[144,128]{1,0:T(1,128)}', space=vmem, size = 0x12000, scoped, tag = 'internal scratch']
  %s0 = inlined_call_operand.vmem [shape: bf16[2,18,24,8], index: 0, kind: input, shape index: {}, may-alias: {0,1,2}]
  %s1 = inlined_call_operand.vmem [shape: bf16[2,18,24,8], index: 1, kind: input, shape index: {}, may-alias: {0,1,2}]
  %s2 = inlined_call_operand.vmem [shape: bf16[2,18,24,8], index: 2, kind: input, shape index: {}, may-alias: {0,1,2}]
  %s3 = inlined_call_operand.vmem [shape: bf16[72,4], index: 3, kind: input, shape index: {}]
  %s4 = inlined_call_operand.vmem [shape: f32[1,8], index: 4, kind: input, shape index: {}]
  %s5 = inlined_call_operand.vmem [shape: f32[1,8], index: 5, kind: input, shape index: {}]
  %s6 = inlined_call_operand.vmem [shape: bf16[2,16,24,4], index: 6, kind: output, shape index: {0}]
  %s7 = inlined_call_operand.vmem [shape: f32[2,4,2,4], index: 7, kind: output, shape index: {1}]
  %8 = xla_tuple %s6, %s7
  %s9 = sld [smem:[#allocation0]]
  $region65: #{vgg_block_forward.4} parent=0
    _
  %s11 = ssub.s32 1, %s9
  %s12 = scalar_select 0, %s11, %s9
  loop: start=0, step=1, limit=10
  $region2: #{vgg_block_forward.4} parent=0 // loop_pre_header
    _
  $region3: #{vgg_block_forward.4} parent=0 // loop_header
    %s14 = sphi 0, %s18
    %p15 = scmp.ge.s32.totalorder %s14, 10
    %s21 = sphi 0, %s33
    %s22 = sphi 0, %s29
    %s23 = sphi 0, %s21
    %s24 = sphi 0, %s22
    %s25 = sphi 0, %s23
    %s26 = sphi 0, %s24
    %s38 = sphi 0, %s40
    %s41 = sphi 0, %s38
    %s42 = sphi 0, %s41
    %s58 = sphi 0, %s42
    %s70 = sphi 0, %s72
    %s73 = sphi 0, %s70
    %s74 = sphi 0, %s73
    %s90 = sphi 0, %s74
    %s104 = sphi 0, %s106
    %s107 = sphi 0, %s104
    %s108 = sphi 0, %s107
    %s124 = sphi 0, %s108
    %s128 = sphi 0, %s128
    %s130 = sphi 0, %s128
    %s131 = sphi 0, %s130
    %s145 = sphi 0, %s131
    %s149 = sphi 0, %s149
    %s151 = sphi 0, %s149
    %s152 = sphi 0, %s151
    %s166 = sphi 0, %s152
    %s170 = sphi 0, %s170
    %s172 = sphi 0, %s170
    %s173 = sphi 0, %s172
    %s187 = sphi 0, %s173
    %s195 = sphi 0, %s197
    %s198 = sphi 0, %s195
    %s199 = sphi 0, %s198
    %s215 = sphi 0, %s199
    %s223 = sphi 0, %s225
    %s226 = sphi 0, %s223
    %s227 = sphi 0, %s226
    %s243 = sphi 0, %s227
  $region4: #{vgg_block_forward.4} parent=0 // loop_header_branch
    %17 = sbr.rel (%p15) target = $region8
  $region5: #{vgg_block_forward.4} parent=0 // loop_body
    %s19 = ssub.s32 %s14, 1
    %s20 = ssub.s32 %s14, 2
    %s27 = sadd.s32 1, %s22
    %p28 = scmp.ge.s32.totalorder %s27, 4
    %s29 = scalar_select %p28, 0, %s27
    %s30 = sadd.s32 1, %s21
    %s31 = scalar_select %p28, %s30, %s21
    %p32 = scmp.ge.s32.totalorder %s31, 2
    %s33 = scalar_select %p32, 0, %s31
    %s34 = ssub.s32 %s21, %s33
    %s35 = ssub.s32 %s22, %s29
    %s36 = sor.u32 %s34, %s35
    %p37 = scmp.eq.s32.totalorder %s36, 0
    %s39 = sadd.s32 %s38, 1
    %s40 = scalar_select %p37, %s38, %s39
    %p43 = pneg %p37
    %p44 = scmp.eq.s32.totalorder %s14, 7
    %p45 = por %p43, %p44
    %p46 = scmp.ne.s32.totalorder %s38, %s41
    %p47 = scmp.eq.s32.totalorder %s14, 0
    %p48 = por %p46, %p47
    %p49 = scmp.ne.s32.totalorder %s38, %s41
    %p50 = scmp.eq.s32.totalorder %s19, 7
    %p51 = por %p49, %p50
    %p52 = scmp.ne.s32.totalorder %s41, %s42
    %p53 = scmp.eq.s32.totalorder %s19, 0
    %p54 = por %p52, %p53
    %p55 = scmp.ne.s32.totalorder %s41, %s42
    %p56 = scmp.eq.s32.totalorder %s20, 7
    %p57 = por %p55, %p56
    %p59 = scmp.ne.s32.totalorder %s42, %s58
    %p60 = scmp.eq.s32.totalorder %s20, 0
    %p61 = por %p59, %p60
    %s62 = sadd.s32 %s22, 1
    %s63 = smul.u32 %s62, 4
    %s64 = sadd.s32 %s29, 1
    %s65 = smul.u32 %s64, 4
    %s66 = ssub.s32 %s21, %s33
    %s67 = ssub.s32 %s63, %s65
    %s68 = sor.u32 %s66, %s67
    %p69 = scmp.eq.s32.totalorder %s68, 0
    %s71 = sadd.s32 %s70, 1
    %s72 = scalar_select %p69, %s70, %s71
    %p75 = pneg %p69
    %p76 = scmp.eq.s32.totalorder %s14, 7
    %p77 = por %p75, %p76
    %p78 = scmp.ne.s32.totalorder %s70, %s73
    %p79 = scmp.eq.s32.totalorder %s14, 0
    %p80 = por %p78, %p79
    %p81 = scmp.ne.s32.totalorder %s70, %s73
    %p82 = scmp.eq.s32.totalorder %s19, 7
    %p83 = por %p81, %p82
    %p84 = scmp.ne.s32.totalorder %s73, %s74
    %p85 = scmp.eq.s32.totalorder %s19, 0
    %p86 = por %p84, %p85
    %p87 = scmp.ne.s32.totalorder %s73, %s74
    %p88 = scmp.eq.s32.totalorder %s20, 7
    %p89 = por %p87, %p88
    %p91 = scmp.ne.s32.totalorder %s74, %s90
    %p92 = scmp.eq.s32.totalorder %s20, 0
    %p93 = por %p91, %p92
    %s94 = sadd.s32 %s22, 1
    %s95 = smul.u32 %s94, 4
    %s96 = sadd.s32 %s95, 1
    %s97 = sadd.s32 %s29, 1
    %s98 = smul.u32 %s97, 4
    %s99 = sadd.s32 %s98, 1
    %s100 = ssub.s32 %s21, %s33
    %s101 = ssub.s32 %s96, %s99
    %s102 = sor.u32 %s100, %s101
    %p103 = scmp.eq.s32.totalorder %s102, 0
    %s105 = sadd.s32 %s104, 1
    %s106 = scalar_select %p103, %s104, %s105
    %p109 = pneg %p103
    %p110 = scmp.eq.s32.totalorder %s14, 7
    %p111 = por %p109, %p110
    %p112 = scmp.ne.s32.totalorder %s104, %s107
    %p113 = scmp.eq.s32.totalorder %s14, 0
    %p114 = por %p112, %p113
    %p115 = scmp.ne.s32.totalorder %s104, %s107
    %p116 = scmp.eq.s32.totalorder %s19, 7
    %p117 = por %p115, %p116
    %p118 = scmp.ne.s32.totalorder %s107, %s108
    %p119 = scmp.eq.s32.totalorder %s19, 0
    %p120 = por %p118, %p119
    %p121 = scmp.ne.s32.totalorder %s107, %s108
    %p122 = scmp.eq.s32.totalorder %s20, 7
    %p123 = por %p121, %p122
    %p125 = scmp.ne.s32.totalorder %s108, %s124
    %p126 = scmp.eq.s32.totalorder %s20, 0
    %p127 = por %p125, %p126
    %s129 = sadd.s32 %s128, 1
    %p132 = scmp.eq.s32.totalorder %s14, 7
    %p133 = scmp.ne.s32.totalorder %s128, %s130
    %p134 = scmp.eq.s32.totalorder %s14, 0
    %p135 = por %p133, %p134
    %p136 = scmp.ne.s32.totalorder %s128, %s130
    %p137 = scmp.eq.s32.totalorder %s19, 7
    %p138 = por %p136, %p137
    %p139 = scmp.ne.s32.totalorder %s130, %s131
    %p140 = scmp.eq.s32.totalorder %s19, 0
    %p141 = por %p139, %p140
    %p142 = scmp.ne.s32.totalorder %s130, %s131
    %p143 = scmp.eq.s32.totalorder %s20, 7
    %p144 = por %p142, %p143
    %p146 = scmp.ne.s32.totalorder %s131, %s145
    %p147 = scmp.eq.s32.totalorder %s20, 0
    %p148 = por %p146, %p147
    %s150 = sadd.s32 %s149, 1
    %p153 = scmp.eq.s32.totalorder %s14, 7
    %p154 = scmp.ne.s32.totalorder %s149, %s151
    %p155 = scmp.eq.s32.totalorder %s14, 0
    %p156 = por %p154, %p155
    %p157 = scmp.ne.s32.totalorder %s149, %s151
    %p158 = scmp.eq.s32.totalorder %s19, 7
    %p159 = por %p157, %p158
    %p160 = scmp.ne.s32.totalorder %s151, %s152
    %p161 = scmp.eq.s32.totalorder %s19, 0
    %p162 = por %p160, %p161
    %p163 = scmp.ne.s32.totalorder %s151, %s152
    %p164 = scmp.eq.s32.totalorder %s20, 7
    %p165 = por %p163, %p164
    %p167 = scmp.ne.s32.totalorder %s152, %s166
    %p168 = scmp.eq.s32.totalorder %s20, 0
    %p169 = por %p167, %p168
    %s171 = sadd.s32 %s170, 1
    %p174 = scmp.eq.s32.totalorder %s14, 7
    %p175 = scmp.ne.s32.totalorder %s170, %s172
    %p176 = scmp.eq.s32.totalorder %s14, 0
    %p177 = por %p175, %p176
    %p178 = scmp.ne.s32.totalorder %s170, %s172
    %p179 = scmp.eq.s32.totalorder %s19, 7
    %p180 = por %p178, %p179
    %p181 = scmp.ne.s32.totalorder %s172, %s173
    %p182 = scmp.eq.s32.totalorder %s19, 0
    %p183 = por %p181, %p182
    %p184 = scmp.ne.s32.totalorder %s172, %s173
    %p185 = scmp.eq.s32.totalorder %s20, 7
    %p186 = por %p184, %p185
    %p188 = scmp.ne.s32.totalorder %s173, %s187
    %p189 = scmp.eq.s32.totalorder %s20, 0
    %p190 = por %p188, %p189
    %s191 = ssub.s32 %s21, %s33
    %s192 = ssub.s32 %s22, %s29
    %s193 = sor.u32 %s191, %s192
    %p194 = scmp.eq.s32.totalorder %s193, 0
    %s196 = sadd.s32 %s195, 1
    %s197 = scalar_select %p194, %s195, %s196
    %p200 = pneg %p194
    %p201 = scmp.eq.s32.totalorder %s14, 7
    %p202 = por %p200, %p201
    %p203 = scmp.ne.s32.totalorder %s195, %s198
    %p204 = scmp.eq.s32.totalorder %s14, 0
    %p205 = por %p203, %p204
    %p206 = scmp.ne.s32.totalorder %s195, %s198
    %p207 = scmp.eq.s32.totalorder %s19, 7
    %p208 = por %p206, %p207
    %p209 = scmp.ne.s32.totalorder %s198, %s199
    %p210 = scmp.eq.s32.totalorder %s19, 0
    %p211 = por %p209, %p210
    %p212 = scmp.ne.s32.totalorder %s198, %s199
    %p213 = scmp.eq.s32.totalorder %s20, 7
    %p214 = por %p212, %p213
    %p216 = scmp.ne.s32.totalorder %s199, %s215
    %p217 = scmp.eq.s32.totalorder %s20, 0
    %p218 = por %p216, %p217
    %s219 = ssub.s32 %s21, %s33
    %s220 = ssub.s32 %s22, %s29
    %s221 = sor.u32 %s219, %s220
    %p222 = scmp.eq.s32.totalorder %s221, 0
    %s224 = sadd.s32 %s223, 1
    %s225 = scalar_select %p222, %s223, %s224
    %p228 = pneg %p222
    %p229 = scmp.eq.s32.totalorder %s14, 7
    %p230 = por %p228, %p229
    %p231 = scmp.ne.s32.totalorder %s223, %s226
    %p232 = scmp.eq.s32.totalorder %s14, 0
    %p233 = por %p231, %p232
    %p234 = scmp.ne.s32.totalorder %s223, %s226
    %p235 = scmp.eq.s32.totalorder %s19, 7
    %p236 = por %p234, %p235
    %p237 = scmp.ne.s32.totalorder %s226, %s227
    %p238 = scmp.eq.s32.totalorder %s19, 0
    %p239 = por %p237, %p238
    %p240 = scmp.ne.s32.totalorder %s226, %s227
    %p241 = scmp.eq.s32.totalorder %s20, 7
    %p242 = por %p240, %p241
    %p244 = scmp.ne.s32.totalorder %s227, %s243
    %p245 = scmp.eq.s32.totalorder %s20, 0
    %p246 = por %p244, %p245
    %p247 = scmp.le.s32.totalorder 1, %s14
    %p248 = scmp.lt.s32.totalorder %s14, 9
    %p249 = pnand %p247, %p248
    %p250 = pneg %p249
    // Predicated region
    $region9: #{vgg_block_forward.4} parent=5 // pred_check
      _
    $region10: #{vgg_block_forward.4} parent=5 // pred_check_branch
      %252 = sbr.rel (%p249) target = $region12
    $region11: #{vgg_block_forward.4} parent=5 // pred_region
      %s253 = ssub.s32 %s14, 1
      // Predicated region
      $region13: #{vgg_block_forward.4} parent=11 // pred_check
        %p254 = pneg %p141
      $region14: #{vgg_block_forward.4} parent=11 // pred_check_branch
        %256 = sbr.rel (%p254) target = $region16
      $region15: #{vgg_block_forward.4} parent=11 // pred_region
        _
      $region16: #{vgg_block_forward.4} parent=11 // pred_fallthru
        _
      // Predicated region
      $region17: #{vgg_block_forward.4} parent=11 // pred_check
        %p257 = pneg %p162
      $region18: #{vgg_block_forward.4} parent=11 // pred_check_branch
        %259 = sbr.rel (%p257) target = $region20
      $region19: #{vgg_block_forward.4} parent=11 // pred_region
        _
      $region20: #{vgg_block_forward.4} parent=11 // pred_fallthru
        _
      // Predicated region
      $region21: #{vgg_block_forward.4} parent=11 // pred_check
        %p260 = pneg %p183
      $region22: #{vgg_block_forward.4} parent=11 // pred_check_branch
        %262 = sbr.rel (%p260) target = $region24
      $region23: #{vgg_block_forward.4} parent=11 // pred_region
        _
      $region24: #{vgg_block_forward.4} parent=11 // pred_fallthru
        _
    $region12: #{vgg_block_forward.4} parent=5 // pred_fallthru
      _
    %p263 = scmp.lt.s32.totalorder %s14, 8
    // Predicated region
    $region25: #{vgg_block_forward.4} parent=5 // pred_check
      %p264 = pneg %p263
    $region26: #{vgg_block_forward.4} parent=5 // pred_check_branch
      %266 = sbr.rel (%p264) target = $region28
    $region27: #{vgg_block_forward.4} parent=5 // pred_region
      // Predicated region
      $region29: #{vgg_block_forward.4} parent=27 // pred_check
        %p267 = pneg %p48
      $region30: #{vgg_block_forward.4} parent=27 // pred_check_branch
        %269 = sbr.rel (%p267) target = $region32
      $region31: #{vgg_block_forward.4} parent=27 // pred_region
        %s270 = smul.u32 4, %s22
        %s271 = ssub.s32 18, %s270
        %p272 = scmp.lt.s32.totalorder %s271, 4
        %s273 = scalar_select %p272, %s271, 4
        %s274 = smul.u32 64, %s273
        %s275 = smul.u32 %s274, 3
        %p276 = scmp.lt.s32.totalorder %s21, 1
        %s277 = scalar_select %p276, %s21, 1
        %p278 = scmp.lt.s32.totalorder %s270, 17
        %s279 = scalar_select %p278, %s270, 17
        %s280 = smul.addr %s279, 3
        %s281 = smul.addr %s277, 54
        %s282 = sadd.s32 %s280, %s281
        %s283 = smul.addr %s282, 4
        %s284 = scalar_lea.vmem %s0, %s283
        %s285 = smul.u32 4, %s22
        %s286 = ssub.s32 18, %s285
        %p287 = scmp.lt.s32.totalorder %s286, 4
        %s288 = scalar_select %p287, %s286, 4
        %s289 = smul.u32 64, %s288
        %s290 = smul.u32 %s289, 3
      $region32: #{vgg_block_forward.4} parent=27 // pred_fallthru
        _
      // Predicated region
      $region33: #{vgg_block_forward.4} parent=27 // pred_check
        %p291 = pneg %p80
      $region34: #{vgg_block_forward.4} parent=27 // pred_check_branch
        %293 = sbr.rel (%p291) target = $region36
      $region35: #{vgg_block_forward.4} parent=27 // pred_region
        %s294 = sadd.s32 %s22, 1
        %s295 = smul.u32 %s294, 4
        %p296 = scmp.lt.s32.totalorder %s21, 1
        %s297 = scalar_select %p296, %s21, 1
        %p298 = scmp.lt.s32.totalorder %s295, 17
        %s299 = scalar_select %p298, %s295, 17
        %s300 = smul.addr %s299, 3
        %s301 = smul.addr %s297, 54
        %s302 = sadd.s32 %s300, %s301
        %s303 = smul.addr %s302, 4
        %s304 = scalar_lea.vmem %s1, %s303
        %s305 = sadd.s32 %s22, 1
        %s306 = smul.u32 %s305, 4
      $region36: #{vgg_block_forward.4} parent=27 // pred_fallthru
        _
      // Predicated region
      $region37: #{vgg_block_forward.4} parent=27 // pred_check
        %p307 = pneg %p114
      $region38: #{vgg_block_forward.4} parent=27 // pred_check_branch
        %309 = sbr.rel (%p307) target = $region40
      $region39: #{vgg_block_forward.4} parent=27 // pred_region
        %s310 = sadd.s32 %s22, 1
        %s311 = smul.u32 %s310, 4
        %s312 = sadd.s32 %s311, 1
        %p313 = scmp.lt.s32.totalorder %s21, 1
        %s314 = scalar_select %p313, %s21, 1
        %p315 = scmp.lt.s32.totalorder %s312, 17
        %s316 = scalar_select %p315, %s312, 17
        %s317 = smul.addr %s316, 3
        %s318 = smul.addr %s314, 54
        %s319 = sadd.s32 %s317, %s318
        %s320 = smul.addr %s319, 4
        %s321 = scalar_lea.vmem %s2, %s320
        %s322 = sadd.s32 %s22, 1
        %s323 = smul.u32 %s322, 4
        %s324 = sadd.s32 %s323, 1
      $region40: #{vgg_block_forward.4} parent=27 // pred_fallthru
        _
    $region28: #{vgg_block_forward.4} parent=5 // pred_fallthru
      _
    %p325 = scmp.le.s32.totalorder 1, %s14
    %p326 = scmp.lt.s32.totalorder %s14, 9
    %p327 = pnand %p325, %p326
    %p328 = pneg %p327
    // Predicated region
    $region41: #{vgg_block_forward.4} parent=5 // pred_check
      _
    $region42: #{vgg_block_forward.4} parent=5 // pred_check_branch
      %330 = sbr.rel (%p327) target = $region44
    $region43: #{vgg_block_forward.4} parent=5 // pred_region
      %s331 = ssub.s32 %s14, 1
      %s332 = smul.u32 4, %s24
      %s333 = ssub.s32 18, %s332
      %p334 = scmp.lt.s32.totalorder %s333, 4
      %s335 = scalar_select %p334, %s333, 4
      %s336 = smul.u32 64, %s335
      %s337 = smul.u32 %s336, 3
      %p338 = scmp.lt.s32.totalorder %s23, 1
      %s339 = scalar_select %p338, %s23, 1
      %p340 = scmp.lt.s32.totalorder %s332, 17
      %s341 = scalar_select %p340, %s332, 17
      %s342 = smul.addr %s341, 3
      %s343 = smul.addr %s339, 54
      %s344 = sadd.s32 %s342, %s343
      %s345 = smul.addr %s344, 4
      %s346 = scalar_lea.vmem %s0, %s345
      %p347 = pneg %p54
      %p348 = pneg %p51
      %s349 = sadd.s32 %s24, 1
      %s350 = smul.u32 %s349, 4
      %p351 = scmp.lt.s32.totalorder %s23, 1
      %s352 = scalar_select %p351, %s23, 1
      %p353 = scmp.lt.s32.totalorder %s350, 17
      %s354 = scalar_select %p353, %s350, 17
      %s355 = smul.addr %s354, 3
      %s356 = smul.addr %s352, 54
      %s357 = sadd.s32 %s355, %s356
      %s358 = smul.addr %s357, 4
      %s359 = scalar_lea.vmem %s1, %s358
      %p360 = pneg %p86
      %p361 = pneg %p83
      %s362 = sadd.s32 %s24, 1
      %s363 = smul.u32 %s362, 4
      %s364 = sadd.s32 %s363, 1
      %p365 = scmp.lt.s32.totalorder %s23, 1
      %s366 = scalar_select %p365, %s23, 1
      %p367 = scmp.lt.s32.totalorder %s364, 17
      %s368 = scalar_select %p367, %s364, 17
      %s369 = smul.addr %s368, 3
      %s370 = smul.addr %s366, 54
      %s371 = sadd.s32 %s369, %s370
      %s372 = smul.addr %s371, 4
      %s373 = scalar_lea.vmem %s2, %s372
      %p374 = pneg %p120
      %p375 = pneg %p117
      %p376 = pneg %p141
      %p377 = pneg %p138
      %p378 = pneg %p162
      %p379 = pneg %p159
      %p380 = pneg %p183
      %p381 = pneg %p180
      %p382 = pneg %p211
      %p383 = pneg %p208
      %s384 = smul.u32 4, %s24
      %p385 = scmp.lt.s32.totalorder %s23, 1
      %s386 = scalar_select %p385, %s23, 1
      %p387 = scmp.lt.s32.totalorder %s384, 15
      %s388 = scalar_select %p387, %s384, 15
      %s389 = smul.addr %s388, 3
      %s390 = smul.addr %s386, 48
      %s391 = sadd.s32 %s389, %s390
      %s392 = smul.addr %s391, 4
      %s393 = scalar_lea.vmem %s6, %s392
      %p394 = pneg %p239
      %p395 = pneg %p236
      %p396 = scmp.lt.s32.totalorder %s23, 1
      %s397 = scalar_select %p396, %s23, 1
      %p398 = scmp.lt.s32.totalorder %s24, 3
      %s399 = scalar_select %p398, %s24, 3
      %s400 = smul.addr %s397, 4
      %s401 = sadd.s32 %s399, %s400
      %s402 = smul.addr %s401, 2
      %s403 = scalar_lea.vmem %s7, %s402
      %s404 = smul.u32 4, %s24
      %s405 = ssub.s32 18, %s404
      %p406 = scmp.lt.s32.totalorder %s405, 4
      %s407 = scalar_select %p406, %s405, 4
      %s408 = smul.u32 64, %s407
      %s409 = smul.u32 %s408, 3
      %p410 = scmp.lt.s32.totalorder %s23, 1
      %s411 = scalar_select %p410, %s23, 1
      %p412 = scmp.lt.s32.totalorder %s404, 17
      %s413 = scalar_select %p412, %s404, 17
      %s414 = smul.addr %s413, 3
      %s415 = smul.addr %s411, 54
      %s416 = sadd.s32 %s414, %s415
      %s417 = smul.addr %s416, 4
      %s418 = scalar_lea.vmem %s0, %s417
      %s419 = smul.u32 4, %s24
      %s420 = ssub.s32 18, %s419
      %p421 = scmp.lt.s32.totalorder %s420, 4
      %s422 = scalar_select %p421, %s420, 4
      %s423 = smul.u32 64, %s422
      %s424 = smul.u32 %s423, 3
      %s425 = sadd.s32 %s24, 1
      %s426 = smul.u32 %s425, 4
      %p427 = scmp.lt.s32.totalorder %s23, 1
      %s428 = scalar_select %p427, %s23, 1
      %p429 = scmp.lt.s32.totalorder %s426, 17
      %s430 = scalar_select %p429, %s426, 17
      %s431 = smul.addr %s430, 3
      %s432 = smul.addr %s428, 54
      %s433 = sadd.s32 %s431, %s432
      %s434 = smul.addr %s433, 4
      %s435 = scalar_lea.vmem %s1, %s434
      %s436 = sadd.s32 %s24, 1
      %s437 = smul.u32 %s436, 4
      %s438 = sadd.s32 %s24, 1
      %s439 = smul.u32 %s438, 4
      %s440 = sadd.s32 %s439, 1
      %p441 = scmp.lt.s32.totalorder %s23, 1
      %s442 = scalar_select %p441, %s23, 1
      %p443 = scmp.lt.s32.totalorder %s440, 17
      %s444 = scalar_select %p443, %s440, 17
      %s445 = smul.addr %s444, 3
      %s446 = smul.addr %s442, 54
      %s447 = sadd.s32 %s445, %s446
      %s448 = smul.addr %s447, 4
      %s449 = scalar_lea.vmem %s2, %s448
      %s450 = sadd.s32 %s24, 1
      %s451 = smul.u32 %s450, 4
      %s452 = sadd.s32 %s451, 1
      %s453 = smul.u32 4, %s24
      %p454 = scmp.lt.s32.totalorder %s23, 1
      %s455 = scalar_select %p454, %s23, 1
      %p456 = scmp.lt.s32.totalorder %s453, 15
      %s457 = scalar_select %p456, %s453, 15
      %s458 = smul.addr %s457, 3
      %s459 = smul.addr %s455, 48
      %s460 = sadd.s32 %s458, %s459
      %s461 = smul.addr %s460, 4
      %s462 = scalar_lea.vmem %s6, %s461
      %s463 = smul.u32 4, %s24
      %p464 = scmp.lt.s32.totalorder %s23, 1
      %s465 = scalar_select %p464, %s23, 1
      %p466 = scmp.lt.s32.totalorder %s24, 3
      %s467 = scalar_select %p466, %s24, 3
      %s468 = smul.addr %s465, 4
      %s469 = sadd.s32 %s467, %s468
      %s470 = smul.addr %s469, 2
      %s471 = scalar_lea.vmem %s7, %s470
      %v473 = vld [vmem:[%s418] sm:$0xf]
      %v474 = vld [vmem:[%s418 + $0x4] sm:$0xf]
      %v475 = vld [vmem:[%s418 + $0x8] sm:$0xf]
      %v476 = vld [vmem:[%s418 + $0xc] sm:$0xf]
      %v477 = vld [vmem:[%s418 + $0x10] sm:$0xf]
      %v478 = vld [vmem:[%s418 + $0x14] sm:$0xf]
      %v479 = vld [vmem:[%s418 + $0x18] sm:$0xf]
      %v480 = vld [vmem:[%s418 + $0x1c] sm:$0xf]
      %v481 = vld [vmem:[%s418 + $0x20] sm:$0xf]
      %v482 = vld [vmem:[%s418 + $0x24] sm:$0xf]
      %v483 = vld [vmem:[%s418 + $0x28] sm:$0xf]
      %v484 = vld [vmem:[%s418 + $0x2c] sm:$0xf]
      %v485 = vld [vmem:[%s435] sm:$0xf]
      %v486 = vld [vmem:[%s435 + $0x4] sm:$0xf]
      %v487 = vld [vmem:[%s435 + $0x8] sm:$0xf]
      %v488 = vld [vmem:[%s449] sm:$0xf]
      %v489 = vld [vmem:[%s449 + $0x4] sm:$0xf]
      %v490 = vld [vmem:[%s449 + $0x8] sm:$0xf]
      %v491 = vld [vmem:[%s4] sm:$0x1]
      %v492 = vld [vmem:[%s5] sm:$0x1]
      %v493 = vlaneseq
      %v494 = vshrl.u32 %v493, 7
      %v495 = vadd.s32 %v494, 8
      %v496 = vadd.s32 %v494, 16
      %vm497 = vcmp.ge.s32.totalorder %v494, 1
      %vm498 = vcmp.ge.s32.totalorder %v495, 1
      %vm499 = vcmp.ge.s32.totalorder %v496, 1
      %vm500 = vcmp.le.s32.totalorder %v494, 16
      %vm501 = vcmp.le.s32.totalorder %v495, 16
      %vm502 = vcmp.le.s32.totalorder %v496, 16
      %vm503 = vmand %vm497, %vm500
      %vm504 = vmand %vm498, %vm501
      %vm505 = vmand %vm499, %vm502
      %p506 = scmp.gt.s32.totalorder %s24, 0
      %s507 = scalar_select %p506, 1, 0
      %v508 = vstv %s507
      %vm509 = vcmp.eq.s32.totalorder %v508, 1
      %v510 = vsel %vm503, 1, 0
      %v511 = vsel %vm504, 1, 0
      %v512 = vsel %vm505, 1, 0
      %vm513 = vcmp.eq.s32.totalorder %v510, 1
      %vm514 = vcmp.eq.s32.totalorder %v511, 1
      %vm515 = vcmp.eq.s32.totalorder %v512, 1
      %v516 = vsel %vm509, 1, 0
      %vm517 = vcmp.eq.s32.totalorder %v516, 1
      %vm518 = vmand %vm513, %vm517
      %vm519 = vmand %vm514, %vm517
      %vm520 = vmand %vm515, %vm517
      %vm521 = vmand %vm513, 1
      %vm522 = vmand %vm514, 1
      %vm523 = vmand %vm515, 1
      %v524 = vunpack.c.l.bf16 %v473
      %v525 = vunpack.c.l.bf16 %v474
      %v526 = vunpack.c.l.bf16 %v475
      %v527 = vunpack.c.l.bf16 %v476
      %v528 = vunpack.c.l.bf16 %v477
      %v529 = vunpack.c.l.bf16 %v478
      %v530 = vunpack.c.l.bf16 %v479
      %v531 = vunpack.c.l.bf16 %v480
      %v532 = vunpack.c.l.bf16 %v481
      %v533 = vunpack.c.l.bf16 %v482
      %v534 = vunpack.c.l.bf16 %v483
      %v535 = vunpack.c.l.bf16 %v484
      %v537 = vlaneseq
      %v538 = vshrl.u32 %v537, 7
      %v539 = vsub.s32 0, %v538
      %v540 = vrot.slane %v491, %v539
      %v542 = vmul.f32 %v524, %v540
      %v543 = vmul.f32 %v525, %v540
      %v544 = vmul.f32 %v526, %v540
      %v545 = vmul.f32 %v527, %v540
      %v546 = vmul.f32 %v528, %v540
      %v547 = vmul.f32 %v529, %v540
      %v548 = vmul.f32 %v530, %v540
      %v549 = vmul.f32 %v531, %v540
      %v550 = vmul.f32 %v532, %v540
      %v551 = vmul.f32 %v533, %v540
      %v552 = vmul.f32 %v534, %v540
      %v553 = vmul.f32 %v535, %v540
      %v555 = vlaneseq
      %v556 = vshrl.u32 %v555, 7
      %v557 = vsub.s32 0, %v556
      %v558 = vrot.slane %v492, %v557
      %v560 = vadd.f32 %v542, %v558
      %v561 = vadd.f32 %v543, %v558
      %v562 = vadd.f32 %v544, %v558
      %v563 = vadd.f32 %v545, %v558
      %v564 = vadd.f32 %v546, %v558
      %v565 = vadd.f32 %v547, %v558
      %v566 = vadd.f32 %v548, %v558
      %v567 = vadd.f32 %v549, %v558
      %v568 = vadd.f32 %v550, %v558
      %v569 = vadd.f32 %v551, %v558
      %v570 = vadd.f32 %v552, %v558
      %v571 = vadd.f32 %v553, %v558
      %v572 = vmax.f32 %v560, 0.0
      %v573 = vmax.f32 %v561, 0.0
      %v574 = vmax.f32 %v562, 0.0
      %v575 = vmax.f32 %v563, 0.0
      %v576 = vmax.f32 %v564, 0.0
      %v577 = vmax.f32 %v565, 0.0
      %v578 = vmax.f32 %v566, 0.0
      %v579 = vmax.f32 %v567, 0.0
      %v580 = vmax.f32 %v568, 0.0
      %v581 = vmax.f32 %v569, 0.0
      %v582 = vmax.f32 %v570, 0.0
      %v583 = vmax.f32 %v571, 0.0
      %v584 = vsel %vm518, 1, 0
      %v585 = vsel %vm519, 1, 0
      %v586 = vsel %vm520, 1, 0
      %v587 = vsel %vm521, 1, 0
      %v588 = vsel %vm522, 1, 0
      %v589 = vsel %vm523, 1, 0
      %vm590 = vcmp.eq.s32.totalorder %v584, 1
      %vm591 = vcmp.eq.s32.totalorder %v585, 1
      %vm592 = vcmp.eq.s32.totalorder %v586, 1
      %vm593 = vcmp.eq.s32.totalorder %v587, 1
      %vm594 = vcmp.eq.s32.totalorder %v588, 1
      %vm595 = vcmp.eq.s32.totalorder %v589, 1
      %v596 = vsel %vm590, %v572, 0.0
      %v597 = vsel %vm591, %v573, 0.0
      %v598 = vsel %vm592, %v574, 0.0
      %v599 = vsel %vm593, %v575, 0.0
      %v600 = vsel %vm594, %v576, 0.0
      %v601 = vsel %vm595, %v577, 0.0
      %v602 = vsel %vm593, %v578, 0.0
      %v603 = vsel %vm594, %v579, 0.0
      %v604 = vsel %vm595, %v580, 0.0
      %v605 = vsel %vm593, %v581, 0.0
      %v606 = vsel %vm594, %v582, 0.0
      %v607 = vsel %vm595, %v583, 0.0
      %v608 = vunpack.c.l.bf16 %v485
      %v609 = vunpack.c.l.bf16 %v486
      %v610 = vunpack.c.l.bf16 %v487
      %v611 = vmul.f32 %v608, %v540
      %v612 = vmul.f32 %v609, %v540
      %v613 = vmul.f32 %v610, %v540
      %v614 = vadd.f32 %v611, %v558
      %v615 = vadd.f32 %v612, %v558
      %v616 = vadd.f32 %v613, %v558
      %v617 = vmax.f32 %v614, 0.0
      %v618 = vmax.f32 %v615, 0.0
      %v619 = vmax.f32 %v616, 0.0
      %v620 = vsel %vm513, %v617, 0.0
      %v621 = vsel %vm514, %v618, 0.0
      %v622 = vsel %vm515, %v619, 0.0
      %p623 = scmp.lt.s32.totalorder %s24, 3
      %s624 = scalar_select %p623, 1, 0
      %v625 = vstv %s624
      %vm626 = vcmp.eq.s32.totalorder %v625, 1
      %vm627 = vmand %vm503, %vm626
      %vm628 = vmand %vm504, %vm626
      %vm629 = vmand %vm505, %vm626
      %v630 = vunpack.c.l.bf16 %v488
      %v631 = vunpack.c.l.bf16 %v489
      %v632 = vunpack.c.l.bf16 %v490
      %v633 = vmul.f32 %v630, %v540
      %v634 = vmul.f32 %v631, %v540
      %v635 = vmul.f32 %v632, %v540
      %v636 = vadd.f32 %v633, %v558
      %v637 = vadd.f32 %v634, %v558
      %v638 = vadd.f32 %v635, %v558
      %v639 = vmax.f32 %v636, 0.0
      %v640 = vmax.f32 %v637, 0.0
      %v641 = vmax.f32 %v638, 0.0
      %v642 = vsel %vm627, 1, 0
      %v643 = vsel %vm628, 1, 0
      %v644 = vsel %vm629, 1, 0
      %vm645 = vcmp.eq.s32.totalorder %v642, 1
      %vm646 = vcmp.eq.s32.totalorder %v643, 1
      %vm647 = vcmp.eq.s32.totalorder %v644, 1
      %v648 = vsel %vm645, %v639, 0.0
      %v649 = vsel %vm646, %v640, 0.0
      %v650 = vsel %vm647, %v641, 0.0
      %v651 = vpack.c.bf16 %v596, 0.0
      %v652 = vpack.c.bf16 %v598, %v597
      %v653 = vpack.c.bf16 %v600, %v599
      %v654 = vpack.c.bf16 %v602, %v601
      %v655 = vpack.c.bf16 %v604, %v603
      %v656 = vpack.c.bf16 %v606, %v605
      %v657 = vpack.c.bf16 %v607, %v607
      %v658 = vpack.c.bf16 %v597, %v596
      %v659 = vpack.c.bf16 %v599, %v598
      %v660 = vpack.c.bf16 %v601, %v600
      %v661 = vpack.c.bf16 %v603, %v602
      %v662 = vpack.c.bf16 %v605, %v604
      %v663 = vpack.c.bf16 %v607, %v606
      %v664 = vpack.c.bf16 %v620, %v620
      %v665 = vpack.c.bf16 %v621, %v620
      %v666 = vpack.c.bf16 %v622, %v622
      %v667 = vpack.c.bf16 %v620, %v607
      %v668 = vpack.c.bf16 %v622, %v621
      %v669 = vpack.c.bf16 %v648, %v648
      %v670 = vpack.c.bf16 %v649, %v648
      %v671 = vpack.c.bf16 %v650, %v650
      %v672 = vpack.c.bf16 %v648, %v622
      %v673 = vpack.c.bf16 %v650, %v649
      %v674 = vpack.c.bf16 0.0, 0.0
      %vm675 = vsmask.f32 3328
      %v677 = vshrl.u32 %v658, 16
      %v679 = vrot.slane %v677, 4
      %v680 = vshll.u32 %v658, 16
      %v682 = vrot.slane %v680, 5
      %v683 = vor.u32 %v679, %v682
      %v685 = vshrl.u32 %v659, 16
      %v687 = vrot.slane %v685, 4
      %v688 = vshll.u32 %v659, 16
      %v690 = vrot.slane %v688, 5
      %v691 = vor.u32 %v687, %v690
      %v692 = vsel %vm675, %v683, %v691
      %v694 = vshrl.u32 %v660, 16
      %v696 = vrot.slane %v694, 4
      %v697 = vshll.u32 %v660, 16
      %v699 = vrot.slane %v697, 5
      %v700 = vor.u32 %v696, %v699
      %v701 = vsel %vm675, %v691, %v700
      %v703 = vshrl.u32 %v661, 16
      %v705 = vrot.slane %v703, 4
      %v706 = vshll.u32 %v661, 16
      %v708 = vrot.slane %v706, 5
      %v709 = vor.u32 %v705, %v708
      %v710 = vsel %vm675, %v700, %v709
      %v712 = vshrl.u32 %v662, 16
      %v714 = vrot.slane %v712, 4
      %v715 = vshll.u32 %v662, 16
      %v717 = vrot.slane %v715, 5
      %v718 = vor.u32 %v714, %v717
      %v719 = vsel %vm675, %v709, %v718
      %v721 = vshrl.u32 %v663, 16
      %v723 = vrot.slane %v721, 4
      %v724 = vshll.u32 %v663, 16
      %v726 = vrot.slane %v724, 5
      %v727 = vor.u32 %v723, %v726
      %v728 = vsel %vm675, %v718, %v727
      %729 = vrot.lane.b32.xlu0 %v683, 8
      %v730 = vpop.permute.xlu0 %729
      %731 = vrot.lane.b32.xlu0 %v692, 8
      %v732 = vpop.permute.xlu0 %731
      %733 = vrot.lane.b32.xlu0 %v701, 8
      %v734 = vpop.permute.xlu0 %733
      %735 = vrot.lane.b32.xlu0 %v710, 8
      %v736 = vpop.permute.xlu0 %735
      %737 = vrot.lane.b32.xlu0 %v719, 8
      %v738 = vpop.permute.xlu0 %737
      %739 = vrot.lane.b32.xlu0 %v728, 8
      %v740 = vpop.permute.xlu0 %739
      %741 = vrot.lane.b32.xlu0 %v727, 8
      %v742 = vpop.permute.xlu0 %741
      %vm750 = vcmask 1042432
      %v751 = vrot.slane %v658, 5
      %v752 = vrot.slane %v659, 5
      %v753 = vsel %vm750, %v751, %v752
      %v754 = vrot.slane %v660, 5
      %v755 = vsel %vm750, %v752, %v754
      %v756 = vrot.slane %v661, 5
      %v757 = vsel %vm750, %v754, %v756
      %v758 = vrot.slane %v662, 5
      %v759 = vsel %vm750, %v756, %v758
      %v760 = vrot.slane %v663, 5
      %v761 = vsel %vm750, %v758, %v760
      %v762 = vrot.slane %v664, 5
      %v763 = vsel %vm750, %v760, %v762
      %764 = vrot.lane.b32.xlu0 %v751, 16
      %v765 = vpop.permute.xlu0 %764
      %766 = vrot.lane.b32.xlu0 %v753, 16
      %v767 = vpop.permute.xlu0 %766
      %768 = vrot.lane.b32.xlu0 %v755, 16
      %v769 = vpop.permute.xlu0 %768
      %770 = vrot.lane.b32.xlu0 %v757, 16
      %v771 = vpop.permute.xlu0 %770
      %772 = vrot.lane.b32.xlu0 %v759, 16
      %v773 = vpop.permute.xlu0 %772
      %774 = vrot.lane.b32.xlu0 %v761, 16
      %v775 = vpop.permute.xlu0 %774
      %776 = vrot.lane.b32.xlu0 %v763, 16
      %v777 = vpop.permute.xlu0 %776
      %780 = vrot.lane.b32.xlu0 %v659, 24
      %v781 = vpop.permute.xlu0 %780
      %782 = vrot.lane.b32.xlu0 %v660, 24
      %v783 = vpop.permute.xlu0 %782
      %784 = vrot.lane.b32.xlu0 %v661, 24
      %v785 = vpop.permute.xlu0 %784
      %786 = vrot.lane.b32.xlu0 %v662, 24
      %v787 = vpop.permute.xlu0 %786
      %788 = vrot.lane.b32.xlu0 %v663, 24
      %v789 = vpop.permute.xlu0 %788
      %790 = vrot.lane.b32.xlu0 %v665, 24
      %v791 = vpop.permute.xlu0 %790
      %792 = vrot.lane.b32.xlu0 %v666, 24
      %v793 = vpop.permute.xlu0 %792
      %v795 = vshrl.u32 %v653, 16
      %v797 = vrot.slane %v795, 4
      %v798 = vshll.u32 %v653, 16
      %v800 = vrot.slane %v798, 5
      %v801 = vor.u32 %v797, %v800
      %v803 = vshrl.u32 %v654, 16
      %v805 = vrot.slane %v803, 4
      %v806 = vshll.u32 %v654, 16
      %v808 = vrot.slane %v806, 5
      %v809 = vor.u32 %v805, %v808
      %v810 = vsel %vm675, %v801, %v809
      %v812 = vshrl.u32 %v655, 16
      %v814 = vrot.slane %v812, 4
      %v815 = vshll.u32 %v655, 16
      %v817 = vrot.slane %v815, 5
      %v818 = vor.u32 %v814, %v817
      %v819 = vsel %vm675, %v809, %v818
      %v821 = vshrl.u32 %v656, 16
      %v823 = vrot.slane %v821, 4
      %v824 = vshll.u32 %v656, 16
      %v826 = vrot.slane %v824, 5
      %v827 = vor.u32 %v823, %v826
      %v828 = vsel %vm675, %v818, %v827
      %v830 = vshrl.u32 %v667, 16
      %v832 = vrot.slane %v830, 4
      %v833 = vshll.u32 %v667, 16
      %v835 = vrot.slane %v833, 5
      %v836 = vor.u32 %v832, %v835
      %v837 = vsel %vm675, %v827, %v836
      %v839 = vshrl.u32 %v668, 16
      %v841 = vrot.slane %v839, 4
      %v842 = vshll.u32 %v668, 16
      %v844 = vrot.slane %v842, 5
      %v845 = vor.u32 %v841, %v844
      %v846 = vsel %vm675, %v836, %v845
      %847 = vrot.lane.b32.xlu0 %v801, 32
      %v848 = vpop.permute.xlu0 %847
      %849 = vrot.lane.b32.xlu0 %v810, 32
      %v850 = vpop.permute.xlu0 %849
      %851 = vrot.lane.b32.xlu0 %v819, 32
      %v852 = vpop.permute.xlu0 %851
      %853 = vrot.lane.b32.xlu0 %v828, 32
      %v854 = vpop.permute.xlu0 %853
      %855 = vrot.lane.b32.xlu0 %v837, 32
      %v856 = vpop.permute.xlu0 %855
      %857 = vrot.lane.b32.xlu0 %v846, 32
      %v858 = vpop.permute.xlu0 %857
      %859 = vrot.lane.b32.xlu0 %v845, 32
      %v860 = vpop.permute.xlu0 %859
      %v868 = vrot.slane %v653, 5
      %v869 = vrot.slane %v654, 5
      %v870 = vsel %vm750, %v868, %v869
      %v871 = vrot.slane %v655, 5
      %v872 = vsel %vm750, %v869, %v871
      %v873 = vrot.slane %v656, 5
      %v874 = vsel %vm750, %v871, %v873
      %v875 = vrot.slane %v667, 5
      %v876 = vsel %vm750, %v873, %v875
      %v877 = vrot.slane %v668, 5
      %v878 = vsel %vm750, %v875, %v877
      %v879 = vrot.slane %v669, 5
      %v880 = vsel %vm750, %v877, %v879
      %881 = vrot.lane.b32.xlu0 %v868, 40
      %v882 = vpop.permute.xlu0 %881
      %883 = vrot.lane.b32.xlu0 %v870, 40
      %v884 = vpop.permute.xlu0 %883
      %885 = vrot.lane.b32.xlu0 %v872, 40
      %v886 = vpop.permute.xlu0 %885
      %887 = vrot.lane.b32.xlu0 %v874, 40
      %v888 = vpop.permute.xlu0 %887
      %889 = vrot.lane.b32.xlu0 %v876, 40
      %v890 = vpop.permute.xlu0 %889
      %891 = vrot.lane.b32.xlu0 %v878, 40
      %v892 = vpop.permute.xlu0 %891
      %893 = vrot.lane.b32.xlu0 %v880, 40
      %v894 = vpop.permute.xlu0 %893
      %897 = vrot.lane.b32.xlu0 %v654, 48
      %v898 = vpop.permute.xlu0 %897
      %899 = vrot.lane.b32.xlu0 %v655, 48
      %v900 = vpop.permute.xlu0 %899
      %901 = vrot.lane.b32.xlu0 %v656, 48
      %v902 = vpop.permute.xlu0 %901
      %903 = vrot.lane.b32.xlu0 %v667, 48
      %v904 = vpop.permute.xlu0 %903
      %905 = vrot.lane.b32.xlu0 %v668, 48
      %v906 = vpop.permute.xlu0 %905
      %907 = vrot.lane.b32.xlu0 %v670, 48
      %v908 = vpop.permute.xlu0 %907
      %909 = vrot.lane.b32.xlu0 %v671, 48
      %v910 = vpop.permute.xlu0 %909
      %v912 = vshrl.u32 %v665, 16
      %v914 = vrot.slane %v912, 4
      %v915 = vshll.u32 %v665, 16
      %v917 = vrot.slane %v915, 5
      %v918 = vor.u32 %v914, %v917
      %v919 = vsel %vm675, %v727, %v918
      %v921 = vshrl.u32 %v672, 16
      %v923 = vrot.slane %v921, 4
      %v924 = vshll.u32 %v672, 16
      %v926 = vrot.slane %v924, 5
      %v927 = vor.u32 %v923, %v926
      %v928 = vsel %vm675, %v918, %v927
      %v930 = vshrl.u32 %v673, 16
      %v932 = vrot.slane %v930, 4
      %v933 = vshll.u32 %v673, 16
      %v935 = vrot.slane %v933, 5
      %v936 = vor.u32 %v932, %v935
      %v937 = vsel %vm675, %v927, %v936
      %938 = vrot.lane.b32.xlu0 %v709, 56
      %v939 = vpop.permute.xlu0 %938
      %940 = vrot.lane.b32.xlu0 %v719, 56
      %v941 = vpop.permute.xlu0 %940
      %942 = vrot.lane.b32.xlu0 %v728, 56
      %v943 = vpop.permute.xlu0 %942
      %944 = vrot.lane.b32.xlu0 %v919, 56
      %v945 = vpop.permute.xlu0 %944
      %946 = vrot.lane.b32.xlu0 %v928, 56
      %v947 = vpop.permute.xlu0 %946
      %948 = vrot.lane.b32.xlu0 %v937, 56
      %v949 = vpop.permute.xlu0 %948
      %950 = vrot.lane.b32.xlu0 %v936, 56
      %v951 = vpop.permute.xlu0 %950
      %v955 = vrot.slane %v665, 5
      %v956 = vsel %vm750, %v760, %v955
      %v957 = vrot.slane %v672, 5
      %v958 = vsel %vm750, %v955, %v957
      %v959 = vrot.slane %v673, 5
      %v960 = vsel %vm750, %v957, %v959
      %v961 = vrot.slane %v674, 5
      %v962 = vsel %vm750, %v959, %v961
      %963 = vrot.lane.b32.xlu0 %v756, 64
      %v964 = vpop.permute.xlu0 %963
      %965 = vrot.lane.b32.xlu0 %v759, 64
      %v966 = vpop.permute.xlu0 %965
      %967 = vrot.lane.b32.xlu0 %v761, 64
      %v968 = vpop.permute.xlu0 %967
      %969 = vrot.lane.b32.xlu0 %v956, 64
      %v970 = vpop.permute.xlu0 %969
      %971 = vrot.lane.b32.xlu0 %v958, 64
      %v972 = vpop.permute.xlu0 %971
      %973 = vrot.lane.b32.xlu0 %v960, 64
      %v974 = vpop.permute.xlu0 %973
      %975 = vrot.lane.b32.xlu0 %v962, 64
      %v976 = vpop.permute.xlu0 %975
      %vm977 = vcmask 64512
      %v980 = vsel %vm977, %v651, %v730
      %v983 = vsel %vm977, %v652, %v732
      %v985 = vsel %vm977, %v653, %v734
      %v987 = vsel %vm977, %v654, %v736
      %v989 = vsel %vm977, %v655, %v738
      %v991 = vsel %vm977, %v656, %v740
      %v994 = vsel %vm977, %v657, %v742
      %vm995 = vcmask 130048
      %v997 = vsel %vm995, %v980, %v765
      %v999 = vsel %vm995, %v983, %v767
      %v1001 = vsel %vm995, %v985, %v769
      %v1003 = vsel %vm995, %v987, %v771
      %v1005 = vsel %vm995, %v989, %v773
      %v1007 = vsel %vm995, %v991, %v775
      %v1009 = vsel %vm995, %v994, %v777
      %vm1010 = vcmask 195584
      %v1012 = vsel %vm1010, %v997, %v781
      %v1014 = vsel %vm1010, %v999, %v783
      %v1016 = vsel %vm1010, %v1001, %v785
      %v1018 = vsel %vm1010, %v1003, %v787
      %v1020 = vsel %vm1010, %v1005, %v789
      %v1022 = vsel %vm1010, %v1007, %v791
      %v1024 = vsel %vm1010, %v1009, %v793
      %vm1025 = vcmask 261120
      %v1027 = vsel %vm1025, %v1012, %v848
      %v1029 = vsel %vm1025, %v1014, %v850
      %v1031 = vsel %vm1025, %v1016, %v852
      %v1033 = vsel %vm1025, %v1018, %v854
      %v1035 = vsel %vm1025, %v1020, %v856
      %v1037 = vsel %vm1025, %v1022, %v858
      %v1039 = vsel %vm1025, %v1024, %v860
      %vm1040 = vcmask 326656
      %v1042 = vsel %vm1040, %v1027, %v882
      %v1044 = vsel %vm1040, %v1029, %v884
      %v1046 = vsel %vm1040, %v1031, %v886
      %v1048 = vsel %vm1040, %v1033, %v888
      %v1050 = vsel %vm1040, %v1035, %v890
      %v1052 = vsel %vm1040, %v1037, %v892
      %v1054 = vsel %vm1040, %v1039, %v894
      %vm1055 = vcmask 392192
      %v1057 = vsel %vm1055, %v1042, %v898
      %v1059 = vsel %vm1055, %v1044, %v900
      %v1061 = vsel %vm1055, %v1046, %v902
      %v1063 = vsel %vm1055, %v1048, %v904
      %v1065 = vsel %vm1055, %v1050, %v906
      %v1067 = vsel %vm1055, %v1052, %v908
      %v1069 = vsel %vm1055, %v1054, %v910
      %vm1070 = vcmask 457728
      %v1072 = vsel %vm1070, %v1057, %v939
      %v1074 = vsel %vm1070, %v1059, %v941
      %v1076 = vsel %vm1070, %v1061, %v943
      %v1078 = vsel %vm1070, %v1063, %v945
      %v1080 = vsel %vm1070, %v1065, %v947
      %v1082 = vsel %vm1070, %v1067, %v949
      %v1084 = vsel %vm1070, %v1069, %v951
      %vm1085 = vcmask 523264
      %v1087 = vsel %vm1085, %v1072, %v964
      %v1089 = vsel %vm1085, %v1074, %v966
      %v1091 = vsel %vm1085, %v1076, %v968
      %v1093 = vsel %vm1085, %v1078, %v970
      %v1095 = vsel %vm1085, %v1080, %v972
      %v1097 = vsel %vm1085, %v1082, %v974
      %v1099 = vsel %vm1085, %v1084, %v976
      %v1100 = vld [vmem:[%s3] sm:$0xf]
      %v1101 = vld [vmem:[%s3 + $0x4] sm:$0xf]
      %v1102 = vld [vmem:[%s3 + $0x8] sm:$0xf]
      %v1103 = vld [vmem:[%s3 + $0xc] sm:$0xf]
      %v1104 = vld [vmem:[%s3 + $0x10] sm:$0xf]
      %v1105 = vld [vmem:[%s3 + $0x14] sm:$0xf]
      %v1106 = vld [vmem:[%s3 + $0x18] sm:$0xf]
      %v1107 = vld [vmem:[%s3 + $0x1c] sm:$0xf]
      %v1108 = vld [vmem:[%s3 + $0x20] sm:$0xf]
      %vm1109 = vsmask.f32 4352
      %v1110 = vshrl.u32 %v1087, 16
      %v1112 = vrot.slane %v1110, 3
      %v1113 = vshll.u32 %v1087, 16
      %v1115 = vrot.slane %v1113, 4
      %v1116 = vor.u32 %v1112, %v1115
      %v1117 = vshrl.u32 %v1089, 16
      %v1119 = vrot.slane %v1117, 3
      %v1120 = vshll.u32 %v1089, 16
      %v1122 = vrot.slane %v1120, 4
      %v1123 = vor.u32 %v1119, %v1122
      %v1124 = vsel %vm1109, %v1116, %v1123
      %v1125 = vshrl.u32 %v1091, 16
      %v1127 = vrot.slane %v1125, 3
      %v1128 = vshll.u32 %v1091, 16
      %v1130 = vrot.slane %v1128, 4
      %v1131 = vor.u32 %v1127, %v1130
      %v1132 = vsel %vm1109, %v1123, %v1131
      %v1133 = vshrl.u32 %v1093, 16
      %v1135 = vrot.slane %v1133, 3
      %v1136 = vshll.u32 %v1093, 16
      %v1138 = vrot.slane %v1136, 4
      %v1139 = vor.u32 %v1135, %v1138
      %v1140 = vsel %vm1109, %v1131, %v1139
      %v1141 = vshrl.u32 %v1095, 16
      %v1143 = vrot.slane %v1141, 3
      %v1144 = vshll.u32 %v1095, 16
      %v1146 = vrot.slane %v1144, 4
      %v1147 = vor.u32 %v1143, %v1146
      %v1148 = vsel %vm1109, %v1139, %v1147
      %v1149 = vshrl.u32 %v1097, 16
      %v1151 = vrot.slane %v1149, 3
      %v1152 = vshll.u32 %v1097, 16
      %v1154 = vrot.slane %v1152, 4
      %v1155 = vor.u32 %v1151, %v1154
      %v1156 = vsel %vm1109, %v1147, %v1155
      %v1157 = vshrl.u32 %v1099, 16
      %v1159 = vrot.slane %v1157, 3
      %v1160 = vshll.u32 %v1099, 16
      %v1162 = vrot.slane %v1160, 4
      %v1163 = vor.u32 %v1159, %v1162
      %v1164 = vsel %vm1109, %v1155, %v1163
      %v1174 = vunpack.c.l.b16 %v1100
      %v1175 = vunpack.c.l.b16 %v1101
      %v1176 = vunpack.c.l.b16 %v1102
      %v1177 = vunpack.c.l.b16 %v1103
      %v1178 = vunpack.c.l.b16 %v1104
      %v1179 = vunpack.c.l.b16 %v1105
      %v1180 = vunpack.c.l.b16 %v1106
      %v1181 = vunpack.c.l.b16 %v1107
      %v1182 = vunpack.c.l.b16 %v1108
      %v1183 = vpack.c.b16 %v1175, %v1174
      %v1184 = vpack.c.b16 %v1177, %v1176
      %v1185 = vpack.c.b16 %v1179, %v1178
      %v1186 = vpack.c.b16 %v1181, %v1180
      %v1187 = vpack.c.b16 %v1182, %v1182
      %vm1192 = vcmask 588800
      %v1194 = vsel %vm1192, %v1124, 0
      %v1197 = vsel %vm1192, %v1132, 0
      %v1200 = vsel %vm1192, %v1140, 0
      %v1203 = vsel %vm1192, %v1148, 0
      %v1206 = vsel %vm1192, %v1156, 0
      %v1209 = vsel %vm1192, %v1164, 0
      %vm1211 = vcmask 1043456
      %v1213 = vsel %vm1211, %v1187, 0
      %1215 = vmatprep.subr.bf16.mxu0 0
      %1216 = vmatpush1.bf16.msra.mxu0 %v1183
      %1217 = vmatprep.subr.bf16.mxu0 0
      %1218 = vmatpush1.bf16.msra.mxu0 %v1184
      %1219 = vmatprep.subr.bf16.mxu0 0
      %1220 = vmatpush1.bf16.msra.mxu0 %v1185
      %1221 = vmatprep.subr.bf16.mxu0 0
      %1222 = vmatpush1.bf16.msra.mxu0 %v1186
      %1223 = vmatprep.subr.bf16.mxu0 0
      %1224 = vmatpush1.bf16.msra.mxu0 %v1213
      %1225 = vmatprep.subr.bf16.mxu0 0
      %1226 = vmatpush1.bf16.msra.mxu0 0
      %1227 = vmatprep.subr.bf16.mxu0 0
      %1228 = vmatpush1.bf16.msra.mxu0 0
      %1229 = vmatprep.subr.bf16.mxu0 0
      %1230 = vmatpush1.bf16.msra.mxu0 0
      %1231 = vmatprep.subr.bf16.mxu0 0
      %1232 = vmatpush1.bf16.msra.mxu0 0
      %1233 = vmatprep.subr.bf16.mxu0 0
      %1234 = vmatpush1.bf16.msra.mxu0 0
      %1235 = vmatprep.subr.bf16.mxu0 0
      %1236 = vmatpush1.bf16.msra.mxu0 0
      %1237 = vmatprep.subr.bf16.mxu0 0
      %1238 = vmatpush1.bf16.msra.mxu0 0
      %1239 = vmatprep.subr.bf16.mxu0 0
      %1240 = vmatpush1.bf16.msra.mxu0 0
      %1241 = vmatprep.subr.bf16.mxu0 0
      %1242 = vmatpush1.bf16.msra.mxu0 0
      %1243 = vmatprep.subr.bf16.mxu0 0
      %1244 = vmatpush1.bf16.msra.mxu0 0
      %1245 = vmatprep.subr.bf16.mxu0 0
      %1246 = vmatpush1.bf16.msra.mxu0 0
      %1247 = vmatprep.mubr.bf16.mxu0 0
      %1248 = vmatmul.mubr.bf16.gmra.mrb[0].mxu0 %v1194
      %v1249 = vpop.f32.mrb[0].mxu0
      %v1250 = vadd.f32 0.0, %v1249
      %v1251 = vpop.f32.mrb[0].mxu0
      %v1252 = vpop.f32.mrb[0].mxu0
      %v1253 = vadd.f32 0.0, %v1252
      %v1254 = vpop.f32.mrb[0].mxu0
      %1255 = vmatprep.mubr.bf16.mxu0 0
      %1256 = vmatmul.mubr.bf16.gmra.mrb[0].mxu0 %v1197
      %v1257 = vpop.f32.mrb[0].mxu0
      %v1258 = vadd.f32 0.0, %v1257
      %v1259 = vpop.f32.mrb[0].mxu0
      %v1260 = vpop.f32.mrb[0].mxu0
      %v1261 = vadd.f32 0.0, %v1260
      %v1262 = vpop.f32.mrb[0].mxu0
      %1263 = vmatprep.mubr.bf16.mxu0 0
      %1264 = vmatmul.mubr.bf16.gmra.mrb[0].mxu0 %v1200
      %v1265 = vpop.f32.mrb[0].mxu0
      %v1266 = vadd.f32 0.0, %v1265
      %v1267 = vpop.f32.mrb[0].mxu0
      %v1268 = vpop.f32.mrb[0].mxu0
      %v1269 = vadd.f32 0.0, %v1268
      %v1270 = vpop.f32.mrb[0].mxu0
      %1271 = vmatprep.mubr.bf16.mxu0 0
      %1272 = vmatmul.mubr.bf16.gmra.mrb[0].mxu0 %v1203
      %v1273 = vpop.f32.mrb[0].mxu0
      %v1274 = vadd.f32 0.0, %v1273
      %v1275 = vpop.f32.mrb[0].mxu0
      %v1276 = vpop.f32.mrb[0].mxu0
      %v1277 = vadd.f32 0.0, %v1276
      %v1278 = vpop.f32.mrb[0].mxu0
      %1279 = vmatprep.mubr.bf16.mxu0 0
      %1280 = vmatmul.mubr.bf16.gmra.mrb[0].mxu0 %v1206
      %v1281 = vpop.f32.mrb[0].mxu0
      %v1282 = vadd.f32 0.0, %v1281
      %v1283 = vpop.f32.mrb[0].mxu0
      %v1284 = vpop.f32.mrb[0].mxu0
      %v1285 = vadd.f32 0.0, %v1284
      %v1286 = vpop.f32.mrb[0].mxu0
      %1287 = vmatprep.mubr.bf16.mxu0 0
      %1288 = vmatmul.mubr.bf16.gmra.mrb[0].mxu0 %v1209
      %v1289 = vpop.f32.mrb[0].mxu0
      %v1290 = vadd.f32 0.0, %v1289
      %v1291 = vpop.f32.mrb[0].mxu0
      %v1292 = vpop.f32.mrb[0].mxu0
      %v1293 = vadd.f32 0.0, %v1292
      %v1294 = vpop.f32.mrb[0].mxu0
      %1295 = vdwg.mxu0
      %v1296 = vpack.c.bf16 %v1253, %v1250
      %v1297 = vpack.c.bf16 %v1258, %v1258
      %v1298 = vpack.c.bf16 %v1266, %v1261
      %v1299 = vpack.c.bf16 %v1269, %v1269
      %v1300 = vpack.c.bf16 %v1277, %v1274
      %v1301 = vpack.c.bf16 %v1282, %v1282
      %v1302 = vpack.c.bf16 %v1290, %v1285
      %v1303 = vpack.c.bf16 %v1293, %v1293
      %v1312 = vunpack.c.l.b16 %v1296
      %v1313 = vunpack.c.h.b16 %v1296
      %v1314 = vunpack.c.l.b16 %v1297
      %v1315 = vunpack.c.l.b16 %v1298
      %v1316 = vunpack.c.h.b16 %v1298
      %v1317 = vunpack.c.l.b16 %v1299
      %v1318 = vunpack.c.l.b16 %v1300
      %v1319 = vunpack.c.h.b16 %v1300
      %v1320 = vunpack.c.l.b16 %v1301
      %v1321 = vunpack.c.l.b16 %v1302
      %v1322 = vunpack.c.h.b16 %v1302
      %v1323 = vunpack.c.l.b16 %v1303
      %v1324 = vpack.c.b16 %v1312, %v1312
      %v1325 = vpack.c.b16 %v1313, %v1313
      %v1326 = vpack.c.b16 %v1314, %v1314
      %v1327 = vpack.c.b16 %v1315, %v1315
      %v1328 = vpack.c.b16 %v1316, %v1316
      %v1329 = vpack.c.b16 %v1317, %v1317
      %v1330 = vpack.c.b16 %v1318, %v1318
      %v1331 = vpack.c.b16 %v1319, %v1319
      %v1332 = vpack.c.b16 %v1320, %v1320
      %v1333 = vpack.c.b16 %v1321, %v1321
      %v1334 = vpack.c.b16 %v1322, %v1322
      %v1335 = vpack.c.b16 %v1323, %v1323
      %vm1348 = vcmask 27648
      %1349 = vst.msk [vmem:[%s462] sm:$0xf] %vm1348, %v1324
      %1350 = vst.msk [vmem:[%s462 + $0x4] sm:$0xf] %vm1348, %v1325
      %1351 = vst.msk [vmem:[%s462 + $0x8] sm:$0xf] %vm1348, %v1326
      %1352 = vst.msk [vmem:[%s462 + $0xc] sm:$0xf] %vm1348, %v1327
      %1353 = vst.msk [vmem:[%s462 + $0x10] sm:$0xf] %vm1348, %v1328
      %1354 = vst.msk [vmem:[%s462 + $0x14] sm:$0xf] %vm1348, %v1329
      %1355 = vst.msk [vmem:[%s462 + $0x18] sm:$0xf] %vm1348, %v1330
      %1356 = vst.msk [vmem:[%s462 + $0x1c] sm:$0xf] %vm1348, %v1331
      %1357 = vst.msk [vmem:[%s462 + $0x20] sm:$0xf] %vm1348, %v1332
      %1358 = vst.msk [vmem:[%s462 + $0x24] sm:$0xf] %vm1348, %v1333
      %1359 = vst.msk [vmem:[%s462 + $0x28] sm:$0xf] %vm1348, %v1334
      %1360 = vst.msk [vmem:[%s462 + $0x2c] sm:$0xf] %vm1348, %v1335
      %v1361 = vsel %vm513, %v1250, 0.0
      %v1362 = vsel %vm514, %v1253, 0.0
      %v1363 = vsel %vm515, %v1258, 0.0
      %v1364 = vsel %vm513, %v1261, 0.0
      %v1365 = vsel %vm514, %v1266, 0.0
      %v1366 = vsel %vm515, %v1269, 0.0
      %v1367 = vsel %vm513, %v1274, 0.0
      %v1368 = vsel %vm514, %v1277, 0.0
      %v1369 = vsel %vm515, %v1282, 0.0
      %v1370 = vsel %vm513, %v1285, 0.0
      %v1371 = vsel %vm514, %v1290, 0.0
      %v1372 = vsel %vm515, %v1293, 0.0
      %vm1373 = vcmask 31744
      %v1374 = vsel %vm1373, %v1361, 0.0
      %v1375 = vsel %vm1373, %v1362, 0.0
      %v1376 = vadd.f32 %v1374, %v1375
      %v1377 = vsel %vm1373, %v1363, 0.0
      %v1378 = vadd.f32 %v1376, %v1377
      %v1379 = vsel %vm1373, %v1364, 0.0
      %v1380 = vadd.f32 %v1378, %v1379
      %v1381 = vsel %vm1373, %v1365, 0.0
      %v1382 = vadd.f32 %v1380, %v1381
      %v1383 = vsel %vm1373, %v1366, 0.0
      %v1384 = vadd.f32 %v1382, %v1383
      %v1385 = vsel %vm1373, %v1367, 0.0
      %v1386 = vadd.f32 %v1384, %v1385
      %v1387 = vsel %vm1373, %v1368, 0.0
      %v1388 = vadd.f32 %v1386, %v1387
      %v1389 = vsel %vm1373, %v1369, 0.0
      %v1390 = vadd.f32 %v1388, %v1389
      %v1391 = vsel %vm1373, %v1370, 0.0
      %v1392 = vadd.f32 %v1390, %v1391
      %v1393 = vsel %vm1373, %v1371, 0.0
      %v1394 = vadd.f32 %v1392, %v1393
      %v1395 = vsel %vm1373, %v1372, 0.0
      %v1396 = vadd.f32 %v1394, %v1395
      %v1397 = vrot.slane %v1396, 4
      %v1398 = vadd.f32 %v1396, %v1397
      %v1399 = vrot.slane %v1398, 2
      %v1400 = vadd.f32 %v1398, %v1399
      %v1401 = vrot.slane %v1400, 1
      %v1402 = vadd.f32 %v1400, %v1401
      %v1403 = vmul.f32 %v1361, %v1361
      %v1404 = vmul.f32 %v1362, %v1362
      %v1405 = vmul.f32 %v1363, %v1363
      %v1406 = vmul.f32 %v1364, %v1364
      %v1407 = vmul.f32 %v1365, %v1365
      %v1408 = vmul.f32 %v1366, %v1366
      %v1409 = vmul.f32 %v1367, %v1367
      %v1410 = vmul.f32 %v1368, %v1368
      %v1411 = vmul.f32 %v1369, %v1369
      %v1412 = vmul.f32 %v1370, %v1370
      %v1413 = vmul.f32 %v1371, %v1371
      %v1414 = vmul.f32 %v1372, %v1372
      %v1415 = vsel %vm1373, %v1403, 0.0
      %v1416 = vsel %vm1373, %v1404, 0.0
      %v1417 = vadd.f32 %v1415, %v1416
      %v1418 = vsel %vm1373, %v1405, 0.0
      %v1419 = vadd.f32 %v1417, %v1418
      %v1420 = vsel %vm1373, %v1406, 0.0
      %v1421 = vadd.f32 %v1419, %v1420
      %v1422 = vsel %vm1373, %v1407, 0.0
      %v1423 = vadd.f32 %v1421, %v1422
      %v1424 = vsel %vm1373, %v1408, 0.0
      %v1425 = vadd.f32 %v1423, %v1424
      %v1426 = vsel %vm1373, %v1409, 0.0
      %v1427 = vadd.f32 %v1425, %v1426
      %v1428 = vsel %vm1373, %v1410, 0.0
      %v1429 = vadd.f32 %v1427, %v1428
      %v1430 = vsel %vm1373, %v1411, 0.0
      %v1431 = vadd.f32 %v1429, %v1430
      %v1432 = vsel %vm1373, %v1412, 0.0
      %v1433 = vadd.f32 %v1431, %v1432
      %v1434 = vsel %vm1373, %v1413, 0.0
      %v1435 = vadd.f32 %v1433, %v1434
      %v1436 = vsel %vm1373, %v1414, 0.0
      %v1437 = vadd.f32 %v1435, %v1436
      %v1438 = vrot.slane %v1437, 4
      %v1439 = vadd.f32 %v1437, %v1438
      %v1440 = vrot.slane %v1439, 2
      %v1441 = vadd.f32 %v1439, %v1440
      %v1442 = vrot.slane %v1441, 1
      %v1443 = vadd.f32 %v1441, %v1442
      %vm1444 = vcmask 1040384
      %v1445 = vsel %vm1444, %v1402, %v1443
      %vm1446 = vcmask 25600
      %1447 = vst.msk [vmem:[%s471] sm:$0x3] %vm1446, %v1445
      %s1448 = smul.u32 4, %s24
      %p1449 = scmp.lt.s32.totalorder %s23, 1
      %s1450 = scalar_select %p1449, %s23, 1
      %p1451 = scmp.lt.s32.totalorder %s1448, 15
      %s1452 = scalar_select %p1451, %s1448, 15
      %s1453 = smul.addr %s1452, 3
      %s1454 = smul.addr %s1450, 48
      %s1455 = sadd.s32 %s1453, %s1454
      %s1456 = smul.addr %s1455, 4
      %s1457 = scalar_lea.vmem %s6, %s1456
      %p1458 = scmp.lt.s32.totalorder %s23, 1
      %s1459 = scalar_select %p1458, %s23, 1
      %p1460 = scmp.lt.s32.totalorder %s24, 3
      %s1461 = scalar_select %p1460, %s24, 3
      %s1462 = smul.addr %s1459, 4
      %s1463 = sadd.s32 %s1461, %s1462
      %s1464 = smul.addr %s1463, 2
      %s1465 = scalar_lea.vmem %s7, %s1464
      // Predicated region
      $region45: #{vgg_block_forward.4} parent=43 // pred_check
        %p1466 = pneg %p208
      $region46: #{vgg_block_forward.4} parent=43 // pred_check_branch
        %1468 = sbr.rel (%p1466) target = $region48
      $region47: #{vgg_block_forward.4} parent=43 // pred_region
        %s1469 = smul.u32 4, %s24
      $region48: #{vgg_block_forward.4} parent=43 // pred_fallthru
        _
      // Predicated region
      $region49: #{vgg_block_forward.4} parent=43 // pred_check
        %p1470 = pneg %p236
      $region50: #{vgg_block_forward.4} parent=43 // pred_check_branch
        %1472 = sbr.rel (%p1470) target = $region52
      $region51: #{vgg_block_forward.4} parent=43 // pred_region
        _
      $region52: #{vgg_block_forward.4} parent=43 // pred_fallthru
        _
    $region44: #{vgg_block_forward.4} parent=5 // pred_fallthru
      _
    %p1473 = scmp.le.s32.totalorder 2, %s14
    // Predicated region
    $region53: #{vgg_block_forward.4} parent=5 // pred_check
      %p1474 = pneg %p1473
    $region54: #{vgg_block_forward.4} parent=5 // pred_check_branch
      %1476 = sbr.rel (%p1474) target = $region56
    $region55: #{vgg_block_forward.4} parent=5 // pred_region
      %s1477 = ssub.s32 %s14, 2
      // Predicated region
      $region57: #{vgg_block_forward.4} parent=55 // pred_check
        %p1478 = pneg %p214
      $region58: #{vgg_block_forward.4} parent=55 // pred_check_branch
        %1480 = sbr.rel (%p1478) target = $region60
      $region59: #{vgg_block_forward.4} parent=55 // pred_region
        %s1481 = smul.u32 4, %s26
        %p1482 = scmp.lt.s32.totalorder %s25, 1
        %s1483 = scalar_select %p1482, %s25, 1
        %p1484 = scmp.lt.s32.totalorder %s1481, 15
        %s1485 = scalar_select %p1484, %s1481, 15
        %s1486 = smul.addr %s1485, 3
        %s1487 = smul.addr %s1483, 48
        %s1488 = sadd.s32 %s1486, %s1487
        %s1489 = smul.addr %s1488, 4
        %s1490 = scalar_lea.vmem %s6, %s1489
      $region60: #{vgg_block_forward.4} parent=55 // pred_fallthru
        _
      // Predicated region
      $region61: #{vgg_block_forward.4} parent=55 // pred_check
        %p1491 = pneg %p242
      $region62: #{vgg_block_forward.4} parent=55 // pred_check_branch
        %1493 = sbr.rel (%p1491) target = $region64
      $region63: #{vgg_block_forward.4} parent=55 // pred_region
        %p1494 = scmp.lt.s32.totalorder %s25, 1
        %s1495 = scalar_select %p1494, %s25, 1
        %p1496 = scmp.lt.s32.totalorder %s26, 3
        %s1497 = scalar_select %p1496, %s26, 3
        %s1498 = smul.addr %s1495, 4
        %s1499 = sadd.s32 %s1497, %s1498
        %s1500 = smul.addr %s1499, 2
        %s1501 = scalar_lea.vmem %s7, %s1500
      $region64: #{vgg_block_forward.4} parent=55 // pred_fallthru
        _
    $region56: #{vgg_block_forward.4} parent=5 // pred_fallthru
      _
  $region6: #{vgg_block_forward.4} parent=0 // loop_footer
    %s18 = sadd.s32 1, %s14
  $region7: #{vgg_block_forward.4} parent=0 // loop_footer_branch
    %13 = sbr.rel target = $region3
  $region8: #{vgg_block_forward.4} parent=0 // loop_exit
    _

</llo_original>
